<compile_context>
chip_gen: v7x
topology: tpu7x:2x2x1
jax: 0.10.0
libtpu: 0.0.40
codegen_flags: <defaults>
</compile_context>

<pallas_src>
from functools import partial

import numpy as np
import jax
import jax.numpy as jnp
from jax.experimental import pallas as pl
from jax.experimental.pallas import tpu as pltpu


# -----------------------------------------------------------------------------
# Pallas kernel: input projection -> num_steps message-passing + GRU updates
# -> tan_mlp readout.  Whole-array blocks (toy sizes), no grid.
# -----------------------------------------------------------------------------
def ggnn_kernel(num_steps, hidden, num_edge_types,
                src_ref, dst_ref,          # SMEM (E,) int32 edge endpoints
                ndata_ref,                 # (N, F)    bf16 node features
                mask_ref,                  # (E, T*H)  f32 edge-type 0/1 mask
                b_edge_ref,                # (E, H)    f32 per-edge bias
                w_in_ref, b_in_ref,        # (F, H) bf16, (1, H) f32
                w_e_ref,                   # (H, T*H) bf16 packed edge transforms
                w_ih_ref, w_hh_ref,        # (H, 3H) bf16 packed GRU weights [r|z|n]
                b_ih_ref, b_hh_ref,        # (1, 3H) f32
                w1_ref, b1_ref,            # (2H, H) bf16, (1, H) f32 readout L1
                w2_ref, b2_ref,            # (H, H)  bf16, (1, H) f32 readout L2
                out_ref,                   # (N, H)  f32 output
                h_ref,                     # scratch (N, H)  f32 node state
                edge_ref,                  # scratch (E, H)  f32 x_src / messages
                agg_ref,                   # scratch (N, H)  f32 aggregated msgs
                cat_ref):                  # scratch (N, 2H) f32 [h_init | h]
    f32, bf16 = jnp.float32, jnp.bfloat16
    H = hidden
    T = num_edge_types
    N = h_ref.shape[0]
    E = edge_ref.shape[0]

    # ---- input projection: h_init = ndata @ W_in + b_in ---------------------
    h_init = jnp.dot(ndata_ref[...], w_in_ref[...],
                     preferred_element_type=f32) + b_in_ref[...]
    h_ref[...] = h_init
    cat_ref[:, 0:H] = h_init                       # stash for readout concat

    # Loop-invariant operands, hoisted once (JAX does not CSE broadcasts).
    mask = mask_ref[...]                               # (E, T*H)
    b_edge = b_edge_ref[...]                           # (E, H)
    b_i = jnp.broadcast_to(b_ih_ref[...], (N, 3 * H))  # (N, 3H)
    b_h = jnp.broadcast_to(b_hh_ref[...], (N, 3 * H))  # (N, 3H)

    for _ in range(num_steps):                     # static unroll
        # 1) gather source-node states onto edges (no dense (E, N) matrix)
        @pl.loop(0, E)
        def _(e):
            s = src_ref[e]
            edge_ref[pl.ds(e, 1), :] = h_ref[pl.ds(s, 1), :]

        x_src = edge_ref[...]                                    # (E, H)

        # 2) all T edge-type transforms in ONE lane-dense matmul (E,H)@(H,T*H),
        #    then select the active type with the precomputed 0/1 mask.
        m_all = jnp.dot(x_src.astype(bf16), w_e_ref[...],
                        preferred_element_type=f32) * mask       # (E, T*H)
        msg = b_edge
        for t in range(T):
            msg = msg + m_all[:, t * H:(t + 1) * H]
        msg = jnp.maximum(msg, 0.0)                              # ReLU
        edge_ref[...] = msg

        # 3) scatter-add messages into destination nodes (no dense (N, E) matrix)
        agg_ref[...] = jnp.zeros_like(agg_ref)

        @pl.loop(0, E)
        def _(e):
            d = dst_ref[e]
            agg_ref[pl.ds(d, 1), :] = (agg_ref[pl.ds(d, 1), :]
                                       + edge_ref[pl.ds(e, 1), :])

        # 4) GRUCell(input=h_agg, hidden=h_in) with packed (H, 3H) weights.
        h_in = h_ref[...]
        h_agg = agg_ref[...]
        gi = jnp.dot(h_agg.astype(bf16), w_ih_ref[...],
                     preferred_element_type=f32) + b_i           # (N, 3H)
        gh = jnp.dot(h_in.astype(bf16), w_hh_ref[...],
                     preferred_element_type=f32) + b_h           # (N, 3H)
        r = jax.nn.sigmoid(gi[:, 0:H] + gh[:, 0:H])
        z = jax.nn.sigmoid(gi[:, H:2 * H] + gh[:, H:2 * H])
        n = jnp.tanh(gi[:, 2 * H:3 * H] + r * gh[:, 2 * H:3 * H])
        h_ref[...] = (1.0 - z) * n + z * h_in

    # ---- readout: tan_mlp(concat([h_init, h], -1)) ---------------------------
    cat_ref[:, H:2 * H] = h_ref[...]
    hid = jnp.dot(cat_ref[...].astype(bf16), w1_ref[...],
                  preferred_element_type=f32) + b1_ref[...]
    hid = jnp.maximum(hid, 0.0)
    out = jnp.tanh(jnp.dot(hid.astype(bf16), w2_ref[...],
                           preferred_element_type=f32) + b2_ref[...])
    out_ref[...] = out.astype(out_ref.dtype)


# -----------------------------------------------------------------------------
# Wrapper: graph glue (argmax -> edge-type mask, per-edge bias gather),
# parameter packing (lane-dense matmuls), bf16 casts, pallas_call.
# -----------------------------------------------------------------------------
def ggnn_forward(ndata, src, dst, efeat, params, hidden_size, num_steps):
    N, F = ndata.shape
    E = src.shape[0]
    T = efeat.shape[1]
    H = hidden_size
    f32, bf16 = jnp.float32, jnp.bfloat16

    etype = jnp.argmax(efeat, axis=1)                           # (E,)
    onehot = jax.nn.one_hot(etype, T, dtype=f32)                # (E, T)
    mask = jnp.repeat(onehot, H, axis=1)                        # (E, T*H), 0/1
    b_edge = jnp.broadcast_to(params["edge_b"][etype], (E, H)).astype(f32)

    # Pack per-type / per-gate weights into lane-dense matrices (in, out_pack).
    w_e_pack = jnp.transpose(params["edge_w"], (1, 0, 2)).reshape(H, T * H)
    w_ih_pack = jnp.transpose(params["gru_w_ih"], (1, 0, 2)).reshape(H, 3 * H)
    w_hh_pack = jnp.transpose(params["gru_w_hh"], (1, 0, 2)).reshape(H, 3 * H)
    b_ih = params["gru_b_ih"].reshape(1, 3 * H).astype(f32)
    b_hh = params["gru_b_hh"].reshape(1, 3 * H).astype(f32)

    inputs = (
        src.astype(jnp.int32), dst.astype(jnp.int32),
        ndata.astype(bf16), mask, b_edge,
        params["w_in"].astype(bf16), params["b_in"].reshape(1, H).astype(f32),
        w_e_pack.astype(bf16),
        w_ih_pack.astype(bf16), w_hh_pack.astype(bf16), b_ih, b_hh,
        params["tan_w1"].astype(bf16), params["tan_b1"].reshape(1, H).astype(f32),
        params["tan_w2"].astype(bf16), params["tan_b2"].reshape(1, H).astype(f32),
    )

    smem = pl.BlockSpec(memory_space=pltpu.MemorySpace.SMEM)
    vmem = pl.BlockSpec(memory_space=pltpu.MemorySpace.VMEM)
    in_specs = [smem, smem] + [vmem] * (len(inputs) - 2)

    kernel = partial(ggnn_kernel, num_steps, H, T)
    return pl.pallas_call(
        kernel,
        out_shape=jax.ShapeDtypeStruct((N, H), f32),
        in_specs=in_specs,
        out_specs=vmem,
        scratch_shapes=[
            pltpu.VMEM((N, H), f32),        # node state h
            pltpu.VMEM((E, H), f32),        # x_src / messages
            pltpu.VMEM((N, H), f32),        # aggregated messages
            pltpu.VMEM((N, 2 * H), f32),    # [h_init | h] readout input
        ],
        compiler_params=pltpu.CompilerParams(
            vmem_limit_bytes=64 * 1024 * 1024),
    )(*inputs)


# -----------------------------------------------------------------------------
# Pure-JAX reference (mirrors DGL semantics: gather by src, scatter-add by dst)
# -----------------------------------------------------------------------------
def ggnn_reference(ndata, src, dst, efeat, params, hidden_size, num_steps):
    H = hidden_size
    N = ndata.shape[0]
    etype = jnp.argmax(efeat, axis=1)

    h_init = ndata @ params["w_in"] + params["b_in"]
    h = h_init
    for _ in range(num_steps):
        w_e = params["edge_w"][etype]                      # (E, H, H)
        b_e = params["edge_b"][etype]                      # (E, 1)
        src_feat = h[src]                                  # (E, H)
        msgs = jnp.einsum("eio,ei->eo", w_e, src_feat) + b_e
        msgs = jnp.maximum(msgs, 0.0)
        h_agg = jnp.zeros((N, H), jnp.float32).at[dst].add(msgs)

        r = jax.nn.sigmoid(h_agg @ params["gru_w_ih"][0] + params["gru_b_ih"][0]
                           + h @ params["gru_w_hh"][0] + params["gru_b_hh"][0])
        z = jax.nn.sigmoid(h_agg @ params["gru_w_ih"][1] + params["gru_b_ih"][1]
                           + h @ params["gru_w_hh"][1] + params["gru_b_hh"][1])
        n = jnp.tanh(h_agg @ params["gru_w_ih"][2] + params["gru_b_ih"][2]
                     + r * (h @ params["gru_w_hh"][2] + params["gru_b_hh"][2]))
        h = (1.0 - z) * n + z * h

    cat = jnp.concatenate([h_init, h], axis=-1)
    hid = jnp.maximum(cat @ params["tan_w1"] + params["tan_b1"], 0.0)
    return jnp.tanh(hid @ params["tan_w2"] + params["tan_b2"])


def init_params(key, node_feats, hidden_size, edge_feats):
    H, F, T = hidden_size, node_feats, edge_feats
    ks = jax.random.split(key, 12)
    nrm = lambda k, shape, scale: (scale * jax.random.normal(k, shape)
                                   ).astype(jnp.float32)
    return {
        "w_in":     nrm(ks[0], (F, H), 1.0 / np.sqrt(F)),
        "b_in":     nrm(ks[1], (H,), 0.1),
        "edge_w":   nrm(ks[2], (T, H, H), 1.0 / np.sqrt(H)),
        "edge_b":   nrm(ks[3], (T, 1), 0.1),
        "gru_w_ih": nrm(ks[4], (3, H, H), 1.0 / np.sqrt(H)),
        "gru_w_hh": nrm(ks[5], (3, H, H), 1.0 / np.sqrt(H)),
        "gru_b_ih": nrm(ks[6], (3, H), 0.1),
        "gru_b_hh": nrm(ks[7], (3, H), 0.1),
        "tan_w1":   nrm(ks[8], (2 * H, H), 1.0 / np.sqrt(2 * H)),
        "tan_b1":   nrm(ks[9], (H,), 0.1),
        "tan_w2":   nrm(ks[10], (H, H), 1.0 / np.sqrt(H)),
        "tan_b2":   nrm(ks[11], (H,), 0.1),
    }


if __name__ == "__main__":
    # small synthetic graph, module-default feature sizes (F=74, T=4, H=64)
    N_NODES = 16
    N_EDGES = 32
    NODE_FEATS = 74
    EDGE_FEATS = 4
    HIDDEN = 64
    NUM_STEPS = 4

    key = jax.random.PRNGKey(0)
    k_n, k_e, k_s, k_d, k_p = jax.random.split(key, 5)

    ndata = jax.random.normal(k_n, (N_NODES, NODE_FEATS), dtype=jnp.float32)
    efeat = jax.random.normal(k_e, (N_EDGES, EDGE_FEATS), dtype=jnp.float32)
    src = jax.random.randint(k_s, (N_EDGES,), 0, N_NODES, dtype=jnp.int32)
    dst = jax.random.randint(k_d, (N_EDGES,), 0, N_NODES, dtype=jnp.int32)

    params = init_params(k_p, NODE_FEATS, HIDDEN, EDGE_FEATS)

    out = jax.block_until_ready(
        ggnn_forward(ndata, src, dst, efeat, params, HIDDEN, NUM_STEPS))
    ref = jax.block_until_ready(
        ggnn_reference(ndata, src, dst, efeat, params, HIDDEN, NUM_STEPS))

    max_err = float(jnp.max(jnp.abs(out - ref)))
    assert out.shape == (N_NODES, HIDDEN)
    assert np.isfinite(np.asarray(out)).all()
    # bf16 matmul operands (f32 accumulation) vs pure-f32 reference.
    assert max_err < 5e-2, f"mismatch vs reference, max err {max_err}"
    print("KERNEL_OK")
</pallas_src>

<mosaic_0001>
module attributes {stable_mosaic.version = 11 : i64} {
  func.func @ggnn_kernel(%arg0: memref<32xi32, #tpu.memory_space<smem>>, %arg1: memref<32xi32, #tpu.memory_space<smem>>, %arg2: memref<16x74xbf16, #tpu.memory_space<vmem>>, %arg3: memref<32x256xf32, #tpu.memory_space<vmem>>, %arg4: memref<32x64xf32, #tpu.memory_space<vmem>>, %arg5: memref<74x64xbf16, #tpu.memory_space<vmem>>, %arg6: memref<1x64xf32, #tpu.memory_space<vmem>>, %arg7: memref<64x256xbf16, #tpu.memory_space<vmem>>, %arg8: memref<64x192xbf16, #tpu.memory_space<vmem>>, %arg9: memref<64x192xbf16, #tpu.memory_space<vmem>>, %arg10: memref<1x192xf32, #tpu.memory_space<vmem>>, %arg11: memref<1x192xf32, #tpu.memory_space<vmem>>, %arg12: memref<128x64xbf16, #tpu.memory_space<vmem>>, %arg13: memref<1x64xf32, #tpu.memory_space<vmem>>, %arg14: memref<64x64xbf16, #tpu.memory_space<vmem>>, %arg15: memref<1x64xf32, #tpu.memory_space<vmem>>, %arg16: memref<16x64xf32, #tpu.memory_space<vmem>>, %arg17: memref<16x64xf32, #tpu.memory_space<vmem>>, %arg18: memref<32x64xf32, #tpu.memory_space<vmem>>, %arg19: memref<16x64xf32, #tpu.memory_space<vmem>>, %arg20: memref<16x128xf32, #tpu.memory_space<vmem>>) attributes {dimension_semantics = [], scalar_prefetch = 0 : i64, scratch_operands = 4 : i64, tpu.core_type = #tpu.core_type<tc>} {
    %c0 = arith.constant 0 : index
    %c0_0 = arith.constant 0 : index
    %0 = vector.load %arg2[%c0, %c0_0] : memref<16x74xbf16, #tpu.memory_space<vmem>>, vector<16x74xbf16>
    %c0_1 = arith.constant 0 : index
    %c0_2 = arith.constant 0 : index
    %1 = vector.load %arg5[%c0_1, %c0_2] : memref<74x64xbf16, #tpu.memory_space<vmem>>, vector<74x64xbf16>
    %cst = arith.constant dense<0.000000e+00> : vector<16x64xf32>
    %2 = tpu.matmul %0, %1, %cst {dimension_numbers = #tpu.dot_dimension_numbers<[1], [0], [0], [1], [0, 0, 1, 1], [], []>} : vector<16x74xbf16>, vector<74x64xbf16>, vector<16x64xf32> -> vector<16x64xf32>
    %c0_3 = arith.constant 0 : index
    %c0_4 = arith.constant 0 : index
    %3 = vector.load %arg6[%c0_3, %c0_4] : memref<1x64xf32, #tpu.memory_space<vmem>>, vector<1x64xf32>
    %4 = vector.broadcast %3 : vector<1x64xf32> to vector<16x64xf32>
    %5 = arith.addf %2, %4 : vector<16x64xf32>
    %c0_5 = arith.constant 0 : index
    %c0_6 = arith.constant 0 : index
    %6 = vector.load %arg17[%c0_5, %c0_6] : memref<16x64xf32, #tpu.memory_space<vmem>>, vector<16x64xf32>
    tpu.vector_store %arg17[%c0_5, %c0_6], %5 {strides = array<i32>} : memref<16x64xf32, #tpu.memory_space<vmem>>, vector<16x64xf32>,
    %c0_7 = arith.constant 0 : index
    %c0_8 = arith.constant 0 : index
    %7 = vector.load %arg20[%c0_7, %c0_8] : memref<16x128xf32, #tpu.memory_space<vmem>>, vector<16x64xf32>
    tpu.vector_store %arg20[%c0_7, %c0_8], %5 {strides = array<i32>} : memref<16x128xf32, #tpu.memory_space<vmem>>, vector<16x64xf32>,
    %c0_9 = arith.constant 0 : index
    %c0_10 = arith.constant 0 : index
    %8 = vector.load %arg3[%c0_9, %c0_10] : memref<32x256xf32, #tpu.memory_space<vmem>>, vector<32x256xf32>
    %c0_11 = arith.constant 0 : index
    %c0_12 = arith.constant 0 : index
    %9 = vector.load %arg4[%c0_11, %c0_12] : memref<32x64xf32, #tpu.memory_space<vmem>>, vector<32x64xf32>
    %c0_13 = arith.constant 0 : index
    %c0_14 = arith.constant 0 : index
    %10 = vector.load %arg10[%c0_13, %c0_14] : memref<1x192xf32, #tpu.memory_space<vmem>>, vector<1x192xf32>
    %11 = vector.shape_cast %10 : vector<1x192xf32> to vector<1x192xf32>
    %12 = vector.broadcast %11 : vector<1x192xf32> to vector<16x192xf32>
    %c0_15 = arith.constant 0 : index
    %c0_16 = arith.constant 0 : index
    %13 = vector.load %arg11[%c0_15, %c0_16] : memref<1x192xf32, #tpu.memory_space<vmem>>, vector<1x192xf32>
    %14 = vector.shape_cast %13 : vector<1x192xf32> to vector<1x192xf32>
    %15 = vector.broadcast %14 : vector<1x192xf32> to vector<16x192xf32>
    %c0_i32 = arith.constant 0 : i32
    %c32_i32 = arith.constant 32 : i32
    %16 = arith.addi %c0_i32, %c32_i32 : i32
    %c1_i32 = arith.constant 1 : i32
    scf.for %arg21 = %c0_i32 to %16 step %c1_i32  : i32 {
      %c1_i32_168 = arith.constant 1 : i32
      %263 = arith.muli %arg21, %c1_i32_168 : i32
      %c0_i32_169 = arith.constant 0 : i32
      %264 = arith.addi %c0_i32_169, %263 : i32
      %265 = arith.index_cast %264 : i32 to index
      %266 = memref.load %arg0[%265] : memref<32xi32, #tpu.memory_space<smem>>
      %267 = arith.index_cast %266 : i32 to index
      %c0_170 = arith.constant 0 : index
      %268 = vector.load %arg17[%267, %c0_170] : memref<16x64xf32, #tpu.memory_space<vmem>>, vector<1x64xf32>
      %269 = arith.index_cast %264 : i32 to index
      %c0_171 = arith.constant 0 : index
      %270 = vector.load %arg18[%269, %c0_171] : memref<32x64xf32, #tpu.memory_space<vmem>>, vector<1x64xf32>
      tpu.vector_store %arg18[%269, %c0_171], %268 {strides = array<i32>} : memref<32x64xf32, #tpu.memory_space<vmem>>, vector<1x64xf32>,
    }
    %c32_i32_17 = arith.constant 32 : i32
    %c0_18 = arith.constant 0 : index
    %c0_19 = arith.constant 0 : index
    %17 = vector.load %arg18[%c0_18, %c0_19] : memref<32x64xf32, #tpu.memory_space<vmem>>, vector<32x64xf32>
    %18 = arith.truncf %17 : vector<32x64xf32> to vector<32x64xbf16>
    %c0_20 = arith.constant 0 : index
    %c0_21 = arith.constant 0 : index
    %19 = vector.load %arg7[%c0_20, %c0_21] : memref<64x256xbf16, #tpu.memory_space<vmem>>, vector<64x256xbf16>
    %cst_22 = arith.constant dense<0.000000e+00> : vector<32x256xf32>
    %20 = tpu.matmul %18, %19, %cst_22 {dimension_numbers = #tpu.dot_dimension_numbers<[1], [0], [0], [1], [0, 0, 1, 1], [], []>} : vector<32x64xbf16>, vector<64x256xbf16>, vector<32x256xf32> -> vector<32x256xf32>
    %21 = arith.mulf %20, %8 : vector<32x256xf32>
    %22 = vector.extract_strided_slice %21 {offsets = [0, 0], sizes = [32, 64], strides = [1, 1]} : vector<32x256xf32> to vector<32x64xf32>
    %23 = arith.addf %9, %22 : vector<32x64xf32>
    %24 = vector.extract_strided_slice %21 {offsets = [0, 64], sizes = [32, 64], strides = [1, 1]} : vector<32x256xf32> to vector<32x64xf32>
    %25 = arith.addf %23, %24 : vector<32x64xf32>
    %26 = vector.extract_strided_slice %21 {offsets = [0, 128], sizes = [32, 64], strides = [1, 1]} : vector<32x256xf32> to vector<32x64xf32>
    %27 = arith.addf %25, %26 : vector<32x64xf32>
    %28 = vector.extract_strided_slice %21 {offsets = [0, 192], sizes = [32, 64], strides = [1, 1]} : vector<32x256xf32> to vector<32x64xf32>
    %29 = arith.addf %27, %28 : vector<32x64xf32>
    %cst_23 = arith.constant 0.000000e+00 : f32
    %30 = vector.broadcast %cst_23 : f32 to vector<32x64xf32>
    %31 = arith.maximumf %29, %30 : vector<32x64xf32>
    %c0_24 = arith.constant 0 : index
    %c0_25 = arith.constant 0 : index
    %32 = vector.load %arg18[%c0_24, %c0_25] : memref<32x64xf32, #tpu.memory_space<vmem>>, vector<32x64xf32>
    tpu.vector_store %arg18[%c0_24, %c0_25], %31 {strides = array<i32>} : memref<32x64xf32, #tpu.memory_space<vmem>>, vector<32x64xf32>,
    %cst_26 = arith.constant 0.000000e+00 : f32
    %33 = vector.broadcast %cst_26 : f32 to vector<16x64xf32>
    %c0_27 = arith.constant 0 : index
    %c0_28 = arith.constant 0 : index
    %34 = vector.load %arg19[%c0_27, %c0_28] : memref<16x64xf32, #tpu.memory_space<vmem>>, vector<16x64xf32>
    tpu.vector_store %arg19[%c0_27, %c0_28], %33 {strides = array<i32>} : memref<16x64xf32, #tpu.memory_space<vmem>>, vector<16x64xf32>,
    %c0_i32_29 = arith.constant 0 : i32
    %c32_i32_30 = arith.constant 32 : i32
    %35 = arith.addi %c0_i32_29, %c32_i32_30 : i32
    %c1_i32_31 = arith.constant 1 : i32
    scf.for %arg21 = %c0_i32_29 to %35 step %c1_i32_31  : i32 {
      %c1_i32_168 = arith.constant 1 : i32
      %263 = arith.muli %arg21, %c1_i32_168 : i32
      %c0_i32_169 = arith.constant 0 : i32
      %264 = arith.addi %c0_i32_169, %263 : i32
      %265 = arith.index_cast %264 : i32 to index
      %266 = memref.load %arg1[%265] : memref<32xi32, #tpu.memory_space<smem>>
      %267 = arith.index_cast %266 : i32 to index
      %c0_170 = arith.constant 0 : index
      %268 = vector.load %arg19[%267, %c0_170] : memref<16x64xf32, #tpu.memory_space<vmem>>, vector<1x64xf32>
      %269 = arith.index_cast %264 : i32 to index
      %c0_171 = arith.constant 0 : index
      %270 = vector.load %arg18[%269, %c0_171] : memref<32x64xf32, #tpu.memory_space<vmem>>, vector<1x64xf32>
      %271 = arith.addf %268, %270 : vector<1x64xf32>
      %272 = arith.index_cast %266 : i32 to index
      %c0_172 = arith.constant 0 : index
      %273 = vector.load %arg19[%272, %c0_172] : memref<16x64xf32, #tpu.memory_space<vmem>>, vector<1x64xf32>
      tpu.vector_store %arg19[%272, %c0_172], %271 {strides = array<i32>} : memref<16x64xf32, #tpu.memory_space<vmem>>, vector<1x64xf32>,
    }
    %c32_i32_32 = arith.constant 32 : i32
    %c0_33 = arith.constant 0 : index
    %c0_34 = arith.constant 0 : index
    %36 = vector.load %arg17[%c0_33, %c0_34] : memref<16x64xf32, #tpu.memory_space<vmem>>, vector<16x64xf32>
    %c0_35 = arith.constant 0 : index
    %c0_36 = arith.constant 0 : index
    %37 = vector.load %arg19[%c0_35, %c0_36] : memref<16x64xf32, #tpu.memory_space<vmem>>, vector<16x64xf32>
    %38 = arith.truncf %37 : vector<16x64xf32> to vector<16x64xbf16>
    %c0_37 = arith.constant 0 : index
    %c0_38 = arith.constant 0 : index
    %39 = vector.load %arg8[%c0_37, %c0_38] : memref<64x192xbf16, #tpu.memory_space<vmem>>, vector<64x192xbf16>
    %cst_39 = arith.constant dense<0.000000e+00> : vector<16x192xf32>
    %40 = tpu.matmul %38, %39, %cst_39 {dimension_numbers = #tpu.dot_dimension_numbers<[1], [0], [0], [1], [0, 0, 1, 1], [], []>} : vector<16x64xbf16>, vector<64x192xbf16>, vector<16x192xf32> -> vector<16x192xf32>
    %41 = arith.addf %40, %12 : vector<16x192xf32>
    %42 = arith.truncf %36 : vector<16x64xf32> to vector<16x64xbf16>
    %c0_40 = arith.constant 0 : index
    %c0_41 = arith.constant 0 : index
    %43 = vector.load %arg9[%c0_40, %c0_41] : memref<64x192xbf16, #tpu.memory_space<vmem>>, vector<64x192xbf16>
    %cst_42 = arith.constant dense<0.000000e+00> : vector<16x192xf32>
    %44 = tpu.matmul %42, %43, %cst_42 {dimension_numbers = #tpu.dot_dimension_numbers<[1], [0], [0], [1], [0, 0, 1, 1], [], []>} : vector<16x64xbf16>, vector<64x192xbf16>, vector<16x192xf32> -> vector<16x192xf32>
    %45 = arith.addf %44, %15 : vector<16x192xf32>
    %46 = vector.extract_strided_slice %41 {offsets = [0, 0], sizes = [16, 64], strides = [1, 1]} : vector<16x192xf32> to vector<16x64xf32>
    %47 = vector.extract_strided_slice %45 {offsets = [0, 0], sizes = [16, 64], strides = [1, 1]} : vector<16x192xf32> to vector<16x64xf32>
    %48 = arith.addf %46, %47 : vector<16x64xf32>
    %49 = arith.negf %48 : vector<16x64xf32>
    %50 = math.exp %49 : vector<16x64xf32>
    %cst_43 = arith.constant 1.000000e+00 : f32
    %51 = vector.broadcast %cst_43 : f32 to vector<16x64xf32>
    %52 = arith.addf %51, %50 : vector<16x64xf32>
    %53 = arith.divf %51, %52 : vector<16x64xf32>
    %54 = vector.extract_strided_slice %41 {offsets = [0, 64], sizes = [16, 64], strides = [1, 1]} : vector<16x192xf32> to vector<16x64xf32>
    %55 = vector.extract_strided_slice %45 {offsets = [0, 64], sizes = [16, 64], strides = [1, 1]} : vector<16x192xf32> to vector<16x64xf32>
    %56 = arith.addf %54, %55 : vector<16x64xf32>
    %57 = arith.negf %56 : vector<16x64xf32>
    %58 = math.exp %57 : vector<16x64xf32>
    %cst_44 = arith.constant 1.000000e+00 : f32
    %59 = vector.broadcast %cst_44 : f32 to vector<16x64xf32>
    %60 = arith.addf %59, %58 : vector<16x64xf32>
    %61 = arith.divf %59, %60 : vector<16x64xf32>
    %62 = vector.extract_strided_slice %41 {offsets = [0, 128], sizes = [16, 64], strides = [1, 1]} : vector<16x192xf32> to vector<16x64xf32>
    %63 = vector.extract_strided_slice %45 {offsets = [0, 128], sizes = [16, 64], strides = [1, 1]} : vector<16x192xf32> to vector<16x64xf32>
    %64 = arith.mulf %53, %63 : vector<16x64xf32>
    %65 = arith.addf %62, %64 : vector<16x64xf32>
    %66 = math.tanh %65 : vector<16x64xf32>
    %cst_45 = arith.constant 1.000000e+00 : f32
    %67 = vector.broadcast %cst_45 : f32 to vector<16x64xf32>
    %68 = arith.subf %67, %61 : vector<16x64xf32>
    %69 = arith.mulf %68, %66 : vector<16x64xf32>
    %70 = arith.mulf %61, %36 : vector<16x64xf32>
    %71 = arith.addf %69, %70 : vector<16x64xf32>
    %c0_46 = arith.constant 0 : index
    %c0_47 = arith.constant 0 : index
    %72 = vector.load %arg17[%c0_46, %c0_47] : memref<16x64xf32, #tpu.memory_space<vmem>>, vector<16x64xf32>
    tpu.vector_store %arg17[%c0_46, %c0_47], %71 {strides = array<i32>} : memref<16x64xf32, #tpu.memory_space<vmem>>, vector<16x64xf32>,
    %c0_i32_48 = arith.constant 0 : i32
    %c32_i32_49 = arith.constant 32 : i32
    %73 = arith.addi %c0_i32_48, %c32_i32_49 : i32
    %c1_i32_50 = arith.constant 1 : i32
    scf.for %arg21 = %c0_i32_48 to %73 step %c1_i32_50  : i32 {
      %c1_i32_168 = arith.constant 1 : i32
      %263 = arith.muli %arg21, %c1_i32_168 : i32
      %c0_i32_169 = arith.constant 0 : i32
      %264 = arith.addi %c0_i32_169, %263 : i32
      %265 = arith.index_cast %264 : i32 to index
      %266 = memref.load %arg0[%265] : memref<32xi32, #tpu.memory_space<smem>>
      %267 = arith.index_cast %266 : i32 to index
      %c0_170 = arith.constant 0 : index
      %268 = vector.load %arg17[%267, %c0_170] : memref<16x64xf32, #tpu.memory_space<vmem>>, vector<1x64xf32>
      %269 = arith.index_cast %264 : i32 to index
      %c0_171 = arith.constant 0 : index
      %270 = vector.load %arg18[%269, %c0_171] : memref<32x64xf32, #tpu.memory_space<vmem>>, vector<1x64xf32>
      tpu.vector_store %arg18[%269, %c0_171], %268 {strides = array<i32>} : memref<32x64xf32, #tpu.memory_space<vmem>>, vector<1x64xf32>,
    }
    %c32_i32_51 = arith.constant 32 : i32
    %c0_52 = arith.constant 0 : index
    %c0_53 = arith.constant 0 : index
    %74 = vector.load %arg18[%c0_52, %c0_53] : memref<32x64xf32, #tpu.memory_space<vmem>>, vector<32x64xf32>
    %75 = arith.truncf %74 : vector<32x64xf32> to vector<32x64xbf16>
    %c0_54 = arith.constant 0 : index
    %c0_55 = arith.constant 0 : index
    %76 = vector.load %arg7[%c0_54, %c0_55] : memref<64x256xbf16, #tpu.memory_space<vmem>>, vector<64x256xbf16>
    %cst_56 = arith.constant dense<0.000000e+00> : vector<32x256xf32>
    %77 = tpu.matmul %75, %76, %cst_56 {dimension_numbers = #tpu.dot_dimension_numbers<[1], [0], [0], [1], [0, 0, 1, 1], [], []>} : vector<32x64xbf16>, vector<64x256xbf16>, vector<32x256xf32> -> vector<32x256xf32>
    %78 = arith.mulf %77, %8 : vector<32x256xf32>
    %79 = vector.extract_strided_slice %78 {offsets = [0, 0], sizes = [32, 64], strides = [1, 1]} : vector<32x256xf32> to vector<32x64xf32>
    %80 = arith.addf %9, %79 : vector<32x64xf32>
    %81 = vector.extract_strided_slice %78 {offsets = [0, 64], sizes = [32, 64], strides = [1, 1]} : vector<32x256xf32> to vector<32x64xf32>
    %82 = arith.addf %80, %81 : vector<32x64xf32>
    %83 = vector.extract_strided_slice %78 {offsets = [0, 128], sizes = [32, 64], strides = [1, 1]} : vector<32x256xf32> to vector<32x64xf32>
    %84 = arith.addf %82, %83 : vector<32x64xf32>
    %85 = vector.extract_strided_slice %78 {offsets = [0, 192], sizes = [32, 64], strides = [1, 1]} : vector<32x256xf32> to vector<32x64xf32>
    %86 = arith.addf %84, %85 : vector<32x64xf32>
    %cst_57 = arith.constant 0.000000e+00 : f32
    %87 = vector.broadcast %cst_57 : f32 to vector<32x64xf32>
    %88 = arith.maximumf %86, %87 : vector<32x64xf32>
    %c0_58 = arith.constant 0 : index
    %c0_59 = arith.constant 0 : index
    %89 = vector.load %arg18[%c0_58, %c0_59] : memref<32x64xf32, #tpu.memory_space<vmem>>, vector<32x64xf32>
    tpu.vector_store %arg18[%c0_58, %c0_59], %88 {strides = array<i32>} : memref<32x64xf32, #tpu.memory_space<vmem>>, vector<32x64xf32>,
    %cst_60 = arith.constant 0.000000e+00 : f32
    %90 = vector.broadcast %cst_60 : f32 to vector<16x64xf32>
    %c0_61 = arith.constant 0 : index
    %c0_62 = arith.constant 0 : index
    %91 = vector.load %arg19[%c0_61, %c0_62] : memref<16x64xf32, #tpu.memory_space<vmem>>, vector<16x64xf32>
    tpu.vector_store %arg19[%c0_61, %c0_62], %90 {strides = array<i32>} : memref<16x64xf32, #tpu.memory_space<vmem>>, vector<16x64xf32>,
    %c0_i32_63 = arith.constant 0 : i32
    %c32_i32_64 = arith.constant 32 : i32
    %92 = arith.addi %c0_i32_63, %c32_i32_64 : i32
    %c1_i32_65 = arith.constant 1 : i32
    scf.for %arg21 = %c0_i32_63 to %92 step %c1_i32_65  : i32 {
      %c1_i32_168 = arith.constant 1 : i32
      %263 = arith.muli %arg21, %c1_i32_168 : i32
      %c0_i32_169 = arith.constant 0 : i32
      %264 = arith.addi %c0_i32_169, %263 : i32
      %265 = arith.index_cast %264 : i32 to index
      %266 = memref.load %arg1[%265] : memref<32xi32, #tpu.memory_space<smem>>
      %267 = arith.index_cast %266 : i32 to index
      %c0_170 = arith.constant 0 : index
      %268 = vector.load %arg19[%267, %c0_170] : memref<16x64xf32, #tpu.memory_space<vmem>>, vector<1x64xf32>
      %269 = arith.index_cast %264 : i32 to index
      %c0_171 = arith.constant 0 : index
      %270 = vector.load %arg18[%269, %c0_171] : memref<32x64xf32, #tpu.memory_space<vmem>>, vector<1x64xf32>
      %271 = arith.addf %268, %270 : vector<1x64xf32>
      %272 = arith.index_cast %266 : i32 to index
      %c0_172 = arith.constant 0 : index
      %273 = vector.load %arg19[%272, %c0_172] : memref<16x64xf32, #tpu.memory_space<vmem>>, vector<1x64xf32>
      tpu.vector_store %arg19[%272, %c0_172], %271 {strides = array<i32>} : memref<16x64xf32, #tpu.memory_space<vmem>>, vector<1x64xf32>,
    }
    %c32_i32_66 = arith.constant 32 : i32
    %c0_67 = arith.constant 0 : index
    %c0_68 = arith.constant 0 : index
    %93 = vector.load %arg17[%c0_67, %c0_68] : memref<16x64xf32, #tpu.memory_space<vmem>>, vector<16x64xf32>
    %c0_69 = arith.constant 0 : index
    %c0_70 = arith.constant 0 : index
    %94 = vector.load %arg19[%c0_69, %c0_70] : memref<16x64xf32, #tpu.memory_space<vmem>>, vector<16x64xf32>
    %95 = arith.truncf %94 : vector<16x64xf32> to vector<16x64xbf16>
    %c0_71 = arith.constant 0 : index
    %c0_72 = arith.constant 0 : index
    %96 = vector.load %arg8[%c0_71, %c0_72] : memref<64x192xbf16, #tpu.memory_space<vmem>>, vector<64x192xbf16>
    %cst_73 = arith.constant dense<0.000000e+00> : vector<16x192xf32>
    %97 = tpu.matmul %95, %96, %cst_73 {dimension_numbers = #tpu.dot_dimension_numbers<[1], [0], [0], [1], [0, 0, 1, 1], [], []>} : vector<16x64xbf16>, vector<64x192xbf16>, vector<16x192xf32> -> vector<16x192xf32>
    %98 = arith.addf %97, %12 : vector<16x192xf32>
    %99 = arith.truncf %93 : vector<16x64xf32> to vector<16x64xbf16>
    %c0_74 = arith.constant 0 : index
    %c0_75 = arith.constant 0 : index
    %100 = vector.load %arg9[%c0_74, %c0_75] : memref<64x192xbf16, #tpu.memory_space<vmem>>, vector<64x192xbf16>
    %cst_76 = arith.constant dense<0.000000e+00> : vector<16x192xf32>
    %101 = tpu.matmul %99, %100, %cst_76 {dimension_numbers = #tpu.dot_dimension_numbers<[1], [0], [0], [1], [0, 0, 1, 1], [], []>} : vector<16x64xbf16>, vector<64x192xbf16>, vector<16x192xf32> -> vector<16x192xf32>
    %102 = arith.addf %101, %15 : vector<16x192xf32>
    %103 = vector.extract_strided_slice %98 {offsets = [0, 0], sizes = [16, 64], strides = [1, 1]} : vector<16x192xf32> to vector<16x64xf32>
    %104 = vector.extract_strided_slice %102 {offsets = [0, 0], sizes = [16, 64], strides = [1, 1]} : vector<16x192xf32> to vector<16x64xf32>
    %105 = arith.addf %103, %104 : vector<16x64xf32>
    %106 = arith.negf %105 : vector<16x64xf32>
    %107 = math.exp %106 : vector<16x64xf32>
    %cst_77 = arith.constant 1.000000e+00 : f32
    %108 = vector.broadcast %cst_77 : f32 to vector<16x64xf32>
    %109 = arith.addf %108, %107 : vector<16x64xf32>
    %110 = arith.divf %108, %109 : vector<16x64xf32>
    %111 = vector.extract_strided_slice %98 {offsets = [0, 64], sizes = [16, 64], strides = [1, 1]} : vector<16x192xf32> to vector<16x64xf32>
    %112 = vector.extract_strided_slice %102 {offsets = [0, 64], sizes = [16, 64], strides = [1, 1]} : vector<16x192xf32> to vector<16x64xf32>
    %113 = arith.addf %111, %112 : vector<16x64xf32>
    %114 = arith.negf %113 : vector<16x64xf32>
    %115 = math.exp %114 : vector<16x64xf32>
    %cst_78 = arith.constant 1.000000e+00 : f32
    %116 = vector.broadcast %cst_78 : f32 to vector<16x64xf32>
    %117 = arith.addf %116, %115 : vector<16x64xf32>
    %118 = arith.divf %116, %117 : vector<16x64xf32>
    %119 = vector.extract_strided_slice %98 {offsets = [0, 128], sizes = [16, 64], strides = [1, 1]} : vector<16x192xf32> to vector<16x64xf32>
    %120 = vector.extract_strided_slice %102 {offsets = [0, 128], sizes = [16, 64], strides = [1, 1]} : vector<16x192xf32> to vector<16x64xf32>
    %121 = arith.mulf %110, %120 : vector<16x64xf32>
    %122 = arith.addf %119, %121 : vector<16x64xf32>
    %123 = math.tanh %122 : vector<16x64xf32>
    %cst_79 = arith.constant 1.000000e+00 : f32
    %124 = vector.broadcast %cst_79 : f32 to vector<16x64xf32>
    %125 = arith.subf %124, %118 : vector<16x64xf32>
    %126 = arith.mulf %125, %123 : vector<16x64xf32>
    %127 = arith.mulf %118, %93 : vector<16x64xf32>
    %128 = arith.addf %126, %127 : vector<16x64xf32>
    %c0_80 = arith.constant 0 : index
    %c0_81 = arith.constant 0 : index
    %129 = vector.load %arg17[%c0_80, %c0_81] : memref<16x64xf32, #tpu.memory_space<vmem>>, vector<16x64xf32>
    tpu.vector_store %arg17[%c0_80, %c0_81], %128 {strides = array<i32>} : memref<16x64xf32, #tpu.memory_space<vmem>>, vector<16x64xf32>,
    %c0_i32_82 = arith.constant 0 : i32
    %c32_i32_83 = arith.constant 32 : i32
    %130 = arith.addi %c0_i32_82, %c32_i32_83 : i32
    %c1_i32_84 = arith.constant 1 : i32
    scf.for %arg21 = %c0_i32_82 to %130 step %c1_i32_84  : i32 {
      %c1_i32_168 = arith.constant 1 : i32
      %263 = arith.muli %arg21, %c1_i32_168 : i32
      %c0_i32_169 = arith.constant 0 : i32
      %264 = arith.addi %c0_i32_169, %263 : i32
      %265 = arith.index_cast %264 : i32 to index
      %266 = memref.load %arg0[%265] : memref<32xi32, #tpu.memory_space<smem>>
      %267 = arith.index_cast %266 : i32 to index
      %c0_170 = arith.constant 0 : index
      %268 = vector.load %arg17[%267, %c0_170] : memref<16x64xf32, #tpu.memory_space<vmem>>, vector<1x64xf32>
      %269 = arith.index_cast %264 : i32 to index
      %c0_171 = arith.constant 0 : index
      %270 = vector.load %arg18[%269, %c0_171] : memref<32x64xf32, #tpu.memory_space<vmem>>, vector<1x64xf32>
      tpu.vector_store %arg18[%269, %c0_171], %268 {strides = array<i32>} : memref<32x64xf32, #tpu.memory_space<vmem>>, vector<1x64xf32>,
    }
    %c32_i32_85 = arith.constant 32 : i32
    %c0_86 = arith.constant 0 : index
    %c0_87 = arith.constant 0 : index
    %131 = vector.load %arg18[%c0_86, %c0_87] : memref<32x64xf32, #tpu.memory_space<vmem>>, vector<32x64xf32>
    %132 = arith.truncf %131 : vector<32x64xf32> to vector<32x64xbf16>
    %c0_88 = arith.constant 0 : index
    %c0_89 = arith.constant 0 : index
    %133 = vector.load %arg7[%c0_88, %c0_89] : memref<64x256xbf16, #tpu.memory_space<vmem>>, vector<64x256xbf16>
    %cst_90 = arith.constant dense<0.000000e+00> : vector<32x256xf32>
    %134 = tpu.matmul %132, %133, %cst_90 {dimension_numbers = #tpu.dot_dimension_numbers<[1], [0], [0], [1], [0, 0, 1, 1], [], []>} : vector<32x64xbf16>, vector<64x256xbf16>, vector<32x256xf32> -> vector<32x256xf32>
    %135 = arith.mulf %134, %8 : vector<32x256xf32>
    %136 = vector.extract_strided_slice %135 {offsets = [0, 0], sizes = [32, 64], strides = [1, 1]} : vector<32x256xf32> to vector<32x64xf32>
    %137 = arith.addf %9, %136 : vector<32x64xf32>
    %138 = vector.extract_strided_slice %135 {offsets = [0, 64], sizes = [32, 64], strides = [1, 1]} : vector<32x256xf32> to vector<32x64xf32>
    %139 = arith.addf %137, %138 : vector<32x64xf32>
    %140 = vector.extract_strided_slice %135 {offsets = [0, 128], sizes = [32, 64], strides = [1, 1]} : vector<32x256xf32> to vector<32x64xf32>
    %141 = arith.addf %139, %140 : vector<32x64xf32>
    %142 = vector.extract_strided_slice %135 {offsets = [0, 192], sizes = [32, 64], strides = [1, 1]} : vector<32x256xf32> to vector<32x64xf32>
    %143 = arith.addf %141, %142 : vector<32x64xf32>
    %cst_91 = arith.constant 0.000000e+00 : f32
    %144 = vector.broadcast %cst_91 : f32 to vector<32x64xf32>
    %145 = arith.maximumf %143, %144 : vector<32x64xf32>
    %c0_92 = arith.constant 0 : index
    %c0_93 = arith.constant 0 : index
    %146 = vector.load %arg18[%c0_92, %c0_93] : memref<32x64xf32, #tpu.memory_space<vmem>>, vector<32x64xf32>
    tpu.vector_store %arg18[%c0_92, %c0_93], %145 {strides = array<i32>} : memref<32x64xf32, #tpu.memory_space<vmem>>, vector<32x64xf32>,
    %cst_94 = arith.constant 0.000000e+00 : f32
    %147 = vector.broadcast %cst_94 : f32 to vector<16x64xf32>
    %c0_95 = arith.constant 0 : index
    %c0_96 = arith.constant 0 : index
    %148 = vector.load %arg19[%c0_95, %c0_96] : memref<16x64xf32, #tpu.memory_space<vmem>>, vector<16x64xf32>
    tpu.vector_store %arg19[%c0_95, %c0_96], %147 {strides = array<i32>} : memref<16x64xf32, #tpu.memory_space<vmem>>, vector<16x64xf32>,
    %c0_i32_97 = arith.constant 0 : i32
    %c32_i32_98 = arith.constant 32 : i32
    %149 = arith.addi %c0_i32_97, %c32_i32_98 : i32
    %c1_i32_99 = arith.constant 1 : i32
    scf.for %arg21 = %c0_i32_97 to %149 step %c1_i32_99  : i32 {
      %c1_i32_168 = arith.constant 1 : i32
      %263 = arith.muli %arg21, %c1_i32_168 : i32
      %c0_i32_169 = arith.constant 0 : i32
      %264 = arith.addi %c0_i32_169, %263 : i32
      %265 = arith.index_cast %264 : i32 to index
      %266 = memref.load %arg1[%265] : memref<32xi32, #tpu.memory_space<smem>>
      %267 = arith.index_cast %266 : i32 to index
      %c0_170 = arith.constant 0 : index
      %268 = vector.load %arg19[%267, %c0_170] : memref<16x64xf32, #tpu.memory_space<vmem>>, vector<1x64xf32>
      %269 = arith.index_cast %264 : i32 to index
      %c0_171 = arith.constant 0 : index
      %270 = vector.load %arg18[%269, %c0_171] : memref<32x64xf32, #tpu.memory_space<vmem>>, vector<1x64xf32>
      %271 = arith.addf %268, %270 : vector<1x64xf32>
      %272 = arith.index_cast %266 : i32 to index
      %c0_172 = arith.constant 0 : index
      %273 = vector.load %arg19[%272, %c0_172] : memref<16x64xf32, #tpu.memory_space<vmem>>, vector<1x64xf32>
      tpu.vector_store %arg19[%272, %c0_172], %271 {strides = array<i32>} : memref<16x64xf32, #tpu.memory_space<vmem>>, vector<1x64xf32>,
    }
    %c32_i32_100 = arith.constant 32 : i32
    %c0_101 = arith.constant 0 : index
    %c0_102 = arith.constant 0 : index
    %150 = vector.load %arg17[%c0_101, %c0_102] : memref<16x64xf32, #tpu.memory_space<vmem>>, vector<16x64xf32>
    %c0_103 = arith.constant 0 : index
    %c0_104 = arith.constant 0 : index
    %151 = vector.load %arg19[%c0_103, %c0_104] : memref<16x64xf32, #tpu.memory_space<vmem>>, vector<16x64xf32>
    %152 = arith.truncf %151 : vector<16x64xf32> to vector<16x64xbf16>
    %c0_105 = arith.constant 0 : index
    %c0_106 = arith.constant 0 : index
    %153 = vector.load %arg8[%c0_105, %c0_106] : memref<64x192xbf16, #tpu.memory_space<vmem>>, vector<64x192xbf16>
    %cst_107 = arith.constant dense<0.000000e+00> : vector<16x192xf32>
    %154 = tpu.matmul %152, %153, %cst_107 {dimension_numbers = #tpu.dot_dimension_numbers<[1], [0], [0], [1], [0, 0, 1, 1], [], []>} : vector<16x64xbf16>, vector<64x192xbf16>, vector<16x192xf32> -> vector<16x192xf32>
    %155 = arith.addf %154, %12 : vector<16x192xf32>
    %156 = arith.truncf %150 : vector<16x64xf32> to vector<16x64xbf16>
    %c0_108 = arith.constant 0 : index
    %c0_109 = arith.constant 0 : index
    %157 = vector.load %arg9[%c0_108, %c0_109] : memref<64x192xbf16, #tpu.memory_space<vmem>>, vector<64x192xbf16>
    %cst_110 = arith.constant dense<0.000000e+00> : vector<16x192xf32>
    %158 = tpu.matmul %156, %157, %cst_110 {dimension_numbers = #tpu.dot_dimension_numbers<[1], [0], [0], [1], [0, 0, 1, 1], [], []>} : vector<16x64xbf16>, vector<64x192xbf16>, vector<16x192xf32> -> vector<16x192xf32>
    %159 = arith.addf %158, %15 : vector<16x192xf32>
    %160 = vector.extract_strided_slice %155 {offsets = [0, 0], sizes = [16, 64], strides = [1, 1]} : vector<16x192xf32> to vector<16x64xf32>
    %161 = vector.extract_strided_slice %159 {offsets = [0, 0], sizes = [16, 64], strides = [1, 1]} : vector<16x192xf32> to vector<16x64xf32>
    %162 = arith.addf %160, %161 : vector<16x64xf32>
    %163 = arith.negf %162 : vector<16x64xf32>
    %164 = math.exp %163 : vector<16x64xf32>
    %cst_111 = arith.constant 1.000000e+00 : f32
    %165 = vector.broadcast %cst_111 : f32 to vector<16x64xf32>
    %166 = arith.addf %165, %164 : vector<16x64xf32>
    %167 = arith.divf %165, %166 : vector<16x64xf32>
    %168 = vector.extract_strided_slice %155 {offsets = [0, 64], sizes = [16, 64], strides = [1, 1]} : vector<16x192xf32> to vector<16x64xf32>
    %169 = vector.extract_strided_slice %159 {offsets = [0, 64], sizes = [16, 64], strides = [1, 1]} : vector<16x192xf32> to vector<16x64xf32>
    %170 = arith.addf %168, %169 : vector<16x64xf32>
    %171 = arith.negf %170 : vector<16x64xf32>
    %172 = math.exp %171 : vector<16x64xf32>
    %cst_112 = arith.constant 1.000000e+00 : f32
    %173 = vector.broadcast %cst_112 : f32 to vector<16x64xf32>
    %174 = arith.addf %173, %172 : vector<16x64xf32>
    %175 = arith.divf %173, %174 : vector<16x64xf32>
    %176 = vector.extract_strided_slice %155 {offsets = [0, 128], sizes = [16, 64], strides = [1, 1]} : vector<16x192xf32> to vector<16x64xf32>
    %177 = vector.extract_strided_slice %159 {offsets = [0, 128], sizes = [16, 64], strides = [1, 1]} : vector<16x192xf32> to vector<16x64xf32>
    %178 = arith.mulf %167, %177 : vector<16x64xf32>
    %179 = arith.addf %176, %178 : vector<16x64xf32>
    %180 = math.tanh %179 : vector<16x64xf32>
    %cst_113 = arith.constant 1.000000e+00 : f32
    %181 = vector.broadcast %cst_113 : f32 to vector<16x64xf32>
    %182 = arith.subf %181, %175 : vector<16x64xf32>
    %183 = arith.mulf %182, %180 : vector<16x64xf32>
    %184 = arith.mulf %175, %150 : vector<16x64xf32>
    %185 = arith.addf %183, %184 : vector<16x64xf32>
    %c0_114 = arith.constant 0 : index
    %c0_115 = arith.constant 0 : index
    %186 = vector.load %arg17[%c0_114, %c0_115] : memref<16x64xf32, #tpu.memory_space<vmem>>, vector<16x64xf32>
    tpu.vector_store %arg17[%c0_114, %c0_115], %185 {strides = array<i32>} : memref<16x64xf32, #tpu.memory_space<vmem>>, vector<16x64xf32>,
    %c0_i32_116 = arith.constant 0 : i32
    %c32_i32_117 = arith.constant 32 : i32
    %187 = arith.addi %c0_i32_116, %c32_i32_117 : i32
    %c1_i32_118 = arith.constant 1 : i32
    scf.for %arg21 = %c0_i32_116 to %187 step %c1_i32_118  : i32 {
      %c1_i32_168 = arith.constant 1 : i32
      %263 = arith.muli %arg21, %c1_i32_168 : i32
      %c0_i32_169 = arith.constant 0 : i32
      %264 = arith.addi %c0_i32_169, %263 : i32
      %265 = arith.index_cast %264 : i32 to index
      %266 = memref.load %arg0[%265] : memref<32xi32, #tpu.memory_space<smem>>
      %267 = arith.index_cast %266 : i32 to index
      %c0_170 = arith.constant 0 : index
      %268 = vector.load %arg17[%267, %c0_170] : memref<16x64xf32, #tpu.memory_space<vmem>>, vector<1x64xf32>
      %269 = arith.index_cast %264 : i32 to index
      %c0_171 = arith.constant 0 : index
      %270 = vector.load %arg18[%269, %c0_171] : memref<32x64xf32, #tpu.memory_space<vmem>>, vector<1x64xf32>
      tpu.vector_store %arg18[%269, %c0_171], %268 {strides = array<i32>} : memref<32x64xf32, #tpu.memory_space<vmem>>, vector<1x64xf32>,
    }
    %c32_i32_119 = arith.constant 32 : i32
    %c0_120 = arith.constant 0 : index
    %c0_121 = arith.constant 0 : index
    %188 = vector.load %arg18[%c0_120, %c0_121] : memref<32x64xf32, #tpu.memory_space<vmem>>, vector<32x64xf32>
    %189 = arith.truncf %188 : vector<32x64xf32> to vector<32x64xbf16>
    %c0_122 = arith.constant 0 : index
    %c0_123 = arith.constant 0 : index
    %190 = vector.load %arg7[%c0_122, %c0_123] : memref<64x256xbf16, #tpu.memory_space<vmem>>, vector<64x256xbf16>
    %cst_124 = arith.constant dense<0.000000e+00> : vector<32x256xf32>
    %191 = tpu.matmul %189, %190, %cst_124 {dimension_numbers = #tpu.dot_dimension_numbers<[1], [0], [0], [1], [0, 0, 1, 1], [], []>} : vector<32x64xbf16>, vector<64x256xbf16>, vector<32x256xf32> -> vector<32x256xf32>
    %192 = arith.mulf %191, %8 : vector<32x256xf32>
    %193 = vector.extract_strided_slice %192 {offsets = [0, 0], sizes = [32, 64], strides = [1, 1]} : vector<32x256xf32> to vector<32x64xf32>
    %194 = arith.addf %9, %193 : vector<32x64xf32>
    %195 = vector.extract_strided_slice %192 {offsets = [0, 64], sizes = [32, 64], strides = [1, 1]} : vector<32x256xf32> to vector<32x64xf32>
    %196 = arith.addf %194, %195 : vector<32x64xf32>
    %197 = vector.extract_strided_slice %192 {offsets = [0, 128], sizes = [32, 64], strides = [1, 1]} : vector<32x256xf32> to vector<32x64xf32>
    %198 = arith.addf %196, %197 : vector<32x64xf32>
    %199 = vector.extract_strided_slice %192 {offsets = [0, 192], sizes = [32, 64], strides = [1, 1]} : vector<32x256xf32> to vector<32x64xf32>
    %200 = arith.addf %198, %199 : vector<32x64xf32>
    %cst_125 = arith.constant 0.000000e+00 : f32
    %201 = vector.broadcast %cst_125 : f32 to vector<32x64xf32>
    %202 = arith.maximumf %200, %201 : vector<32x64xf32>
    %c0_126 = arith.constant 0 : index
    %c0_127 = arith.constant 0 : index
    %203 = vector.load %arg18[%c0_126, %c0_127] : memref<32x64xf32, #tpu.memory_space<vmem>>, vector<32x64xf32>
    tpu.vector_store %arg18[%c0_126, %c0_127], %202 {strides = array<i32>} : memref<32x64xf32, #tpu.memory_space<vmem>>, vector<32x64xf32>,
    %cst_128 = arith.constant 0.000000e+00 : f32
    %204 = vector.broadcast %cst_128 : f32 to vector<16x64xf32>
    %c0_129 = arith.constant 0 : index
    %c0_130 = arith.constant 0 : index
    %205 = vector.load %arg19[%c0_129, %c0_130] : memref<16x64xf32, #tpu.memory_space<vmem>>, vector<16x64xf32>
    tpu.vector_store %arg19[%c0_129, %c0_130], %204 {strides = array<i32>} : memref<16x64xf32, #tpu.memory_space<vmem>>, vector<16x64xf32>,
    %c0_i32_131 = arith.constant 0 : i32
    %c32_i32_132 = arith.constant 32 : i32
    %206 = arith.addi %c0_i32_131, %c32_i32_132 : i32
    %c1_i32_133 = arith.constant 1 : i32
    scf.for %arg21 = %c0_i32_131 to %206 step %c1_i32_133  : i32 {
      %c1_i32_168 = arith.constant 1 : i32
      %263 = arith.muli %arg21, %c1_i32_168 : i32
      %c0_i32_169 = arith.constant 0 : i32
      %264 = arith.addi %c0_i32_169, %263 : i32
      %265 = arith.index_cast %264 : i32 to index
      %266 = memref.load %arg1[%265] : memref<32xi32, #tpu.memory_space<smem>>
      %267 = arith.index_cast %266 : i32 to index
      %c0_170 = arith.constant 0 : index
      %268 = vector.load %arg19[%267, %c0_170] : memref<16x64xf32, #tpu.memory_space<vmem>>, vector<1x64xf32>
      %269 = arith.index_cast %264 : i32 to index
      %c0_171 = arith.constant 0 : index
      %270 = vector.load %arg18[%269, %c0_171] : memref<32x64xf32, #tpu.memory_space<vmem>>, vector<1x64xf32>
      %271 = arith.addf %268, %270 : vector<1x64xf32>
      %272 = arith.index_cast %266 : i32 to index
      %c0_172 = arith.constant 0 : index
      %273 = vector.load %arg19[%272, %c0_172] : memref<16x64xf32, #tpu.memory_space<vmem>>, vector<1x64xf32>
      tpu.vector_store %arg19[%272, %c0_172], %271 {strides = array<i32>} : memref<16x64xf32, #tpu.memory_space<vmem>>, vector<1x64xf32>,
    }
    %c32_i32_134 = arith.constant 32 : i32
    %c0_135 = arith.constant 0 : index
    %c0_136 = arith.constant 0 : index
    %207 = vector.load %arg17[%c0_135, %c0_136] : memref<16x64xf32, #tpu.memory_space<vmem>>, vector<16x64xf32>
    %c0_137 = arith.constant 0 : index
    %c0_138 = arith.constant 0 : index
    %208 = vector.load %arg19[%c0_137, %c0_138] : memref<16x64xf32, #tpu.memory_space<vmem>>, vector<16x64xf32>
    %209 = arith.truncf %208 : vector<16x64xf32> to vector<16x64xbf16>
    %c0_139 = arith.constant 0 : index
    %c0_140 = arith.constant 0 : index
    %210 = vector.load %arg8[%c0_139, %c0_140] : memref<64x192xbf16, #tpu.memory_space<vmem>>, vector<64x192xbf16>
    %cst_141 = arith.constant dense<0.000000e+00> : vector<16x192xf32>
    %211 = tpu.matmul %209, %210, %cst_141 {dimension_numbers = #tpu.dot_dimension_numbers<[1], [0], [0], [1], [0, 0, 1, 1], [], []>} : vector<16x64xbf16>, vector<64x192xbf16>, vector<16x192xf32> -> vector<16x192xf32>
    %212 = arith.addf %211, %12 : vector<16x192xf32>
    %213 = arith.truncf %207 : vector<16x64xf32> to vector<16x64xbf16>
    %c0_142 = arith.constant 0 : index
    %c0_143 = arith.constant 0 : index
    %214 = vector.load %arg9[%c0_142, %c0_143] : memref<64x192xbf16, #tpu.memory_space<vmem>>, vector<64x192xbf16>
    %cst_144 = arith.constant dense<0.000000e+00> : vector<16x192xf32>
    %215 = tpu.matmul %213, %214, %cst_144 {dimension_numbers = #tpu.dot_dimension_numbers<[1], [0], [0], [1], [0, 0, 1, 1], [], []>} : vector<16x64xbf16>, vector<64x192xbf16>, vector<16x192xf32> -> vector<16x192xf32>
    %216 = arith.addf %215, %15 : vector<16x192xf32>
    %217 = vector.extract_strided_slice %212 {offsets = [0, 0], sizes = [16, 64], strides = [1, 1]} : vector<16x192xf32> to vector<16x64xf32>
    %218 = vector.extract_strided_slice %216 {offsets = [0, 0], sizes = [16, 64], strides = [1, 1]} : vector<16x192xf32> to vector<16x64xf32>
    %219 = arith.addf %217, %218 : vector<16x64xf32>
    %220 = arith.negf %219 : vector<16x64xf32>
    %221 = math.exp %220 : vector<16x64xf32>
    %cst_145 = arith.constant 1.000000e+00 : f32
    %222 = vector.broadcast %cst_145 : f32 to vector<16x64xf32>
    %223 = arith.addf %222, %221 : vector<16x64xf32>
    %224 = arith.divf %222, %223 : vector<16x64xf32>
    %225 = vector.extract_strided_slice %212 {offsets = [0, 64], sizes = [16, 64], strides = [1, 1]} : vector<16x192xf32> to vector<16x64xf32>
    %226 = vector.extract_strided_slice %216 {offsets = [0, 64], sizes = [16, 64], strides = [1, 1]} : vector<16x192xf32> to vector<16x64xf32>
    %227 = arith.addf %225, %226 : vector<16x64xf32>
    %228 = arith.negf %227 : vector<16x64xf32>
    %229 = math.exp %228 : vector<16x64xf32>
    %cst_146 = arith.constant 1.000000e+00 : f32
    %230 = vector.broadcast %cst_146 : f32 to vector<16x64xf32>
    %231 = arith.addf %230, %229 : vector<16x64xf32>
    %232 = arith.divf %230, %231 : vector<16x64xf32>
    %233 = vector.extract_strided_slice %212 {offsets = [0, 128], sizes = [16, 64], strides = [1, 1]} : vector<16x192xf32> to vector<16x64xf32>
    %234 = vector.extract_strided_slice %216 {offsets = [0, 128], sizes = [16, 64], strides = [1, 1]} : vector<16x192xf32> to vector<16x64xf32>
    %235 = arith.mulf %224, %234 : vector<16x64xf32>
    %236 = arith.addf %233, %235 : vector<16x64xf32>
    %237 = math.tanh %236 : vector<16x64xf32>
    %cst_147 = arith.constant 1.000000e+00 : f32
    %238 = vector.broadcast %cst_147 : f32 to vector<16x64xf32>
    %239 = arith.subf %238, %232 : vector<16x64xf32>
    %240 = arith.mulf %239, %237 : vector<16x64xf32>
    %241 = arith.mulf %232, %207 : vector<16x64xf32>
    %242 = arith.addf %240, %241 : vector<16x64xf32>
    %c0_148 = arith.constant 0 : index
    %c0_149 = arith.constant 0 : index
    %243 = vector.load %arg17[%c0_148, %c0_149] : memref<16x64xf32, #tpu.memory_space<vmem>>, vector<16x64xf32>
    tpu.vector_store %arg17[%c0_148, %c0_149], %242 {strides = array<i32>} : memref<16x64xf32, #tpu.memory_space<vmem>>, vector<16x64xf32>,
    %c0_150 = arith.constant 0 : index
    %c0_151 = arith.constant 0 : index
    %244 = vector.load %arg17[%c0_150, %c0_151] : memref<16x64xf32, #tpu.memory_space<vmem>>, vector<16x64xf32>
    %c0_152 = arith.constant 0 : index
    %c64 = arith.constant 64 : index
    %245 = vector.load %arg20[%c0_152, %c64] : memref<16x128xf32, #tpu.memory_space<vmem>>, vector<16x64xf32>
    tpu.vector_store %arg20[%c0_152, %c64], %244 {strides = array<i32>} : memref<16x128xf32, #tpu.memory_space<vmem>>, vector<16x64xf32>,
    %c0_153 = arith.constant 0 : index
    %c0_154 = arith.constant 0 : index
    %246 = vector.load %arg20[%c0_153, %c0_154] : memref<16x128xf32, #tpu.memory_space<vmem>>, vector<16x128xf32>
    %247 = arith.truncf %246 : vector<16x128xf32> to vector<16x128xbf16>
    %c0_155 = arith.constant 0 : index
    %c0_156 = arith.constant 0 : index
    %248 = vector.load %arg12[%c0_155, %c0_156] : memref<128x64xbf16, #tpu.memory_space<vmem>>, vector<128x64xbf16>
    %cst_157 = arith.constant dense<0.000000e+00> : vector<16x64xf32>
    %249 = tpu.matmul %247, %248, %cst_157 {dimension_numbers = #tpu.dot_dimension_numbers<[1], [0], [0], [1], [0, 0, 1, 1], [], []>} : vector<16x128xbf16>, vector<128x64xbf16>, vector<16x64xf32> -> vector<16x64xf32>
    %c0_158 = arith.constant 0 : index
    %c0_159 = arith.constant 0 : index
    %250 = vector.load %arg13[%c0_158, %c0_159] : memref<1x64xf32, #tpu.memory_space<vmem>>, vector<1x64xf32>
    %251 = vector.broadcast %250 : vector<1x64xf32> to vector<16x64xf32>
    %252 = arith.addf %249, %251 : vector<16x64xf32>
    %cst_160 = arith.constant 0.000000e+00 : f32
    %253 = vector.broadcast %cst_160 : f32 to vector<16x64xf32>
    %254 = arith.maximumf %252, %253 : vector<16x64xf32>
    %255 = arith.truncf %254 : vector<16x64xf32> to vector<16x64xbf16>
    %c0_161 = arith.constant 0 : index
    %c0_162 = arith.constant 0 : index
    %256 = vector.load %arg14[%c0_161, %c0_162] : memref<64x64xbf16, #tpu.memory_space<vmem>>, vector<64x64xbf16>
    %cst_163 = arith.constant dense<0.000000e+00> : vector<16x64xf32>
    %257 = tpu.matmul %255, %256, %cst_163 {dimension_numbers = #tpu.dot_dimension_numbers<[1], [0], [0], [1], [0, 0, 1, 1], [], []>} : vector<16x64xbf16>, vector<64x64xbf16>, vector<16x64xf32> -> vector<16x64xf32>
    %c0_164 = arith.constant 0 : index
    %c0_165 = arith.constant 0 : index
    %258 = vector.load %arg15[%c0_164, %c0_165] : memref<1x64xf32, #tpu.memory_space<vmem>>, vector<1x64xf32>
    %259 = vector.broadcast %258 : vector<1x64xf32> to vector<16x64xf32>
    %260 = arith.addf %257, %259 : vector<16x64xf32>
    %261 = math.tanh %260 : vector<16x64xf32>
    %c0_166 = arith.constant 0 : index
    %c0_167 = arith.constant 0 : index
    %262 = vector.load %arg16[%c0_166, %c0_167] : memref<16x64xf32, #tpu.memory_space<vmem>>, vector<16x64xf32>
    tpu.vector_store %arg16[%c0_166, %c0_167], %261 {strides = array<i32>} : memref<16x64xf32, #tpu.memory_space<vmem>>, vector<16x64xf32>,
    return
  }
}

</mosaic_0001>

<llo_original>
// kernel: tpu_custom_call.1
$region0: #{tpu_custom_call.1}
  #allocation0 [shape = 'u32[]', space=smem, size = 0x4, offset = 0x4, fixed_abs, tag = 'smem constant byte address 0x4 - core index']
  #allocation1 [shape = 'u32[144,128]{1,0:T(1,128)}', space=vmem, size = 0x12000, scoped, tag = 'internal scratch']
  #allocation2 [shape = 'f32[16,64]{1,0:T(8,128)}', space=vmem, size = 0x2000, scoped, tag = 'scratch operand']
  #allocation3 [shape = 'f32[32,64]{1,0:T(8,128)}', space=vmem, size = 0x4000, scoped, tag = 'scratch operand']
  #allocation4 [shape = 'f32[16,64]{1,0:T(8,128)}', space=vmem, size = 0x2000, scoped, tag = 'scratch operand']
  #allocation5 [shape = 'f32[16,128]{1,0:T(8,128)}', space=vmem, size = 0x2000, scoped, tag = 'scratch operand']
  %s0 = inlined_call_operand.hbm [shape: s32[32], index: 0, kind: input, shape index: {}]
  %s1 = inlined_call_operand.hbm [shape: s32[32], index: 1, kind: input, shape index: {}]
  %s2 = inlined_call_operand.hbm [shape: bf16[16,74], index: 2, kind: input, shape index: {}]
  %s3 = inlined_call_operand.hbm [shape: f32[32,256], index: 3, kind: input, shape index: {}]
  %s4 = inlined_call_operand.hbm [shape: f32[32,64], index: 4, kind: input, shape index: {}]
  %s5 = inlined_call_operand.hbm [shape: bf16[74,64], index: 5, kind: input, shape index: {}]
  %s6 = inlined_call_operand.hbm [shape: f32[1,64], index: 6, kind: input, shape index: {}]
  %s7 = inlined_call_operand.hbm [shape: bf16[64,256], index: 7, kind: input, shape index: {}]
  %s8 = inlined_call_operand.hbm [shape: bf16[64,192], index: 8, kind: input, shape index: {}]
  %s9 = inlined_call_operand.hbm [shape: bf16[64,192], index: 9, kind: input, shape index: {}]
  %s10 = inlined_call_operand.hbm [shape: f32[1,192], index: 10, kind: input, shape index: {}]
  %s11 = inlined_call_operand.hbm [shape: f32[1,192], index: 11, kind: input, shape index: {}]
  %s12 = inlined_call_operand.hbm [shape: bf16[128,64], index: 12, kind: input, shape index: {}]
  %s13 = inlined_call_operand.hbm [shape: f32[1,64], index: 13, kind: input, shape index: {}]
  %s14 = inlined_call_operand.hbm [shape: bf16[64,64], index: 14, kind: input, shape index: {}]
  %s15 = inlined_call_operand.hbm [shape: f32[1,64], index: 15, kind: input, shape index: {}]
  %s16 = inlined_call_operand.hbm [shape: f32[16,64], index: 16, kind: output, shape index: {}]
  %s17 = sld [smem:[#allocation0]]
  $region194: #{tpu_custom_call.1} parent=0
    _
  %s19 = ssub.s32 1, %s17
  %s20 = scalar_select 0, %s19, %s17
  $region1: #{tpu_custom_call.1} parent=0
    #allocation6 [shape = 'u8[512]{0}', space=smem, size = 0x200, scoped, tag = 'input window, operand 0, single buffered']
    #allocation7 [shape = 's32[1]{0}', space=sflag, size = 0x4, scoped, tag = 'scoped memory for tpu_custom_call.1']
    #allocation8 [shape = 's32[1]{0}', space=sflag, size = 0x4, scoped, tag = 'scoped memory for tpu_custom_call.1']
    #allocation9 [shape = 's32[1]{0}', space=sflag, size = 0x4, scoped, tag = 'scoped memory for tpu_custom_call.1']
    #allocation10 [shape = 'u8[512]{0}', space=smem, size = 0x200, scoped, tag = 'input window, operand 1, single buffered']
    #allocation11 [shape = 's32[1]{0}', space=sflag, size = 0x4, scoped, tag = 'scoped memory for tpu_custom_call.1']
    #allocation12 [shape = 'u8[4096]{0}', space=vmem, size = 0x1000, scoped, tag = 'input window, operand 2, single buffered']
    #allocation13 [shape = 'u8[32768]{0}', space=vmem, size = 0x8000, scoped, tag = 'input window, operand 3, single buffered']
    #allocation14 [shape = 's32[1]{0}', space=sflag, size = 0x4, scoped, tag = 'scoped memory for tpu_custom_call.1']
    #allocation15 [shape = 'u8[16384]{0}', space=vmem, size = 0x4000, scoped, tag = 'input window, operand 4, single buffered']
    #allocation16 [shape = 'u8[20480]{0}', space=vmem, size = 0x5000, scoped, tag = 'input window, operand 5, single buffered']
    #allocation17 [shape = 's32[1]{0}', space=sflag, size = 0x4, scoped, tag = 'scoped memory for tpu_custom_call.1']
    #allocation18 [shape = 'u8[512]{0}', space=vmem, size = 0x400, scoped, tag = 'input window, operand 6, single buffered']
    #allocation19 [shape = 'u8[32768]{0}', space=vmem, size = 0x8000, scoped, tag = 'input window, operand 7, single buffered']
    #allocation20 [shape = 's32[1]{0}', space=sflag, size = 0x4, scoped, tag = 'scoped memory for tpu_custom_call.1']
    #allocation21 [shape = 'u8[32768]{0}', space=vmem, size = 0x8000, scoped, tag = 'input window, operand 8, single buffered']
    #allocation22 [shape = 'u8[32768]{0}', space=vmem, size = 0x8000, scoped, tag = 'input window, operand 9, single buffered']
    #allocation23 [shape = 's32[1]{0}', space=sflag, size = 0x4, scoped, tag = 'scoped memory for tpu_custom_call.1']
    #allocation24 [shape = 'u8[1024]{0}', space=vmem, size = 0x400, scoped, tag = 'input window, operand 10, single buffered']
    #allocation25 [shape = 'u8[1024]{0}', space=vmem, size = 0x400, scoped, tag = 'input window, operand 11, single buffered']
    #allocation26 [shape = 's32[1]{0}', space=sflag, size = 0x4, scoped, tag = 'scoped memory for tpu_custom_call.1']
    #allocation27 [shape = 'u8[32768]{0}', space=vmem, size = 0x8000, scoped, tag = 'input window, operand 12, single buffered']
    #allocation28 [shape = 'u8[512]{0}', space=vmem, size = 0x400, scoped, tag = 'input window, operand 13, single buffered']
    #allocation29 [shape = 's32[1]{0}', space=sflag, size = 0x4, scoped, tag = 'scoped memory for tpu_custom_call.1']
    #allocation30 [shape = 'u8[16384]{0}', space=vmem, size = 0x4000, scoped, tag = 'input window, operand 14, single buffered']
    #allocation31 [shape = 'u8[512]{0}', space=vmem, size = 0x400, scoped, tag = 'input window, operand 15, single buffered']
    #allocation32 [shape = 's32[1]{0}', space=sflag, size = 0x4, scoped, tag = 'scoped memory for tpu_custom_call.1']
    #allocation33 [shape = 'u8[8192]{0}', space=vmem, size = 0x2000, scoped, tag = 'output window, operand 0, single buffered']
    %21 = vsyncpa [#allocation9], 0
    %22 = vsyncpa [#allocation11], 0
    %23 = vsyncpa [#allocation7], 0
    %24 = vsyncpa [#allocation14], 0
    %25 = vsyncpa [#allocation17], 0
    %26 = vsyncpa [#allocation20], 0
    %27 = vsyncpa [#allocation23], 0
    %28 = vsyncpa [#allocation26], 0
    %29 = vsyncpa [#allocation29], 0
    %30 = vsyncpa [#allocation32], 0
    %31 = vsyncpa [#allocation8], 0
    // Predicated region
    $region2: #{tpu_custom_call.1} parent=1 // pred_check
      _
    $region3: #{tpu_custom_call.1} parent=1 // pred_check_branch
      %33 = sbr.rel (0) target = $region5
    $region4: #{tpu_custom_call.1} parent=1 // pred_region
      %s35 = ssub.s32 16, 16
      %36 = vsyncadd [#allocation9], %s35
      %39 = dma.hbm_to_smem %s0, 16, [#allocation6], [#allocation9]
    $region5: #{tpu_custom_call.1} parent=1 // pred_fallthru
      _
    // Predicated region
    $region6: #{tpu_custom_call.1} parent=1 // pred_check
      _
    $region7: #{tpu_custom_call.1} parent=1 // pred_check_branch
      %41 = sbr.rel (0) target = $region9
    $region8: #{tpu_custom_call.1} parent=1 // pred_region
      %s43 = ssub.s32 16, 16
      %44 = vsyncadd [#allocation11], %s43
      %47 = dma.hbm_to_smem %s1, 16, [#allocation10], [#allocation11]
    $region9: #{tpu_custom_call.1} parent=1 // pred_fallthru
      _
    // Predicated region
    $region10: #{tpu_custom_call.1} parent=1 // pred_check
      _
    $region11: #{tpu_custom_call.1} parent=1 // pred_check_branch
      %49 = sbr.rel (0) target = $region13
    $region12: #{tpu_custom_call.1} parent=1 // pred_region
      %s51 = ssub.s32 128, 128
      %52 = vsyncadd [#allocation7], %s51
      %s53 = sshll.u32 [#allocation12], 4
      %s54 = int_to_ptr.vmem [resolvable:$true] %s53
      %59 = dma.hbm_to_vmem [thread:$0]  %s2, 128, %s54, [#allocation7], 64, 64, 4
    $region13: #{tpu_custom_call.1} parent=1 // pred_fallthru
      _
    // Predicated region
    $region14: #{tpu_custom_call.1} parent=1 // pred_check
      _
    $region15: #{tpu_custom_call.1} parent=1 // pred_check_branch
      %61 = sbr.rel (0) target = $region17
    $region16: #{tpu_custom_call.1} parent=1 // pred_region
      %s63 = ssub.s32 1024, 1024
      %64 = vsyncadd [#allocation14], %s63
      %s65 = sshll.u32 [#allocation13], 4
      %s66 = int_to_ptr.vmem [resolvable:$true] %s65
      %71 = dma.hbm_to_vmem [thread:$0]  %s3, 1024, %s66, [#allocation14], 256, 256, 16
    $region17: #{tpu_custom_call.1} parent=1 // pred_fallthru
      _
    // Predicated region
    $region18: #{tpu_custom_call.1} parent=1 // pred_check
      _
    $region19: #{tpu_custom_call.1} parent=1 // pred_check_branch
      %73 = sbr.rel (0) target = $region21
    $region20: #{tpu_custom_call.1} parent=1 // pred_region
      %s75 = ssub.s32 512, 512
      %76 = vsyncadd [#allocation14], %s75
      %s77 = sshll.u32 [#allocation15], 4
      %s78 = int_to_ptr.vmem [resolvable:$true] %s77
      %83 = dma.hbm_to_vmem [thread:$0]  %s4, 512, %s78, [#allocation14], 128, 128, 8
    $region21: #{tpu_custom_call.1} parent=1 // pred_fallthru
      _
    // Predicated region
    $region22: #{tpu_custom_call.1} parent=1 // pred_check
      _
    $region23: #{tpu_custom_call.1} parent=1 // pred_check_branch
      %85 = sbr.rel (0) target = $region25
    $region24: #{tpu_custom_call.1} parent=1 // pred_region
      %s87 = ssub.s32 640, 640
      %88 = vsyncadd [#allocation17], %s87
      %s89 = sshll.u32 [#allocation16], 4
      %s90 = int_to_ptr.vmem [resolvable:$true] %s89
      %95 = dma.hbm_to_vmem [thread:$0]  %s5, 640, %s90, [#allocation17], 64, 64, 4
    $region25: #{tpu_custom_call.1} parent=1 // pred_fallthru
      _
    // Predicated region
    $region26: #{tpu_custom_call.1} parent=1 // pred_check
      _
    $region27: #{tpu_custom_call.1} parent=1 // pred_check_branch
      %97 = sbr.rel (0) target = $region29
    $region28: #{tpu_custom_call.1} parent=1 // pred_region
      %s99 = ssub.s32 16, 16
      %100 = vsyncadd [#allocation17], %s99
      %s102 = sshll.u32 [#allocation18], 4
      %s103 = int_to_ptr.vmem [resolvable:$true] %s102
      %105 = dma.hbm_to_vmem [thread:$0]  %s6, 16, %s103, [#allocation17]
    $region29: #{tpu_custom_call.1} parent=1 // pred_fallthru
      _
    // Predicated region
    $region30: #{tpu_custom_call.1} parent=1 // pred_check
      _
    $region31: #{tpu_custom_call.1} parent=1 // pred_check_branch
      %107 = sbr.rel (0) target = $region33
    $region32: #{tpu_custom_call.1} parent=1 // pred_region
      %s109 = ssub.s32 1024, 1024
      %110 = vsyncadd [#allocation20], %s109
      %s111 = sshll.u32 [#allocation19], 4
      %s112 = int_to_ptr.vmem [resolvable:$true] %s111
      %117 = dma.hbm_to_vmem [thread:$0]  %s7, 1024, %s112, [#allocation20], 128, 128, 8
    $region33: #{tpu_custom_call.1} parent=1 // pred_fallthru
      _
    // Predicated region
    $region34: #{tpu_custom_call.1} parent=1 // pred_check
      _
    $region35: #{tpu_custom_call.1} parent=1 // pred_check_branch
      %119 = sbr.rel (0) target = $region37
    $region36: #{tpu_custom_call.1} parent=1 // pred_region
      %s121 = ssub.s32 1024, 1024
      %122 = vsyncadd [#allocation20], %s121
      %s123 = sshll.u32 [#allocation21], 4
      %s124 = int_to_ptr.vmem [resolvable:$true] %s123
      %129 = dma.hbm_to_vmem [thread:$0]  %s8, 1024, %s124, [#allocation20], 128, 128, 8
    $region37: #{tpu_custom_call.1} parent=1 // pred_fallthru
      _
    // Predicated region
    $region38: #{tpu_custom_call.1} parent=1 // pred_check
      _
    $region39: #{tpu_custom_call.1} parent=1 // pred_check_branch
      %131 = sbr.rel (0) target = $region41
    $region40: #{tpu_custom_call.1} parent=1 // pred_region
      %s133 = ssub.s32 1024, 1024
      %134 = vsyncadd [#allocation23], %s133
      %s135 = sshll.u32 [#allocation22], 4
      %s136 = int_to_ptr.vmem [resolvable:$true] %s135
      %141 = dma.hbm_to_vmem [thread:$0]  %s9, 1024, %s136, [#allocation23], 128, 128, 8
    $region41: #{tpu_custom_call.1} parent=1 // pred_fallthru
      _
    // Predicated region
    $region42: #{tpu_custom_call.1} parent=1 // pred_check
      _
    $region43: #{tpu_custom_call.1} parent=1 // pred_check_branch
      %143 = sbr.rel (0) target = $region45
    $region44: #{tpu_custom_call.1} parent=1 // pred_region
      %s145 = ssub.s32 32, 32
      %146 = vsyncadd [#allocation23], %s145
      %s148 = sshll.u32 [#allocation24], 4
      %s149 = int_to_ptr.vmem [resolvable:$true] %s148
      %151 = dma.hbm_to_vmem [thread:$0]  %s10, 32, %s149, [#allocation23]
    $region45: #{tpu_custom_call.1} parent=1 // pred_fallthru
      _
    // Predicated region
    $region46: #{tpu_custom_call.1} parent=1 // pred_check
      _
    $region47: #{tpu_custom_call.1} parent=1 // pred_check_branch
      %153 = sbr.rel (0) target = $region49
    $region48: #{tpu_custom_call.1} parent=1 // pred_region
      %s155 = ssub.s32 32, 32
      %156 = vsyncadd [#allocation26], %s155
      %s158 = sshll.u32 [#allocation25], 4
      %s159 = int_to_ptr.vmem [resolvable:$true] %s158
      %161 = dma.hbm_to_vmem [thread:$0]  %s11, 32, %s159, [#allocation26]
    $region49: #{tpu_custom_call.1} parent=1 // pred_fallthru
      _
    // Predicated region
    $region50: #{tpu_custom_call.1} parent=1 // pred_check
      _
    $region51: #{tpu_custom_call.1} parent=1 // pred_check_branch
      %163 = sbr.rel (0) target = $region53
    $region52: #{tpu_custom_call.1} parent=1 // pred_region
      %s165 = ssub.s32 1024, 1024
      %166 = vsyncadd [#allocation26], %s165
      %s167 = sshll.u32 [#allocation27], 4
      %s168 = int_to_ptr.vmem [resolvable:$true] %s167
      %173 = dma.hbm_to_vmem [thread:$0]  %s12, 1024, %s168, [#allocation26], 64, 64, 4
    $region53: #{tpu_custom_call.1} parent=1 // pred_fallthru
      _
    // Predicated region
    $region54: #{tpu_custom_call.1} parent=1 // pred_check
      _
    $region55: #{tpu_custom_call.1} parent=1 // pred_check_branch
      %175 = sbr.rel (0) target = $region57
    $region56: #{tpu_custom_call.1} parent=1 // pred_region
      %s177 = ssub.s32 16, 16
      %178 = vsyncadd [#allocation29], %s177
      %s180 = sshll.u32 [#allocation28], 4
      %s181 = int_to_ptr.vmem [resolvable:$true] %s180
      %183 = dma.hbm_to_vmem [thread:$0]  %s13, 16, %s181, [#allocation29]
    $region57: #{tpu_custom_call.1} parent=1 // pred_fallthru
      _
    // Predicated region
    $region58: #{tpu_custom_call.1} parent=1 // pred_check
      _
    $region59: #{tpu_custom_call.1} parent=1 // pred_check_branch
      %185 = sbr.rel (0) target = $region61
    $region60: #{tpu_custom_call.1} parent=1 // pred_region
      %s187 = ssub.s32 512, 512
      %188 = vsyncadd [#allocation29], %s187
      %s189 = sshll.u32 [#allocation30], 4
      %s190 = int_to_ptr.vmem [resolvable:$true] %s189
      %195 = dma.hbm_to_vmem [thread:$0]  %s14, 512, %s190, [#allocation29], 64, 64, 4
    $region61: #{tpu_custom_call.1} parent=1 // pred_fallthru
      _
    // Predicated region
    $region62: #{tpu_custom_call.1} parent=1 // pred_check
      _
    $region63: #{tpu_custom_call.1} parent=1 // pred_check_branch
      %197 = sbr.rel (0) target = $region65
    $region64: #{tpu_custom_call.1} parent=1 // pred_region
      %s199 = ssub.s32 16, 16
      %200 = vsyncadd [#allocation32], %s199
      %s202 = sshll.u32 [#allocation31], 4
      %s203 = int_to_ptr.vmem [resolvable:$true] %s202
      %205 = dma.hbm_to_vmem [thread:$0]  %s15, 16, %s203, [#allocation32]
    $region65: #{tpu_custom_call.1} parent=1 // pred_fallthru
      _
    // Predicated region
    $region66: #{tpu_custom_call.1} parent=1 // pred_check
      _
    $region67: #{tpu_custom_call.1} parent=1 // pred_check_branch
      %207 = sbr.rel (0) target = $region69
    $region68: #{tpu_custom_call.1} parent=1 // pred_region
      %208 = dma.done [#allocation9], 16
    $region69: #{tpu_custom_call.1} parent=1 // pred_fallthru
      _
    // Predicated region
    $region70: #{tpu_custom_call.1} parent=1 // pred_check
      _
    $region71: #{tpu_custom_call.1} parent=1 // pred_check_branch
      %210 = sbr.rel (0) target = $region73
    $region72: #{tpu_custom_call.1} parent=1 // pred_region
      %211 = dma.done [#allocation11], 16
    $region73: #{tpu_custom_call.1} parent=1 // pred_fallthru
      _
    // Predicated region
    $region74: #{tpu_custom_call.1} parent=1 // pred_check
      _
    $region75: #{tpu_custom_call.1} parent=1 // pred_check_branch
      %213 = sbr.rel (0) target = $region77
    $region76: #{tpu_custom_call.1} parent=1 // pred_region
      %214 = dma.done [#allocation7], 128
    $region77: #{tpu_custom_call.1} parent=1 // pred_fallthru
      _
    // Predicated region
    $region78: #{tpu_custom_call.1} parent=1 // pred_check
      _
    $region79: #{tpu_custom_call.1} parent=1 // pred_check_branch
      %216 = sbr.rel (0) target = $region81
    $region80: #{tpu_custom_call.1} parent=1 // pred_region
      %217 = dma.done [#allocation14], 1024
    $region81: #{tpu_custom_call.1} parent=1 // pred_fallthru
      _
    // Predicated region
    $region82: #{tpu_custom_call.1} parent=1 // pred_check
      _
    $region83: #{tpu_custom_call.1} parent=1 // pred_check_branch
      %219 = sbr.rel (0) target = $region85
    $region84: #{tpu_custom_call.1} parent=1 // pred_region
      %220 = dma.done [#allocation14], 512
    $region85: #{tpu_custom_call.1} parent=1 // pred_fallthru
      _
    // Predicated region
    $region86: #{tpu_custom_call.1} parent=1 // pred_check
      _
    $region87: #{tpu_custom_call.1} parent=1 // pred_check_branch
      %222 = sbr.rel (0) target = $region89
    $region88: #{tpu_custom_call.1} parent=1 // pred_region
      %223 = dma.done [#allocation17], 640
    $region89: #{tpu_custom_call.1} parent=1 // pred_fallthru
      _
    // Predicated region
    $region90: #{tpu_custom_call.1} parent=1 // pred_check
      _
    $region91: #{tpu_custom_call.1} parent=1 // pred_check_branch
      %225 = sbr.rel (0) target = $region93
    $region92: #{tpu_custom_call.1} parent=1 // pred_region
      %226 = dma.done [#allocation17], 16
    $region93: #{tpu_custom_call.1} parent=1 // pred_fallthru
      _
    // Predicated region
    $region94: #{tpu_custom_call.1} parent=1 // pred_check
      _
    $region95: #{tpu_custom_call.1} parent=1 // pred_check_branch
      %228 = sbr.rel (0) target = $region97
    $region96: #{tpu_custom_call.1} parent=1 // pred_region
      %229 = dma.done [#allocation20], 1024
    $region97: #{tpu_custom_call.1} parent=1 // pred_fallthru
      _
    // Predicated region
    $region98: #{tpu_custom_call.1} parent=1 // pred_check
      _
    $region99: #{tpu_custom_call.1} parent=1 // pred_check_branch
      %231 = sbr.rel (0) target = $region101
    $region100: #{tpu_custom_call.1} parent=1 // pred_region
      %232 = dma.done [#allocation20], 1024
    $region101: #{tpu_custom_call.1} parent=1 // pred_fallthru
      _
    // Predicated region
    $region102: #{tpu_custom_call.1} parent=1 // pred_check
      _
    $region103: #{tpu_custom_call.1} parent=1 // pred_check_branch
      %234 = sbr.rel (0) target = $region105
    $region104: #{tpu_custom_call.1} parent=1 // pred_region
      %235 = dma.done [#allocation23], 1024
    $region105: #{tpu_custom_call.1} parent=1 // pred_fallthru
      _
    // Predicated region
    $region106: #{tpu_custom_call.1} parent=1 // pred_check
      _
    $region107: #{tpu_custom_call.1} parent=1 // pred_check_branch
      %237 = sbr.rel (0) target = $region109
    $region108: #{tpu_custom_call.1} parent=1 // pred_region
      %238 = dma.done [#allocation23], 32
    $region109: #{tpu_custom_call.1} parent=1 // pred_fallthru
      _
    // Predicated region
    $region110: #{tpu_custom_call.1} parent=1 // pred_check
      _
    $region111: #{tpu_custom_call.1} parent=1 // pred_check_branch
      %240 = sbr.rel (0) target = $region113
    $region112: #{tpu_custom_call.1} parent=1 // pred_region
      %241 = dma.done [#allocation26], 32
    $region113: #{tpu_custom_call.1} parent=1 // pred_fallthru
      _
    // Predicated region
    $region114: #{tpu_custom_call.1} parent=1 // pred_check
      _
    $region115: #{tpu_custom_call.1} parent=1 // pred_check_branch
      %243 = sbr.rel (0) target = $region117
    $region116: #{tpu_custom_call.1} parent=1 // pred_region
      %244 = dma.done [#allocation26], 1024
    $region117: #{tpu_custom_call.1} parent=1 // pred_fallthru
      _
    // Predicated region
    $region118: #{tpu_custom_call.1} parent=1 // pred_check
      _
    $region119: #{tpu_custom_call.1} parent=1 // pred_check_branch
      %246 = sbr.rel (0) target = $region121
    $region120: #{tpu_custom_call.1} parent=1 // pred_region
      %247 = dma.done [#allocation29], 16
    $region121: #{tpu_custom_call.1} parent=1 // pred_fallthru
      _
    // Predicated region
    $region122: #{tpu_custom_call.1} parent=1 // pred_check
      _
    $region123: #{tpu_custom_call.1} parent=1 // pred_check_branch
      %249 = sbr.rel (0) target = $region125
    $region124: #{tpu_custom_call.1} parent=1 // pred_region
      %250 = dma.done [#allocation29], 512
    $region125: #{tpu_custom_call.1} parent=1 // pred_fallthru
      _
    // Predicated region
    $region126: #{tpu_custom_call.1} parent=1 // pred_check
      _
    $region127: #{tpu_custom_call.1} parent=1 // pred_check_branch
      %252 = sbr.rel (0) target = $region129
    $region128: #{tpu_custom_call.1} parent=1 // pred_region
      %253 = dma.done [#allocation32], 16
    $region129: #{tpu_custom_call.1} parent=1 // pred_fallthru
      _
    %254 = sfence
    %v256 = vld [vmem:[#allocation12] sm:$0xf]
    %v257 = vld [vmem:[#allocation12 + $0x4] sm:$0xf]
    %v258 = vld [vmem:[#allocation16] sm:$0xf]
    %v259 = vld [vmem:[#allocation16 + $0x4] sm:$0xf]
    %v260 = vld [vmem:[#allocation16 + $0x8] sm:$0xf]
    %v261 = vld [vmem:[#allocation16 + $0xc] sm:$0xf]
    %v262 = vld [vmem:[#allocation16 + $0x10] sm:$0xf]
    %v263 = vld [vmem:[#allocation16 + $0x14] sm:$0xf]
    %v264 = vld [vmem:[#allocation16 + $0x18] sm:$0xf]
    %v265 = vld [vmem:[#allocation16 + $0x1c] sm:$0xf]
    %v266 = vld [vmem:[#allocation16 + $0x20] sm:$0xf]
    %v267 = vld [vmem:[#allocation16 + $0x24] sm:$0x1]
    %v268 = vld [vmem:[#allocation18] sm:$0x1]
    %v270 = vlaneseq
    %v271 = vshrl.u32 %v270, 7
    %v272 = vsub.s32 0, %v271
    %v273 = vrot.slane %v268, %v272
    %v277 = vunpack.c.l.b16 %v256
    %v278 = vunpack.c.l.b16 %v257
    %v279 = vpack.c.b16 %v278, %v277
    %v290 = vunpack.c.l.b16 %v258
    %v291 = vunpack.c.l.b16 %v259
    %v292 = vunpack.c.l.b16 %v260
    %v293 = vunpack.c.l.b16 %v261
    %v294 = vunpack.c.l.b16 %v262
    %v295 = vunpack.c.l.b16 %v263
    %v296 = vunpack.c.l.b16 %v264
    %v297 = vunpack.c.l.b16 %v265
    %v298 = vunpack.c.l.b16 %v266
    %v299 = vunpack.c.l.b16 %v267
    %v300 = vpack.c.b16 %v291, %v290
    %v301 = vpack.c.b16 %v293, %v292
    %v302 = vpack.c.b16 %v295, %v294
    %v303 = vpack.c.b16 %v297, %v296
    %v304 = vpack.c.b16 %v299, %v298
    %vm309 = vcmask 605184
    %v311 = vsel %vm309, %v279, 0
    %vm313 = vcmask 1044480
    %v315 = vsel %vm313, %v304, 0
    %317 = vmatprep.subr.bf16.mxu0 0
    %318 = vmatpush1.bf16.msra.mxu0 %v300
    %319 = vmatprep.subr.bf16.mxu0 0
    %320 = vmatpush1.bf16.msra.mxu0 %v301
    %321 = vmatprep.subr.bf16.mxu0 0
    %322 = vmatpush1.bf16.msra.mxu0 %v302
    %323 = vmatprep.subr.bf16.mxu0 0
    %324 = vmatpush1.bf16.msra.mxu0 %v303
    %325 = vmatprep.subr.bf16.mxu0 0
    %326 = vmatpush1.bf16.msra.mxu0 %v315
    %327 = vmatprep.subr.bf16.mxu0 0
    %328 = vmatpush1.bf16.msra.mxu0 0
    %329 = vmatprep.subr.bf16.mxu0 0
    %330 = vmatpush1.bf16.msra.mxu0 0
    %331 = vmatprep.subr.bf16.mxu0 0
    %332 = vmatpush1.bf16.msra.mxu0 0
    %333 = vmatprep.subr.bf16.mxu0 0
    %334 = vmatpush1.bf16.msra.mxu0 0
    %335 = vmatprep.subr.bf16.mxu0 0
    %336 = vmatpush1.bf16.msra.mxu0 0
    %337 = vmatprep.subr.bf16.mxu0 0
    %338 = vmatpush1.bf16.msra.mxu0 0
    %339 = vmatprep.subr.bf16.mxu0 0
    %340 = vmatpush1.bf16.msra.mxu0 0
    %341 = vmatprep.subr.bf16.mxu0 0
    %342 = vmatpush1.bf16.msra.mxu0 0
    %343 = vmatprep.subr.bf16.mxu0 0
    %344 = vmatpush1.bf16.msra.mxu0 0
    %345 = vmatprep.subr.bf16.mxu0 0
    %346 = vmatpush1.bf16.msra.mxu0 0
    %347 = vmatprep.subr.bf16.mxu0 0
    %348 = vmatpush1.bf16.msra.mxu0 0
    %349 = vmatprep.mubr.bf16.mxu0 0
    %350 = vmatmul.mubr.bf16.gmra.mrb[0].mxu0 %v311
    %v351 = vpop.f32.mrb[0].mxu0
    %v352 = vadd.f32 %v273, %v351
    %v353 = vpop.f32.mrb[0].mxu0
    %v354 = vpop.f32.mrb[0].mxu0
    %v355 = vadd.f32 %v273, %v354
    %v356 = vpop.f32.mrb[0].mxu0
    %357 = vdwg.mxu0
    %vm358 = vcmask 523264
    %359 = vst.msk [vmem:[#allocation2] sm:$0xff] %vm358, %v352
    %360 = vst.msk [vmem:[#allocation2 + $0x8] sm:$0xff] %vm358, %v355
    %361 = vst.msk [vmem:[#allocation5] sm:$0xff] %vm358, %v352
    %362 = vst.msk [vmem:[#allocation5 + $0x8] sm:$0xff] %vm358, %v355
    %v363 = vld [vmem:[#allocation13] sm:$0xff]
    %v364 = vld [vmem:[#allocation13 + $0x8] sm:$0xff]
    %v365 = vld [vmem:[#allocation13 + $0x10] sm:$0xff]
    %v366 = vld [vmem:[#allocation13 + $0x18] sm:$0xff]
    %v367 = vld [vmem:[#allocation13 + $0x20] sm:$0xff]
    %v368 = vld [vmem:[#allocation13 + $0x28] sm:$0xff]
    %v369 = vld [vmem:[#allocation13 + $0x30] sm:$0xff]
    %v370 = vld [vmem:[#allocation13 + $0x38] sm:$0xff]
    %v371 = vld [vmem:[#allocation15] sm:$0xff]
    %v372 = vld [vmem:[#allocation15 + $0x8] sm:$0xff]
    %v373 = vld [vmem:[#allocation15 + $0x10] sm:$0xff]
    %v374 = vld [vmem:[#allocation15 + $0x18] sm:$0xff]
    %v375 = vld [vmem:[#allocation24] sm:$0x3]
    %v377 = vlaneseq
    %v378 = vshrl.u32 %v377, 7
    %v379 = vsub.s32 0, %v378
    %v380 = vrot.slane %v375, %v379
    %v381 = vlaneseq
    %v382 = vshrl.u32 %v381, 7
    %v383 = vsub.s32 1, %v382
    %v384 = vrot.slane %v375, %v383
    %v387 = vld [vmem:[#allocation25] sm:$0x3]
    %v389 = vlaneseq
    %v390 = vshrl.u32 %v389, 7
    %v391 = vsub.s32 0, %v390
    %v392 = vrot.slane %v387, %v391
    %v393 = vlaneseq
    %v394 = vshrl.u32 %v393, 7
    %v395 = vsub.s32 1, %v394
    %v396 = vrot.slane %v387, %v395
    loop: start=0, step=1, limit=32
    $region130: #{tpu_custom_call.1} parent=1 // loop_pre_header
      _
    $region131: #{tpu_custom_call.1} parent=1 // loop_header
      %s400 = sphi 0, %s404
      %p401 = scmp.ge.s32.totalorder %s400, 32
    $region132: #{tpu_custom_call.1} parent=1 // loop_header_branch
      %403 = sbr.rel (%p401) target = $region136
    $region133: #{tpu_custom_call.1} parent=1 // loop_body
      %s405 = sld [smem:[#allocation6 + %s400]]
      %s406 = scalar_lea.vmem [#allocation2], %s405
      %v407 = vld [vmem:[%s406] sm:$0x1]
      %s408 = scalar_lea.vmem [#allocation3], %s400
      %vm409 = vcmask 516096
      %410 = vst.msk [vmem:[%s408] sm:$0x1] %vm409, %v407
    $region134: #{tpu_custom_call.1} parent=1 // loop_footer
      %s404 = sadd.s32 1, %s400
    $region135: #{tpu_custom_call.1} parent=1 // loop_footer_branch
      %399 = sbr.rel target = $region131
    $region136: #{tpu_custom_call.1} parent=1 // loop_exit
      _
    %v411 = vld [vmem:[#allocation3] sm:$0xff]
    %v412 = vld [vmem:[#allocation3 + $0x8] sm:$0xff]
    %v413 = vld [vmem:[#allocation3 + $0x10] sm:$0xff]
    %v414 = vld [vmem:[#allocation3 + $0x18] sm:$0xff]
    %v415 = vpack.c.bf16 %v412, %v411
    %v416 = vpack.c.bf16 %v414, %v413
    %v417 = vld [vmem:[#allocation19] sm:$0xff]
    %v418 = vld [vmem:[#allocation19 + $0x8] sm:$0xff]
    %v419 = vld [vmem:[#allocation19 + $0x10] sm:$0xff]
    %v420 = vld [vmem:[#allocation19 + $0x18] sm:$0xff]
    %v421 = vld [vmem:[#allocation19 + $0x20] sm:$0xff]
    %v422 = vld [vmem:[#allocation19 + $0x28] sm:$0xff]
    %v423 = vld [vmem:[#allocation19 + $0x30] sm:$0xff]
    %v424 = vld [vmem:[#allocation19 + $0x38] sm:$0xff]
    %v433 = vunpack.c.l.b16 %v417
    %v434 = vunpack.c.h.b16 %v417
    %v435 = vunpack.c.l.b16 %v418
    %v436 = vunpack.c.h.b16 %v418
    %v437 = vunpack.c.l.b16 %v419
    %v438 = vunpack.c.h.b16 %v419
    %v439 = vunpack.c.l.b16 %v420
    %v440 = vunpack.c.h.b16 %v420
    %v441 = vunpack.c.l.b16 %v421
    %v442 = vunpack.c.h.b16 %v421
    %v443 = vunpack.c.l.b16 %v422
    %v444 = vunpack.c.h.b16 %v422
    %v445 = vunpack.c.l.b16 %v423
    %v446 = vunpack.c.h.b16 %v423
    %v447 = vunpack.c.l.b16 %v424
    %v448 = vunpack.c.h.b16 %v424
    %v449 = vpack.c.b16 %v435, %v433
    %v450 = vpack.c.b16 %v436, %v434
    %v451 = vpack.c.b16 %v439, %v437
    %v452 = vpack.c.b16 %v440, %v438
    %v453 = vpack.c.b16 %v443, %v441
    %v454 = vpack.c.b16 %v444, %v442
    %v455 = vpack.c.b16 %v447, %v445
    %v456 = vpack.c.b16 %v448, %v446
    %v466 = vsel %vm358, %v415, 0
    %v469 = vsel %vm358, %v416, 0
    %471 = vmatprep.subr.bf16.mxu0 %v450
    %472 = vmatpush1.bf16.msra.mxu0 %v449
    %473 = vmatprep.subr.bf16.mxu0 %v452
    %474 = vmatpush1.bf16.msra.mxu0 %v451
    %475 = vmatprep.subr.bf16.mxu0 %v454
    %476 = vmatpush1.bf16.msra.mxu0 %v453
    %477 = vmatprep.subr.bf16.mxu0 %v456
    %478 = vmatpush1.bf16.msra.mxu0 %v455
    %479 = vmatprep.subr.bf16.mxu0 0
    %480 = vmatpush1.bf16.msra.mxu0 0
    %481 = vmatprep.subr.bf16.mxu0 0
    %482 = vmatpush1.bf16.msra.mxu0 0
    %483 = vmatprep.subr.bf16.mxu0 0
    %484 = vmatpush1.bf16.msra.mxu0 0
    %485 = vmatprep.subr.bf16.mxu0 0
    %486 = vmatpush1.bf16.msra.mxu0 0
    %487 = vmatprep.subr.bf16.mxu0 0
    %488 = vmatpush1.bf16.msra.mxu0 0
    %489 = vmatprep.subr.bf16.mxu0 0
    %490 = vmatpush1.bf16.msra.mxu0 0
    %491 = vmatprep.subr.bf16.mxu0 0
    %492 = vmatpush1.bf16.msra.mxu0 0
    %493 = vmatprep.subr.bf16.mxu0 0
    %494 = vmatpush1.bf16.msra.mxu0 0
    %495 = vmatprep.subr.bf16.mxu0 0
    %496 = vmatpush1.bf16.msra.mxu0 0
    %497 = vmatprep.subr.bf16.mxu0 0
    %498 = vmatpush1.bf16.msra.mxu0 0
    %499 = vmatprep.subr.bf16.mxu0 0
    %500 = vmatpush1.bf16.msra.mxu0 0
    %501 = vmatprep.subr.bf16.mxu0 0
    %502 = vmatpush1.bf16.msra.mxu0 0
    %503 = vmatprep.mubr.bf16.mxu0 0
    %504 = vmatmul.mubr.bf16.gmra.mrb[0].mxu0 %v466
    %v505 = vpop.f32.mrb[0].mxu0
    %v506 = vadd.f32 0.0, %v505
    %v507 = vpop.f32.mrb[0].mxu0
    %v508 = vadd.f32 0.0, %v507
    %v509 = vpop.f32.mrb[0].mxu0
    %v510 = vadd.f32 0.0, %v509
    %v511 = vpop.f32.mrb[0].mxu0
    %v512 = vadd.f32 0.0, %v511
    %513 = vmatprep.mubr.bf16.mxu0 0
    %514 = vmatmul.mubr.bf16.gmra.mrb[0].mxu0 %v469
    %v515 = vpop.f32.mrb[0].mxu0
    %v516 = vadd.f32 0.0, %v515
    %v517 = vpop.f32.mrb[0].mxu0
    %v518 = vadd.f32 0.0, %v517
    %v519 = vpop.f32.mrb[0].mxu0
    %v520 = vadd.f32 0.0, %v519
    %v521 = vpop.f32.mrb[0].mxu0
    %v522 = vadd.f32 0.0, %v521
    %523 = vdwg.mxu0
    %v524 = vmul.f32 %v506, %v363
    %v525 = vmul.f32 %v508, %v364
    %v526 = vmul.f32 %v510, %v365
    %v527 = vmul.f32 %v512, %v366
    %v528 = vmul.f32 %v516, %v367
    %v529 = vmul.f32 %v518, %v368
    %v530 = vmul.f32 %v520, %v369
    %v531 = vmul.f32 %v522, %v370
    %v532 = vadd.f32 %v371, %v524
    %v533 = vadd.f32 %v372, %v526
    %v534 = vadd.f32 %v373, %v528
    %v535 = vadd.f32 %v374, %v530
    %540 = vrot.lane.b32.xlu0 %v524, 64
    %v541 = vpop.permute.xlu0 %540
    %542 = vrot.lane.b32.xlu0 %v526, 64
    %v543 = vpop.permute.xlu0 %542
    %544 = vrot.lane.b32.xlu0 %v528, 64
    %v545 = vpop.permute.xlu0 %544
    %546 = vrot.lane.b32.xlu0 %v530, 64
    %v547 = vpop.permute.xlu0 %546
    %v552 = vadd.f32 %v532, %v541
    %v553 = vadd.f32 %v533, %v543
    %v554 = vadd.f32 %v534, %v545
    %v555 = vadd.f32 %v535, %v547
    %v556 = vadd.f32 %v552, %v525
    %v557 = vadd.f32 %v553, %v527
    %v558 = vadd.f32 %v554, %v529
    %v559 = vadd.f32 %v555, %v531
    %564 = vrot.lane.b32.xlu0 %v525, 64
    %v565 = vpop.permute.xlu0 %564
    %566 = vrot.lane.b32.xlu0 %v527, 64
    %v567 = vpop.permute.xlu0 %566
    %568 = vrot.lane.b32.xlu0 %v529, 64
    %v569 = vpop.permute.xlu0 %568
    %570 = vrot.lane.b32.xlu0 %v531, 64
    %v571 = vpop.permute.xlu0 %570
    %v576 = vadd.f32 %v556, %v565
    %v577 = vadd.f32 %v557, %v567
    %v578 = vadd.f32 %v558, %v569
    %v579 = vadd.f32 %v559, %v571
    %v580 = vmax.f32 %v576, 0.0
    %v581 = vmax.f32 %v577, 0.0
    %v582 = vmax.f32 %v578, 0.0
    %v583 = vmax.f32 %v579, 0.0
    %584 = vst.msk [vmem:[#allocation3] sm:$0xff] %vm358, %v580
    %585 = vst.msk [vmem:[#allocation3 + $0x8] sm:$0xff] %vm358, %v581
    %586 = vst.msk [vmem:[#allocation3 + $0x10] sm:$0xff] %vm358, %v582
    %587 = vst.msk [vmem:[#allocation3 + $0x18] sm:$0xff] %vm358, %v583
    %588 = vst.msk [vmem:[#allocation4] sm:$0xff] %vm358, 0.0
    %589 = vst.msk [vmem:[#allocation4 + $0x8] sm:$0xff] %vm358, 0.0
    loop: start=0, step=1, limit=32
    $region137: #{tpu_custom_call.1} parent=1 // loop_pre_header
      _
    $region138: #{tpu_custom_call.1} parent=1 // loop_header
      %s591 = sphi 0, %s595
      %p592 = scmp.ge.s32.totalorder %s591, 32
    $region139: #{tpu_custom_call.1} parent=1 // loop_header_branch
      %594 = sbr.rel (%p592) target = $region143
    $region140: #{tpu_custom_call.1} parent=1 // loop_body
      %s596 = sld [smem:[#allocation10 + %s591]]
      %s597 = scalar_lea.vmem [#allocation4], %s596
      %v598 = vld [vmem:[%s597] sm:$0x1]
      %s599 = scalar_lea.vmem [#allocation3], %s591
      %v600 = vld [vmem:[%s599] sm:$0x1]
      %v601 = vadd.f32 %v598, %v600
      %vm602 = vcmask 516096
      %603 = vst.msk [vmem:[%s597] sm:$0x1] %vm602, %v601
    $region141: #{tpu_custom_call.1} parent=1 // loop_footer
      %s595 = sadd.s32 1, %s591
    $region142: #{tpu_custom_call.1} parent=1 // loop_footer_branch
      %590 = sbr.rel target = $region138
    $region143: #{tpu_custom_call.1} parent=1 // loop_exit
      _
    %v604 = vld [vmem:[#allocation2] sm:$0xff]
    %v605 = vld [vmem:[#allocation2 + $0x8] sm:$0xff]
    %v606 = vld [vmem:[#allocation4] sm:$0xff]
    %v607 = vld [vmem:[#allocation4 + $0x8] sm:$0xff]
    %v608 = vpack.c.bf16 %v607, %v606
    %v609 = vld [vmem:[#allocation21] sm:$0xff]
    %v610 = vld [vmem:[#allocation21 + $0x8] sm:$0xff]
    %v611 = vld [vmem:[#allocation21 + $0x10] sm:$0xff]
    %v612 = vld [vmem:[#allocation21 + $0x18] sm:$0xff]
    %v613 = vld [vmem:[#allocation21 + $0x20] sm:$0xff]
    %v614 = vld [vmem:[#allocation21 + $0x28] sm:$0xff]
    %v615 = vld [vmem:[#allocation21 + $0x30] sm:$0xff]
    %v616 = vld [vmem:[#allocation21 + $0x38] sm:$0xff]
    %v625 = vunpack.c.l.b16 %v609
    %v626 = vunpack.c.h.b16 %v609
    %v627 = vunpack.c.l.b16 %v610
    %v628 = vunpack.c.h.b16 %v610
    %v629 = vunpack.c.l.b16 %v611
    %v630 = vunpack.c.h.b16 %v611
    %v631 = vunpack.c.l.b16 %v612
    %v632 = vunpack.c.h.b16 %v612
    %v633 = vunpack.c.l.b16 %v613
    %v634 = vunpack.c.h.b16 %v613
    %v635 = vunpack.c.l.b16 %v614
    %v636 = vunpack.c.h.b16 %v614
    %v637 = vunpack.c.l.b16 %v615
    %v638 = vunpack.c.h.b16 %v615
    %v639 = vunpack.c.l.b16 %v616
    %v640 = vunpack.c.h.b16 %v616
    %v641 = vpack.c.b16 %v627, %v625
    %v642 = vpack.c.b16 %v628, %v626
    %v643 = vpack.c.b16 %v631, %v629
    %v644 = vpack.c.b16 %v632, %v630
    %v645 = vpack.c.b16 %v635, %v633
    %v646 = vpack.c.b16 %v636, %v634
    %v647 = vpack.c.b16 %v639, %v637
    %v648 = vpack.c.b16 %v640, %v638
    %v658 = vsel %vm358, %v608, 0
    %660 = vmatprep.subr.bf16.mxu0 %v642
    %661 = vmatpush1.bf16.msra.mxu0 %v641
    %662 = vmatprep.subr.bf16.mxu0 %v644
    %663 = vmatpush1.bf16.msra.mxu0 %v643
    %664 = vmatprep.subr.bf16.mxu0 %v646
    %665 = vmatpush1.bf16.msra.mxu0 %v645
    %666 = vmatprep.subr.bf16.mxu0 %v648
    %667 = vmatpush1.bf16.msra.mxu0 %v647
    %668 = vmatprep.subr.bf16.mxu0 0
    %669 = vmatpush1.bf16.msra.mxu0 0
    %670 = vmatprep.subr.bf16.mxu0 0
    %671 = vmatpush1.bf16.msra.mxu0 0
    %672 = vmatprep.subr.bf16.mxu0 0
    %673 = vmatpush1.bf16.msra.mxu0 0
    %674 = vmatprep.subr.bf16.mxu0 0
    %675 = vmatpush1.bf16.msra.mxu0 0
    %676 = vmatprep.subr.bf16.mxu0 0
    %677 = vmatpush1.bf16.msra.mxu0 0
    %678 = vmatprep.subr.bf16.mxu0 0
    %679 = vmatpush1.bf16.msra.mxu0 0
    %680 = vmatprep.subr.bf16.mxu0 0
    %681 = vmatpush1.bf16.msra.mxu0 0
    %682 = vmatprep.subr.bf16.mxu0 0
    %683 = vmatpush1.bf16.msra.mxu0 0
    %684 = vmatprep.subr.bf16.mxu0 0
    %685 = vmatpush1.bf16.msra.mxu0 0
    %686 = vmatprep.subr.bf16.mxu0 0
    %687 = vmatpush1.bf16.msra.mxu0 0
    %688 = vmatprep.subr.bf16.mxu0 0
    %689 = vmatpush1.bf16.msra.mxu0 0
    %690 = vmatprep.subr.bf16.mxu0 0
    %691 = vmatpush1.bf16.msra.mxu0 0
    %692 = vmatprep.mubr.bf16.mxu0 0
    %693 = vmatmul.mubr.bf16.gmra.mrb[0].mxu0 %v658
    %v694 = vpop.f32.mrb[0].mxu0
    %v695 = vadd.f32 %v380, %v694
    %v696 = vpop.f32.mrb[0].mxu0
    %v697 = vadd.f32 %v384, %v696
    %v698 = vpop.f32.mrb[0].mxu0
    %v699 = vadd.f32 %v380, %v698
    %v700 = vpop.f32.mrb[0].mxu0
    %v701 = vadd.f32 %v384, %v700
    %702 = vdwg.mxu0
    %v703 = vpack.c.bf16 %v605, %v604
    %v704 = vld [vmem:[#allocation22] sm:$0xff]
    %v705 = vld [vmem:[#allocation22 + $0x8] sm:$0xff]
    %v706 = vld [vmem:[#allocation22 + $0x10] sm:$0xff]
    %v707 = vld [vmem:[#allocation22 + $0x18] sm:$0xff]
    %v708 = vld [vmem:[#allocation22 + $0x20] sm:$0xff]
    %v709 = vld [vmem:[#allocation22 + $0x28] sm:$0xff]
    %v710 = vld [vmem:[#allocation22 + $0x30] sm:$0xff]
    %v711 = vld [vmem:[#allocation22 + $0x38] sm:$0xff]
    %v720 = vunpack.c.l.b16 %v704
    %v721 = vunpack.c.h.b16 %v704
    %v722 = vunpack.c.l.b16 %v705
    %v723 = vunpack.c.h.b16 %v705
    %v724 = vunpack.c.l.b16 %v706
    %v725 = vunpack.c.h.b16 %v706
    %v726 = vunpack.c.l.b16 %v707
    %v727 = vunpack.c.h.b16 %v707
    %v728 = vunpack.c.l.b16 %v708
    %v729 = vunpack.c.h.b16 %v708
    %v730 = vunpack.c.l.b16 %v709
    %v731 = vunpack.c.h.b16 %v709
    %v732 = vunpack.c.l.b16 %v710
    %v733 = vunpack.c.h.b16 %v710
    %v734 = vunpack.c.l.b16 %v711
    %v735 = vunpack.c.h.b16 %v711
    %v736 = vpack.c.b16 %v722, %v720
    %v737 = vpack.c.b16 %v723, %v721
    %v738 = vpack.c.b16 %v726, %v724
    %v739 = vpack.c.b16 %v727, %v725
    %v740 = vpack.c.b16 %v730, %v728
    %v741 = vpack.c.b16 %v731, %v729
    %v742 = vpack.c.b16 %v734, %v732
    %v743 = vpack.c.b16 %v735, %v733
    %v753 = vsel %vm358, %v703, 0
    %755 = vmatprep.subr.bf16.mxu0 %v737
    %756 = vmatpush1.bf16.msra.mxu0 %v736
    %757 = vmatprep.subr.bf16.mxu0 %v739
    %758 = vmatpush1.bf16.msra.mxu0 %v738
    %759 = vmatprep.subr.bf16.mxu0 %v741
    %760 = vmatpush1.bf16.msra.mxu0 %v740
    %761 = vmatprep.subr.bf16.mxu0 %v743
    %762 = vmatpush1.bf16.msra.mxu0 %v742
    %763 = vmatprep.subr.bf16.mxu0 0
    %764 = vmatpush1.bf16.msra.mxu0 0
    %765 = vmatprep.subr.bf16.mxu0 0
    %766 = vmatpush1.bf16.msra.mxu0 0
    %767 = vmatprep.subr.bf16.mxu0 0
    %768 = vmatpush1.bf16.msra.mxu0 0
    %769 = vmatprep.subr.bf16.mxu0 0
    %770 = vmatpush1.bf16.msra.mxu0 0
    %771 = vmatprep.subr.bf16.mxu0 0
    %772 = vmatpush1.bf16.msra.mxu0 0
    %773 = vmatprep.subr.bf16.mxu0 0
    %774 = vmatpush1.bf16.msra.mxu0 0
    %775 = vmatprep.subr.bf16.mxu0 0
    %776 = vmatpush1.bf16.msra.mxu0 0
    %777 = vmatprep.subr.bf16.mxu0 0
    %778 = vmatpush1.bf16.msra.mxu0 0
    %779 = vmatprep.subr.bf16.mxu0 0
    %780 = vmatpush1.bf16.msra.mxu0 0
    %781 = vmatprep.subr.bf16.mxu0 0
    %782 = vmatpush1.bf16.msra.mxu0 0
    %783 = vmatprep.subr.bf16.mxu0 0
    %784 = vmatpush1.bf16.msra.mxu0 0
    %785 = vmatprep.subr.bf16.mxu0 0
    %786 = vmatpush1.bf16.msra.mxu0 0
    %787 = vmatprep.mubr.bf16.mxu0 0
    %788 = vmatmul.mubr.bf16.gmra.mrb[0].mxu0 %v753
    %v789 = vpop.f32.mrb[0].mxu0
    %v790 = vadd.f32 %v392, %v789
    %v791 = vpop.f32.mrb[0].mxu0
    %v792 = vadd.f32 %v396, %v791
    %v793 = vpop.f32.mrb[0].mxu0
    %v794 = vadd.f32 %v392, %v793
    %v795 = vpop.f32.mrb[0].mxu0
    %v796 = vadd.f32 %v396, %v795
    %797 = vdwg.mxu0
    %v798 = vadd.f32 %v695, %v790
    %v799 = vadd.f32 %v699, %v794
    %v800 = vxor.u32 %v798, 2147483648
    %v801 = vxor.u32 %v799, 2147483648
    %v802 = vmul.f32 %v800, 1.442695
    %v803 = vpow.pop %v802
    %v804 = vmul.f32 %v801, 1.442695
    %v805 = vpow.pop %v804
    %v806 = vadd.f32 %v803, 1.0
    %v807 = vadd.f32 %v805, 1.0
    %v808 = vrcp.pop %v806
    %v809 = vmul.f32 1.0, %v808
    %v810 = vrcp.pop %v807
    %v811 = vmul.f32 1.0, %v810
    %v812 = vmul.f32 %v809, %v792
    %v813 = vmul.f32 %v811, %v796
    %v814 = vadd.f32 %v697, %v812
    %v815 = vadd.f32 %v701, %v813
    %v816 = vtanh.pop %v814
    %v817 = vtanh.pop %v815
    %v818 = vsub.f32 1.0, %v809
    %v819 = vsub.f32 1.0, %v811
    %822 = vrot.lane.b32.xlu0 %v816, 64
    %v823 = vpop.permute.xlu0 %822
    %824 = vrot.lane.b32.xlu0 %v817, 64
    %v825 = vpop.permute.xlu0 %824
    %v828 = vmul.f32 %v818, %v823
    %v829 = vmul.f32 %v819, %v825
    %832 = vrot.lane.b32.xlu0 %v604, 64
    %v833 = vpop.permute.xlu0 %832
    %834 = vrot.lane.b32.xlu0 %v605, 64
    %v835 = vpop.permute.xlu0 %834
    %v838 = vmul.f32 %v809, %v833
    %v839 = vmul.f32 %v811, %v835
    %v840 = vadd.f32 %v828, %v838
    %v841 = vadd.f32 %v829, %v839
    %844 = vrot.lane.b32.xlu0 %v840, 64
    %v845 = vpop.permute.xlu0 %844
    %846 = vrot.lane.b32.xlu0 %v841, 64
    %v847 = vpop.permute.xlu0 %846
    %850 = vst.msk [vmem:[#allocation2] sm:$0xff] %vm358, %v845
    %851 = vst.msk [vmem:[#allocation2 + $0x8] sm:$0xff] %vm358, %v847
    loop: start=0, step=1, limit=32
    $region144: #{tpu_custom_call.1} parent=1 // loop_pre_header
      _
    $region145: #{tpu_custom_call.1} parent=1 // loop_header
      %s853 = sphi 0, %s857
      %p854 = scmp.ge.s32.totalorder %s853, 32
    $region146: #{tpu_custom_call.1} parent=1 // loop_header_branch
      %856 = sbr.rel (%p854) target = $region150
    $region147: #{tpu_custom_call.1} parent=1 // loop_body
      %s858 = sld [smem:[#allocation6 + %s853]]
      %s859 = scalar_lea.vmem [#allocation2], %s858
      %v860 = vld [vmem:[%s859] sm:$0x1]
      %s861 = scalar_lea.vmem [#allocation3], %s853
      %vm862 = vcmask 516096
      %863 = vst.msk [vmem:[%s861] sm:$0x1] %vm862, %v860
    $region148: #{tpu_custom_call.1} parent=1 // loop_footer
      %s857 = sadd.s32 1, %s853
    $region149: #{tpu_custom_call.1} parent=1 // loop_footer_branch
      %852 = sbr.rel target = $region145
    $region150: #{tpu_custom_call.1} parent=1 // loop_exit
      _
    %v864 = vld [vmem:[#allocation3] sm:$0xff]
    %v865 = vld [vmem:[#allocation3 + $0x8] sm:$0xff]
    %v866 = vld [vmem:[#allocation3 + $0x10] sm:$0xff]
    %v867 = vld [vmem:[#allocation3 + $0x18] sm:$0xff]
    %v868 = vpack.c.bf16 %v865, %v864
    %v869 = vpack.c.bf16 %v867, %v866
    %v870 = vld [vmem:[#allocation19] sm:$0xff]
    %v871 = vld [vmem:[#allocation19 + $0x8] sm:$0xff]
    %v872 = vld [vmem:[#allocation19 + $0x10] sm:$0xff]
    %v873 = vld [vmem:[#allocation19 + $0x18] sm:$0xff]
    %v874 = vld [vmem:[#allocation19 + $0x20] sm:$0xff]
    %v875 = vld [vmem:[#allocation19 + $0x28] sm:$0xff]
    %v876 = vld [vmem:[#allocation19 + $0x30] sm:$0xff]
    %v877 = vld [vmem:[#allocation19 + $0x38] sm:$0xff]
    %v886 = vunpack.c.l.b16 %v870
    %v887 = vunpack.c.h.b16 %v870
    %v888 = vunpack.c.l.b16 %v871
    %v889 = vunpack.c.h.b16 %v871
    %v890 = vunpack.c.l.b16 %v872
    %v891 = vunpack.c.h.b16 %v872
    %v892 = vunpack.c.l.b16 %v873
    %v893 = vunpack.c.h.b16 %v873
    %v894 = vunpack.c.l.b16 %v874
    %v895 = vunpack.c.h.b16 %v874
    %v896 = vunpack.c.l.b16 %v875
    %v897 = vunpack.c.h.b16 %v875
    %v898 = vunpack.c.l.b16 %v876
    %v899 = vunpack.c.h.b16 %v876
    %v900 = vunpack.c.l.b16 %v877
    %v901 = vunpack.c.h.b16 %v877
    %v902 = vpack.c.b16 %v888, %v886
    %v903 = vpack.c.b16 %v889, %v887
    %v904 = vpack.c.b16 %v892, %v890
    %v905 = vpack.c.b16 %v893, %v891
    %v906 = vpack.c.b16 %v896, %v894
    %v907 = vpack.c.b16 %v897, %v895
    %v908 = vpack.c.b16 %v900, %v898
    %v909 = vpack.c.b16 %v901, %v899
    %v919 = vsel %vm358, %v868, 0
    %v922 = vsel %vm358, %v869, 0
    %924 = vmatprep.subr.bf16.mxu0 %v903
    %925 = vmatpush1.bf16.msra.mxu0 %v902
    %926 = vmatprep.subr.bf16.mxu0 %v905
    %927 = vmatpush1.bf16.msra.mxu0 %v904
    %928 = vmatprep.subr.bf16.mxu0 %v907
    %929 = vmatpush1.bf16.msra.mxu0 %v906
    %930 = vmatprep.subr.bf16.mxu0 %v909
    %931 = vmatpush1.bf16.msra.mxu0 %v908
    %932 = vmatprep.subr.bf16.mxu0 0
    %933 = vmatpush1.bf16.msra.mxu0 0
    %934 = vmatprep.subr.bf16.mxu0 0
    %935 = vmatpush1.bf16.msra.mxu0 0
    %936 = vmatprep.subr.bf16.mxu0 0
    %937 = vmatpush1.bf16.msra.mxu0 0
    %938 = vmatprep.subr.bf16.mxu0 0
    %939 = vmatpush1.bf16.msra.mxu0 0
    %940 = vmatprep.subr.bf16.mxu0 0
    %941 = vmatpush1.bf16.msra.mxu0 0
    %942 = vmatprep.subr.bf16.mxu0 0
    %943 = vmatpush1.bf16.msra.mxu0 0
    %944 = vmatprep.subr.bf16.mxu0 0
    %945 = vmatpush1.bf16.msra.mxu0 0
    %946 = vmatprep.subr.bf16.mxu0 0
    %947 = vmatpush1.bf16.msra.mxu0 0
    %948 = vmatprep.subr.bf16.mxu0 0
    %949 = vmatpush1.bf16.msra.mxu0 0
    %950 = vmatprep.subr.bf16.mxu0 0
    %951 = vmatpush1.bf16.msra.mxu0 0
    %952 = vmatprep.subr.bf16.mxu0 0
    %953 = vmatpush1.bf16.msra.mxu0 0
    %954 = vmatprep.subr.bf16.mxu0 0
    %955 = vmatpush1.bf16.msra.mxu0 0
    %956 = vmatprep.mubr.bf16.mxu0 0
    %957 = vmatmul.mubr.bf16.gmra.mrb[0].mxu0 %v919
    %v958 = vpop.f32.mrb[0].mxu0
    %v959 = vadd.f32 0.0, %v958
    %v960 = vpop.f32.mrb[0].mxu0
    %v961 = vadd.f32 0.0, %v960
    %v962 = vpop.f32.mrb[0].mxu0
    %v963 = vadd.f32 0.0, %v962
    %v964 = vpop.f32.mrb[0].mxu0
    %v965 = vadd.f32 0.0, %v964
    %966 = vmatprep.mubr.bf16.mxu0 0
    %967 = vmatmul.mubr.bf16.gmra.mrb[0].mxu0 %v922
    %v968 = vpop.f32.mrb[0].mxu0
    %v969 = vadd.f32 0.0, %v968
    %v970 = vpop.f32.mrb[0].mxu0
    %v971 = vadd.f32 0.0, %v970
    %v972 = vpop.f32.mrb[0].mxu0
    %v973 = vadd.f32 0.0, %v972
    %v974 = vpop.f32.mrb[0].mxu0
    %v975 = vadd.f32 0.0, %v974
    %976 = vdwg.mxu0
    %v977 = vmul.f32 %v959, %v363
    %v978 = vmul.f32 %v961, %v364
    %v979 = vmul.f32 %v963, %v365
    %v980 = vmul.f32 %v965, %v366
    %v981 = vmul.f32 %v969, %v367
    %v982 = vmul.f32 %v971, %v368
    %v983 = vmul.f32 %v973, %v369
    %v984 = vmul.f32 %v975, %v370
    %v985 = vadd.f32 %v371, %v977
    %v986 = vadd.f32 %v372, %v979
    %v987 = vadd.f32 %v373, %v981
    %v988 = vadd.f32 %v374, %v983
    %993 = vrot.lane.b32.xlu0 %v977, 64
    %v994 = vpop.permute.xlu0 %993
    %995 = vrot.lane.b32.xlu0 %v979, 64
    %v996 = vpop.permute.xlu0 %995
    %997 = vrot.lane.b32.xlu0 %v981, 64
    %v998 = vpop.permute.xlu0 %997
    %999 = vrot.lane.b32.xlu0 %v983, 64
    %v1000 = vpop.permute.xlu0 %999
    %v1005 = vadd.f32 %v985, %v994
    %v1006 = vadd.f32 %v986, %v996
    %v1007 = vadd.f32 %v987, %v998
    %v1008 = vadd.f32 %v988, %v1000
    %v1009 = vadd.f32 %v1005, %v978
    %v1010 = vadd.f32 %v1006, %v980
    %v1011 = vadd.f32 %v1007, %v982
    %v1012 = vadd.f32 %v1008, %v984
    %1017 = vrot.lane.b32.xlu0 %v978, 64
    %v1018 = vpop.permute.xlu0 %1017
    %1019 = vrot.lane.b32.xlu0 %v980, 64
    %v1020 = vpop.permute.xlu0 %1019
    %1021 = vrot.lane.b32.xlu0 %v982, 64
    %v1022 = vpop.permute.xlu0 %1021
    %1023 = vrot.lane.b32.xlu0 %v984, 64
    %v1024 = vpop.permute.xlu0 %1023
    %v1029 = vadd.f32 %v1009, %v1018
    %v1030 = vadd.f32 %v1010, %v1020
    %v1031 = vadd.f32 %v1011, %v1022
    %v1032 = vadd.f32 %v1012, %v1024
    %v1033 = vmax.f32 %v1029, 0.0
    %v1034 = vmax.f32 %v1030, 0.0
    %v1035 = vmax.f32 %v1031, 0.0
    %v1036 = vmax.f32 %v1032, 0.0
    %1037 = vst.msk [vmem:[#allocation3] sm:$0xff] %vm358, %v1033
    %1038 = vst.msk [vmem:[#allocation3 + $0x8] sm:$0xff] %vm358, %v1034
    %1039 = vst.msk [vmem:[#allocation3 + $0x10] sm:$0xff] %vm358, %v1035
    %1040 = vst.msk [vmem:[#allocation3 + $0x18] sm:$0xff] %vm358, %v1036
    %1041 = vst.msk [vmem:[#allocation4] sm:$0xff] %vm358, 0.0
    %1042 = vst.msk [vmem:[#allocation4 + $0x8] sm:$0xff] %vm358, 0.0
    loop: start=0, step=1, limit=32
    $region151: #{tpu_custom_call.1} parent=1 // loop_pre_header
      _
    $region152: #{tpu_custom_call.1} parent=1 // loop_header
      %s1044 = sphi 0, %s1048
      %p1045 = scmp.ge.s32.totalorder %s1044, 32
    $region153: #{tpu_custom_call.1} parent=1 // loop_header_branch
      %1047 = sbr.rel (%p1045) target = $region157
    $region154: #{tpu_custom_call.1} parent=1 // loop_body
      %s1049 = sld [smem:[#allocation10 + %s1044]]
      %s1050 = scalar_lea.vmem [#allocation4], %s1049
      %v1051 = vld [vmem:[%s1050] sm:$0x1]
      %s1052 = scalar_lea.vmem [#allocation3], %s1044
      %v1053 = vld [vmem:[%s1052] sm:$0x1]
      %v1054 = vadd.f32 %v1051, %v1053
      %vm1055 = vcmask 516096
      %1056 = vst.msk [vmem:[%s1050] sm:$0x1] %vm1055, %v1054
    $region155: #{tpu_custom_call.1} parent=1 // loop_footer
      %s1048 = sadd.s32 1, %s1044
    $region156: #{tpu_custom_call.1} parent=1 // loop_footer_branch
      %1043 = sbr.rel target = $region152
    $region157: #{tpu_custom_call.1} parent=1 // loop_exit
      _
    %v1057 = vld [vmem:[#allocation2] sm:$0xff]
    %v1058 = vld [vmem:[#allocation2 + $0x8] sm:$0xff]
    %v1059 = vld [vmem:[#allocation4] sm:$0xff]
    %v1060 = vld [vmem:[#allocation4 + $0x8] sm:$0xff]
    %v1061 = vpack.c.bf16 %v1060, %v1059
    %v1062 = vld [vmem:[#allocation21] sm:$0xff]
    %v1063 = vld [vmem:[#allocation21 + $0x8] sm:$0xff]
    %v1064 = vld [vmem:[#allocation21 + $0x10] sm:$0xff]
    %v1065 = vld [vmem:[#allocation21 + $0x18] sm:$0xff]
    %v1066 = vld [vmem:[#allocation21 + $0x20] sm:$0xff]
    %v1067 = vld [vmem:[#allocation21 + $0x28] sm:$0xff]
    %v1068 = vld [vmem:[#allocation21 + $0x30] sm:$0xff]
    %v1069 = vld [vmem:[#allocation21 + $0x38] sm:$0xff]
    %v1078 = vunpack.c.l.b16 %v1062
    %v1079 = vunpack.c.h.b16 %v1062
    %v1080 = vunpack.c.l.b16 %v1063
    %v1081 = vunpack.c.h.b16 %v1063
    %v1082 = vunpack.c.l.b16 %v1064
    %v1083 = vunpack.c.h.b16 %v1064
    %v1084 = vunpack.c.l.b16 %v1065
    %v1085 = vunpack.c.h.b16 %v1065
    %v1086 = vunpack.c.l.b16 %v1066
    %v1087 = vunpack.c.h.b16 %v1066
    %v1088 = vunpack.c.l.b16 %v1067
    %v1089 = vunpack.c.h.b16 %v1067
    %v1090 = vunpack.c.l.b16 %v1068
    %v1091 = vunpack.c.h.b16 %v1068
    %v1092 = vunpack.c.l.b16 %v1069
    %v1093 = vunpack.c.h.b16 %v1069
    %v1094 = vpack.c.b16 %v1080, %v1078
    %v1095 = vpack.c.b16 %v1081, %v1079
    %v1096 = vpack.c.b16 %v1084, %v1082
    %v1097 = vpack.c.b16 %v1085, %v1083
    %v1098 = vpack.c.b16 %v1088, %v1086
    %v1099 = vpack.c.b16 %v1089, %v1087
    %v1100 = vpack.c.b16 %v1092, %v1090
    %v1101 = vpack.c.b16 %v1093, %v1091
    %v1111 = vsel %vm358, %v1061, 0
    %1113 = vmatprep.subr.bf16.mxu0 %v1095
    %1114 = vmatpush1.bf16.msra.mxu0 %v1094
    %1115 = vmatprep.subr.bf16.mxu0 %v1097
    %1116 = vmatpush1.bf16.msra.mxu0 %v1096
    %1117 = vmatprep.subr.bf16.mxu0 %v1099
    %1118 = vmatpush1.bf16.msra.mxu0 %v1098
    %1119 = vmatprep.subr.bf16.mxu0 %v1101
    %1120 = vmatpush1.bf16.msra.mxu0 %v1100
    %1121 = vmatprep.subr.bf16.mxu0 0
    %1122 = vmatpush1.bf16.msra.mxu0 0
    %1123 = vmatprep.subr.bf16.mxu0 0
    %1124 = vmatpush1.bf16.msra.mxu0 0
    %1125 = vmatprep.subr.bf16.mxu0 0
    %1126 = vmatpush1.bf16.msra.mxu0 0
    %1127 = vmatprep.subr.bf16.mxu0 0
    %1128 = vmatpush1.bf16.msra.mxu0 0
    %1129 = vmatprep.subr.bf16.mxu0 0
    %1130 = vmatpush1.bf16.msra.mxu0 0
    %1131 = vmatprep.subr.bf16.mxu0 0
    %1132 = vmatpush1.bf16.msra.mxu0 0
    %1133 = vmatprep.subr.bf16.mxu0 0
    %1134 = vmatpush1.bf16.msra.mxu0 0
    %1135 = vmatprep.subr.bf16.mxu0 0
    %1136 = vmatpush1.bf16.msra.mxu0 0
    %1137 = vmatprep.subr.bf16.mxu0 0
    %1138 = vmatpush1.bf16.msra.mxu0 0
    %1139 = vmatprep.subr.bf16.mxu0 0
    %1140 = vmatpush1.bf16.msra.mxu0 0
    %1141 = vmatprep.subr.bf16.mxu0 0
    %1142 = vmatpush1.bf16.msra.mxu0 0
    %1143 = vmatprep.subr.bf16.mxu0 0
    %1144 = vmatpush1.bf16.msra.mxu0 0
    %1145 = vmatprep.mubr.bf16.mxu0 0
    %1146 = vmatmul.mubr.bf16.gmra.mrb[0].mxu0 %v1111
    %v1147 = vpop.f32.mrb[0].mxu0
    %v1148 = vadd.f32 %v380, %v1147
    %v1149 = vpop.f32.mrb[0].mxu0
    %v1150 = vadd.f32 %v384, %v1149
    %v1151 = vpop.f32.mrb[0].mxu0
    %v1152 = vadd.f32 %v380, %v1151
    %v1153 = vpop.f32.mrb[0].mxu0
    %v1154 = vadd.f32 %v384, %v1153
    %1155 = vdwg.mxu0
    %v1156 = vpack.c.bf16 %v1058, %v1057
    %v1157 = vld [vmem:[#allocation22] sm:$0xff]
    %v1158 = vld [vmem:[#allocation22 + $0x8] sm:$0xff]
    %v1159 = vld [vmem:[#allocation22 + $0x10] sm:$0xff]
    %v1160 = vld [vmem:[#allocation22 + $0x18] sm:$0xff]
    %v1161 = vld [vmem:[#allocation22 + $0x20] sm:$0xff]
    %v1162 = vld [vmem:[#allocation22 + $0x28] sm:$0xff]
    %v1163 = vld [vmem:[#allocation22 + $0x30] sm:$0xff]
    %v1164 = vld [vmem:[#allocation22 + $0x38] sm:$0xff]
    %v1173 = vunpack.c.l.b16 %v1157
    %v1174 = vunpack.c.h.b16 %v1157
    %v1175 = vunpack.c.l.b16 %v1158
    %v1176 = vunpack.c.h.b16 %v1158
    %v1177 = vunpack.c.l.b16 %v1159
    %v1178 = vunpack.c.h.b16 %v1159
    %v1179 = vunpack.c.l.b16 %v1160
    %v1180 = vunpack.c.h.b16 %v1160
    %v1181 = vunpack.c.l.b16 %v1161
    %v1182 = vunpack.c.h.b16 %v1161
    %v1183 = vunpack.c.l.b16 %v1162
    %v1184 = vunpack.c.h.b16 %v1162
    %v1185 = vunpack.c.l.b16 %v1163
    %v1186 = vunpack.c.h.b16 %v1163
    %v1187 = vunpack.c.l.b16 %v1164
    %v1188 = vunpack.c.h.b16 %v1164
    %v1189 = vpack.c.b16 %v1175, %v1173
    %v1190 = vpack.c.b16 %v1176, %v1174
    %v1191 = vpack.c.b16 %v1179, %v1177
    %v1192 = vpack.c.b16 %v1180, %v1178
    %v1193 = vpack.c.b16 %v1183, %v1181
    %v1194 = vpack.c.b16 %v1184, %v1182
    %v1195 = vpack.c.b16 %v1187, %v1185
    %v1196 = vpack.c.b16 %v1188, %v1186
    %v1206 = vsel %vm358, %v1156, 0
    %1208 = vmatprep.subr.bf16.mxu0 %v1190
    %1209 = vmatpush1.bf16.msra.mxu0 %v1189
    %1210 = vmatprep.subr.bf16.mxu0 %v1192
    %1211 = vmatpush1.bf16.msra.mxu0 %v1191
    %1212 = vmatprep.subr.bf16.mxu0 %v1194
    %1213 = vmatpush1.bf16.msra.mxu0 %v1193
    %1214 = vmatprep.subr.bf16.mxu0 %v1196
    %1215 = vmatpush1.bf16.msra.mxu0 %v1195
    %1216 = vmatprep.subr.bf16.mxu0 0
    %1217 = vmatpush1.bf16.msra.mxu0 0
    %1218 = vmatprep.subr.bf16.mxu0 0
    %1219 = vmatpush1.bf16.msra.mxu0 0
    %1220 = vmatprep.subr.bf16.mxu0 0
    %1221 = vmatpush1.bf16.msra.mxu0 0
    %1222 = vmatprep.subr.bf16.mxu0 0
    %1223 = vmatpush1.bf16.msra.mxu0 0
    %1224 = vmatprep.subr.bf16.mxu0 0
    %1225 = vmatpush1.bf16.msra.mxu0 0
    %1226 = vmatprep.subr.bf16.mxu0 0
    %1227 = vmatpush1.bf16.msra.mxu0 0
    %1228 = vmatprep.subr.bf16.mxu0 0
    %1229 = vmatpush1.bf16.msra.mxu0 0
    %1230 = vmatprep.subr.bf16.mxu0 0
    %1231 = vmatpush1.bf16.msra.mxu0 0
    %1232 = vmatprep.subr.bf16.mxu0 0
    %1233 = vmatpush1.bf16.msra.mxu0 0
    %1234 = vmatprep.subr.bf16.mxu0 0
    %1235 = vmatpush1.bf16.msra.mxu0 0
    %1236 = vmatprep.subr.bf16.mxu0 0
    %1237 = vmatpush1.bf16.msra.mxu0 0
    %1238 = vmatprep.subr.bf16.mxu0 0
    %1239 = vmatpush1.bf16.msra.mxu0 0
    %1240 = vmatprep.mubr.bf16.mxu0 0
    %1241 = vmatmul.mubr.bf16.gmra.mrb[0].mxu0 %v1206
    %v1242 = vpop.f32.mrb[0].mxu0
    %v1243 = vadd.f32 %v392, %v1242
    %v1244 = vpop.f32.mrb[0].mxu0
    %v1245 = vadd.f32 %v396, %v1244
    %v1246 = vpop.f32.mrb[0].mxu0
    %v1247 = vadd.f32 %v392, %v1246
    %v1248 = vpop.f32.mrb[0].mxu0
    %v1249 = vadd.f32 %v396, %v1248
    %1250 = vdwg.mxu0
    %v1251 = vadd.f32 %v1148, %v1243
    %v1252 = vadd.f32 %v1152, %v1247
    %v1253 = vxor.u32 %v1251, 2147483648
    %v1254 = vxor.u32 %v1252, 2147483648
    %v1255 = vmul.f32 %v1253, 1.442695
    %v1256 = vpow.pop %v1255
    %v1257 = vmul.f32 %v1254, 1.442695
    %v1258 = vpow.pop %v1257
    %v1259 = vadd.f32 %v1256, 1.0
    %v1260 = vadd.f32 %v1258, 1.0
    %v1261 = vrcp.pop %v1259
    %v1262 = vmul.f32 1.0, %v1261
    %v1263 = vrcp.pop %v1260
    %v1264 = vmul.f32 1.0, %v1263
    %v1265 = vmul.f32 %v1262, %v1245
    %v1266 = vmul.f32 %v1264, %v1249
    %v1267 = vadd.f32 %v1150, %v1265
    %v1268 = vadd.f32 %v1154, %v1266
    %v1269 = vtanh.pop %v1267
    %v1270 = vtanh.pop %v1268
    %v1271 = vsub.f32 1.0, %v1262
    %v1272 = vsub.f32 1.0, %v1264
    %1275 = vrot.lane.b32.xlu0 %v1269, 64
    %v1276 = vpop.permute.xlu0 %1275
    %1277 = vrot.lane.b32.xlu0 %v1270, 64
    %v1278 = vpop.permute.xlu0 %1277
    %v1281 = vmul.f32 %v1271, %v1276
    %v1282 = vmul.f32 %v1272, %v1278
    %1285 = vrot.lane.b32.xlu0 %v1057, 64
    %v1286 = vpop.permute.xlu0 %1285
    %1287 = vrot.lane.b32.xlu0 %v1058, 64
    %v1288 = vpop.permute.xlu0 %1287
    %v1291 = vmul.f32 %v1262, %v1286
    %v1292 = vmul.f32 %v1264, %v1288
    %v1293 = vadd.f32 %v1281, %v1291
    %v1294 = vadd.f32 %v1282, %v1292
    %1297 = vrot.lane.b32.xlu0 %v1293, 64
    %v1298 = vpop.permute.xlu0 %1297
    %1299 = vrot.lane.b32.xlu0 %v1294, 64
    %v1300 = vpop.permute.xlu0 %1299
    %1303 = vst.msk [vmem:[#allocation2] sm:$0xff] %vm358, %v1298
    %1304 = vst.msk [vmem:[#allocation2 + $0x8] sm:$0xff] %vm358, %v1300
    loop: start=0, step=1, limit=32
    $region158: #{tpu_custom_call.1} parent=1 // loop_pre_header
      _
    $region159: #{tpu_custom_call.1} parent=1 // loop_header
      %s1306 = sphi 0, %s1310
      %p1307 = scmp.ge.s32.totalorder %s1306, 32
    $region160: #{tpu_custom_call.1} parent=1 // loop_header_branch
      %1309 = sbr.rel (%p1307) target = $region164
    $region161: #{tpu_custom_call.1} parent=1 // loop_body
      %s1311 = sld [smem:[#allocation6 + %s1306]]
      %s1312 = scalar_lea.vmem [#allocation2], %s1311
      %v1313 = vld [vmem:[%s1312] sm:$0x1]
      %s1314 = scalar_lea.vmem [#allocation3], %s1306
      %vm1315 = vcmask 516096
      %1316 = vst.msk [vmem:[%s1314] sm:$0x1] %vm1315, %v1313
    $region162: #{tpu_custom_call.1} parent=1 // loop_footer
      %s1310 = sadd.s32 1, %s1306
    $region163: #{tpu_custom_call.1} parent=1 // loop_footer_branch
      %1305 = sbr.rel target = $region159
    $region164: #{tpu_custom_call.1} parent=1 // loop_exit
      _
    %v1317 = vld [vmem:[#allocation3] sm:$0xff]
    %v1318 = vld [vmem:[#allocation3 + $0x8] sm:$0xff]
    %v1319 = vld [vmem:[#allocation3 + $0x10] sm:$0xff]
    %v1320 = vld [vmem:[#allocation3 + $0x18] sm:$0xff]
    %v1321 = vpack.c.bf16 %v1318, %v1317
    %v1322 = vpack.c.bf16 %v1320, %v1319
    %v1323 = vld [vmem:[#allocation19] sm:$0xff]
    %v1324 = vld [vmem:[#allocation19 + $0x8] sm:$0xff]
    %v1325 = vld [vmem:[#allocation19 + $0x10] sm:$0xff]
    %v1326 = vld [vmem:[#allocation19 + $0x18] sm:$0xff]
    %v1327 = vld [vmem:[#allocation19 + $0x20] sm:$0xff]
    %v1328 = vld [vmem:[#allocation19 + $0x28] sm:$0xff]
    %v1329 = vld [vmem:[#allocation19 + $0x30] sm:$0xff]
    %v1330 = vld [vmem:[#allocation19 + $0x38] sm:$0xff]
    %v1339 = vunpack.c.l.b16 %v1323
    %v1340 = vunpack.c.h.b16 %v1323
    %v1341 = vunpack.c.l.b16 %v1324
    %v1342 = vunpack.c.h.b16 %v1324
    %v1343 = vunpack.c.l.b16 %v1325
    %v1344 = vunpack.c.h.b16 %v1325
    %v1345 = vunpack.c.l.b16 %v1326
    %v1346 = vunpack.c.h.b16 %v1326
    %v1347 = vunpack.c.l.b16 %v1327
    %v1348 = vunpack.c.h.b16 %v1327
    %v1349 = vunpack.c.l.b16 %v1328
    %v1350 = vunpack.c.h.b16 %v1328
    %v1351 = vunpack.c.l.b16 %v1329
    %v1352 = vunpack.c.h.b16 %v1329
    %v1353 = vunpack.c.l.b16 %v1330
    %v1354 = vunpack.c.h.b16 %v1330
    %v1355 = vpack.c.b16 %v1341, %v1339
    %v1356 = vpack.c.b16 %v1342, %v1340
    %v1357 = vpack.c.b16 %v1345, %v1343
    %v1358 = vpack.c.b16 %v1346, %v1344
    %v1359 = vpack.c.b16 %v1349, %v1347
    %v1360 = vpack.c.b16 %v1350, %v1348
    %v1361 = vpack.c.b16 %v1353, %v1351
    %v1362 = vpack.c.b16 %v1354, %v1352
    %v1372 = vsel %vm358, %v1321, 0
    %v1375 = vsel %vm358, %v1322, 0
    %1377 = vmatprep.subr.bf16.mxu0 %v1356
    %1378 = vmatpush1.bf16.msra.mxu0 %v1355
    %1379 = vmatprep.subr.bf16.mxu0 %v1358
    %1380 = vmatpush1.bf16.msra.mxu0 %v1357
    %1381 = vmatprep.subr.bf16.mxu0 %v1360
    %1382 = vmatpush1.bf16.msra.mxu0 %v1359
    %1383 = vmatprep.subr.bf16.mxu0 %v1362
    %1384 = vmatpush1.bf16.msra.mxu0 %v1361
    %1385 = vmatprep.subr.bf16.mxu0 0
    %1386 = vmatpush1.bf16.msra.mxu0 0
    %1387 = vmatprep.subr.bf16.mxu0 0
    %1388 = vmatpush1.bf16.msra.mxu0 0
    %1389 = vmatprep.subr.bf16.mxu0 0
    %1390 = vmatpush1.bf16.msra.mxu0 0
    %1391 = vmatprep.subr.bf16.mxu0 0
    %1392 = vmatpush1.bf16.msra.mxu0 0
    %1393 = vmatprep.subr.bf16.mxu0 0
    %1394 = vmatpush1.bf16.msra.mxu0 0
    %1395 = vmatprep.subr.bf16.mxu0 0
    %1396 = vmatpush1.bf16.msra.mxu0 0
    %1397 = vmatprep.subr.bf16.mxu0 0
    %1398 = vmatpush1.bf16.msra.mxu0 0
    %1399 = vmatprep.subr.bf16.mxu0 0
    %1400 = vmatpush1.bf16.msra.mxu0 0
    %1401 = vmatprep.subr.bf16.mxu0 0
    %1402 = vmatpush1.bf16.msra.mxu0 0
    %1403 = vmatprep.subr.bf16.mxu0 0
    %1404 = vmatpush1.bf16.msra.mxu0 0
    %1405 = vmatprep.subr.bf16.mxu0 0
    %1406 = vmatpush1.bf16.msra.mxu0 0
    %1407 = vmatprep.subr.bf16.mxu0 0
    %1408 = vmatpush1.bf16.msra.mxu0 0
    %1409 = vmatprep.mubr.bf16.mxu0 0
    %1410 = vmatmul.mubr.bf16.gmra.mrb[0].mxu0 %v1372
    %v1411 = vpop.f32.mrb[0].mxu0
    %v1412 = vadd.f32 0.0, %v1411
    %v1413 = vpop.f32.mrb[0].mxu0
    %v1414 = vadd.f32 0.0, %v1413
    %v1415 = vpop.f32.mrb[0].mxu0
    %v1416 = vadd.f32 0.0, %v1415
    %v1417 = vpop.f32.mrb[0].mxu0
    %v1418 = vadd.f32 0.0, %v1417
    %1419 = vmatprep.mubr.bf16.mxu0 0
    %1420 = vmatmul.mubr.bf16.gmra.mrb[0].mxu0 %v1375
    %v1421 = vpop.f32.mrb[0].mxu0
    %v1422 = vadd.f32 0.0, %v1421
    %v1423 = vpop.f32.mrb[0].mxu0
    %v1424 = vadd.f32 0.0, %v1423
    %v1425 = vpop.f32.mrb[0].mxu0
    %v1426 = vadd.f32 0.0, %v1425
    %v1427 = vpop.f32.mrb[0].mxu0
    %v1428 = vadd.f32 0.0, %v1427
    %1429 = vdwg.mxu0
    %v1430 = vmul.f32 %v1412, %v363
    %v1431 = vmul.f32 %v1414, %v364
    %v1432 = vmul.f32 %v1416, %v365
    %v1433 = vmul.f32 %v1418, %v366
    %v1434 = vmul.f32 %v1422, %v367
    %v1435 = vmul.f32 %v1424, %v368
    %v1436 = vmul.f32 %v1426, %v369
    %v1437 = vmul.f32 %v1428, %v370
    %v1438 = vadd.f32 %v371, %v1430
    %v1439 = vadd.f32 %v372, %v1432
    %v1440 = vadd.f32 %v373, %v1434
    %v1441 = vadd.f32 %v374, %v1436
    %1446 = vrot.lane.b32.xlu0 %v1430, 64
    %v1447 = vpop.permute.xlu0 %1446
    %1448 = vrot.lane.b32.xlu0 %v1432, 64
    %v1449 = vpop.permute.xlu0 %1448
    %1450 = vrot.lane.b32.xlu0 %v1434, 64
    %v1451 = vpop.permute.xlu0 %1450
    %1452 = vrot.lane.b32.xlu0 %v1436, 64
    %v1453 = vpop.permute.xlu0 %1452
    %v1458 = vadd.f32 %v1438, %v1447
    %v1459 = vadd.f32 %v1439, %v1449
    %v1460 = vadd.f32 %v1440, %v1451
    %v1461 = vadd.f32 %v1441, %v1453
    %v1462 = vadd.f32 %v1458, %v1431
    %v1463 = vadd.f32 %v1459, %v1433
    %v1464 = vadd.f32 %v1460, %v1435
    %v1465 = vadd.f32 %v1461, %v1437
    %1470 = vrot.lane.b32.xlu0 %v1431, 64
    %v1471 = vpop.permute.xlu0 %1470
    %1472 = vrot.lane.b32.xlu0 %v1433, 64
    %v1473 = vpop.permute.xlu0 %1472
    %1474 = vrot.lane.b32.xlu0 %v1435, 64
    %v1475 = vpop.permute.xlu0 %1474
    %1476 = vrot.lane.b32.xlu0 %v1437, 64
    %v1477 = vpop.permute.xlu0 %1476
    %v1482 = vadd.f32 %v1462, %v1471
    %v1483 = vadd.f32 %v1463, %v1473
    %v1484 = vadd.f32 %v1464, %v1475
    %v1485 = vadd.f32 %v1465, %v1477
    %v1486 = vmax.f32 %v1482, 0.0
    %v1487 = vmax.f32 %v1483, 0.0
    %v1488 = vmax.f32 %v1484, 0.0
    %v1489 = vmax.f32 %v1485, 0.0
    %1490 = vst.msk [vmem:[#allocation3] sm:$0xff] %vm358, %v1486
    %1491 = vst.msk [vmem:[#allocation3 + $0x8] sm:$0xff] %vm358, %v1487
    %1492 = vst.msk [vmem:[#allocation3 + $0x10] sm:$0xff] %vm358, %v1488
    %1493 = vst.msk [vmem:[#allocation3 + $0x18] sm:$0xff] %vm358, %v1489
    %1494 = vst.msk [vmem:[#allocation4] sm:$0xff] %vm358, 0.0
    %1495 = vst.msk [vmem:[#allocation4 + $0x8] sm:$0xff] %vm358, 0.0
    loop: start=0, step=1, limit=32
    $region165: #{tpu_custom_call.1} parent=1 // loop_pre_header
      _
    $region166: #{tpu_custom_call.1} parent=1 // loop_header
      %s1497 = sphi 0, %s1501
      %p1498 = scmp.ge.s32.totalorder %s1497, 32
    $region167: #{tpu_custom_call.1} parent=1 // loop_header_branch
      %1500 = sbr.rel (%p1498) target = $region171
    $region168: #{tpu_custom_call.1} parent=1 // loop_body
      %s1502 = sld [smem:[#allocation10 + %s1497]]
      %s1503 = scalar_lea.vmem [#allocation4], %s1502
      %v1504 = vld [vmem:[%s1503] sm:$0x1]
      %s1505 = scalar_lea.vmem [#allocation3], %s1497
      %v1506 = vld [vmem:[%s1505] sm:$0x1]
      %v1507 = vadd.f32 %v1504, %v1506
      %vm1508 = vcmask 516096
      %1509 = vst.msk [vmem:[%s1503] sm:$0x1] %vm1508, %v1507
    $region169: #{tpu_custom_call.1} parent=1 // loop_footer
      %s1501 = sadd.s32 1, %s1497
    $region170: #{tpu_custom_call.1} parent=1 // loop_footer_branch
      %1496 = sbr.rel target = $region166
    $region171: #{tpu_custom_call.1} parent=1 // loop_exit
      _
    %v1510 = vld [vmem:[#allocation2] sm:$0xff]
    %v1511 = vld [vmem:[#allocation2 + $0x8] sm:$0xff]
    %v1512 = vld [vmem:[#allocation4] sm:$0xff]
    %v1513 = vld [vmem:[#allocation4 + $0x8] sm:$0xff]
    %v1514 = vpack.c.bf16 %v1513, %v1512
    %v1515 = vld [vmem:[#allocation21] sm:$0xff]
    %v1516 = vld [vmem:[#allocation21 + $0x8] sm:$0xff]
    %v1517 = vld [vmem:[#allocation21 + $0x10] sm:$0xff]
    %v1518 = vld [vmem:[#allocation21 + $0x18] sm:$0xff]
    %v1519 = vld [vmem:[#allocation21 + $0x20] sm:$0xff]
    %v1520 = vld [vmem:[#allocation21 + $0x28] sm:$0xff]
    %v1521 = vld [vmem:[#allocation21 + $0x30] sm:$0xff]
    %v1522 = vld [vmem:[#allocation21 + $0x38] sm:$0xff]
    %v1531 = vunpack.c.l.b16 %v1515
    %v1532 = vunpack.c.h.b16 %v1515
    %v1533 = vunpack.c.l.b16 %v1516
    %v1534 = vunpack.c.h.b16 %v1516
    %v1535 = vunpack.c.l.b16 %v1517
    %v1536 = vunpack.c.h.b16 %v1517
    %v1537 = vunpack.c.l.b16 %v1518
    %v1538 = vunpack.c.h.b16 %v1518
    %v1539 = vunpack.c.l.b16 %v1519
    %v1540 = vunpack.c.h.b16 %v1519
    %v1541 = vunpack.c.l.b16 %v1520
    %v1542 = vunpack.c.h.b16 %v1520
    %v1543 = vunpack.c.l.b16 %v1521
    %v1544 = vunpack.c.h.b16 %v1521
    %v1545 = vunpack.c.l.b16 %v1522
    %v1546 = vunpack.c.h.b16 %v1522
    %v1547 = vpack.c.b16 %v1533, %v1531
    %v1548 = vpack.c.b16 %v1534, %v1532
    %v1549 = vpack.c.b16 %v1537, %v1535
    %v1550 = vpack.c.b16 %v1538, %v1536
    %v1551 = vpack.c.b16 %v1541, %v1539
    %v1552 = vpack.c.b16 %v1542, %v1540
    %v1553 = vpack.c.b16 %v1545, %v1543
    %v1554 = vpack.c.b16 %v1546, %v1544
    %v1564 = vsel %vm358, %v1514, 0
    %1566 = vmatprep.subr.bf16.mxu0 %v1548
    %1567 = vmatpush1.bf16.msra.mxu0 %v1547
    %1568 = vmatprep.subr.bf16.mxu0 %v1550
    %1569 = vmatpush1.bf16.msra.mxu0 %v1549
    %1570 = vmatprep.subr.bf16.mxu0 %v1552
    %1571 = vmatpush1.bf16.msra.mxu0 %v1551
    %1572 = vmatprep.subr.bf16.mxu0 %v1554
    %1573 = vmatpush1.bf16.msra.mxu0 %v1553
    %1574 = vmatprep.subr.bf16.mxu0 0
    %1575 = vmatpush1.bf16.msra.mxu0 0
    %1576 = vmatprep.subr.bf16.mxu0 0
    %1577 = vmatpush1.bf16.msra.mxu0 0
    %1578 = vmatprep.subr.bf16.mxu0 0
    %1579 = vmatpush1.bf16.msra.mxu0 0
    %1580 = vmatprep.subr.bf16.mxu0 0
    %1581 = vmatpush1.bf16.msra.mxu0 0
    %1582 = vmatprep.subr.bf16.mxu0 0
    %1583 = vmatpush1.bf16.msra.mxu0 0
    %1584 = vmatprep.subr.bf16.mxu0 0
    %1585 = vmatpush1.bf16.msra.mxu0 0
    %1586 = vmatprep.subr.bf16.mxu0 0
    %1587 = vmatpush1.bf16.msra.mxu0 0
    %1588 = vmatprep.subr.bf16.mxu0 0
    %1589 = vmatpush1.bf16.msra.mxu0 0
    %1590 = vmatprep.subr.bf16.mxu0 0
    %1591 = vmatpush1.bf16.msra.mxu0 0
    %1592 = vmatprep.subr.bf16.mxu0 0
    %1593 = vmatpush1.bf16.msra.mxu0 0
    %1594 = vmatprep.subr.bf16.mxu0 0
    %1595 = vmatpush1.bf16.msra.mxu0 0
    %1596 = vmatprep.subr.bf16.mxu0 0
    %1597 = vmatpush1.bf16.msra.mxu0 0
    %1598 = vmatprep.mubr.bf16.mxu0 0
    %1599 = vmatmul.mubr.bf16.gmra.mrb[0].mxu0 %v1564
    %v1600 = vpop.f32.mrb[0].mxu0
    %v1601 = vadd.f32 %v380, %v1600
    %v1602 = vpop.f32.mrb[0].mxu0
    %v1603 = vadd.f32 %v384, %v1602
    %v1604 = vpop.f32.mrb[0].mxu0
    %v1605 = vadd.f32 %v380, %v1604
    %v1606 = vpop.f32.mrb[0].mxu0
    %v1607 = vadd.f32 %v384, %v1606
    %1608 = vdwg.mxu0
    %v1609 = vpack.c.bf16 %v1511, %v1510
    %v1610 = vld [vmem:[#allocation22] sm:$0xff]
    %v1611 = vld [vmem:[#allocation22 + $0x8] sm:$0xff]
    %v1612 = vld [vmem:[#allocation22 + $0x10] sm:$0xff]
    %v1613 = vld [vmem:[#allocation22 + $0x18] sm:$0xff]
    %v1614 = vld [vmem:[#allocation22 + $0x20] sm:$0xff]
    %v1615 = vld [vmem:[#allocation22 + $0x28] sm:$0xff]
    %v1616 = vld [vmem:[#allocation22 + $0x30] sm:$0xff]
    %v1617 = vld [vmem:[#allocation22 + $0x38] sm:$0xff]
    %v1626 = vunpack.c.l.b16 %v1610
    %v1627 = vunpack.c.h.b16 %v1610
    %v1628 = vunpack.c.l.b16 %v1611
    %v1629 = vunpack.c.h.b16 %v1611
    %v1630 = vunpack.c.l.b16 %v1612
    %v1631 = vunpack.c.h.b16 %v1612
    %v1632 = vunpack.c.l.b16 %v1613
    %v1633 = vunpack.c.h.b16 %v1613
    %v1634 = vunpack.c.l.b16 %v1614
    %v1635 = vunpack.c.h.b16 %v1614
    %v1636 = vunpack.c.l.b16 %v1615
    %v1637 = vunpack.c.h.b16 %v1615
    %v1638 = vunpack.c.l.b16 %v1616
    %v1639 = vunpack.c.h.b16 %v1616
    %v1640 = vunpack.c.l.b16 %v1617
    %v1641 = vunpack.c.h.b16 %v1617
    %v1642 = vpack.c.b16 %v1628, %v1626
    %v1643 = vpack.c.b16 %v1629, %v1627
    %v1644 = vpack.c.b16 %v1632, %v1630
    %v1645 = vpack.c.b16 %v1633, %v1631
    %v1646 = vpack.c.b16 %v1636, %v1634
    %v1647 = vpack.c.b16 %v1637, %v1635
    %v1648 = vpack.c.b16 %v1640, %v1638
    %v1649 = vpack.c.b16 %v1641, %v1639
    %v1659 = vsel %vm358, %v1609, 0
    %1661 = vmatprep.subr.bf16.mxu0 %v1643
    %1662 = vmatpush1.bf16.msra.mxu0 %v1642
    %1663 = vmatprep.subr.bf16.mxu0 %v1645
    %1664 = vmatpush1.bf16.msra.mxu0 %v1644
    %1665 = vmatprep.subr.bf16.mxu0 %v1647
    %1666 = vmatpush1.bf16.msra.mxu0 %v1646
    %1667 = vmatprep.subr.bf16.mxu0 %v1649
    %1668 = vmatpush1.bf16.msra.mxu0 %v1648
    %1669 = vmatprep.subr.bf16.mxu0 0
    %1670 = vmatpush1.bf16.msra.mxu0 0
    %1671 = vmatprep.subr.bf16.mxu0 0
    %1672 = vmatpush1.bf16.msra.mxu0 0
    %1673 = vmatprep.subr.bf16.mxu0 0
    %1674 = vmatpush1.bf16.msra.mxu0 0
    %1675 = vmatprep.subr.bf16.mxu0 0
    %1676 = vmatpush1.bf16.msra.mxu0 0
    %1677 = vmatprep.subr.bf16.mxu0 0
    %1678 = vmatpush1.bf16.msra.mxu0 0
    %1679 = vmatprep.subr.bf16.mxu0 0
    %1680 = vmatpush1.bf16.msra.mxu0 0
    %1681 = vmatprep.subr.bf16.mxu0 0
    %1682 = vmatpush1.bf16.msra.mxu0 0
    %1683 = vmatprep.subr.bf16.mxu0 0
    %1684 = vmatpush1.bf16.msra.mxu0 0
    %1685 = vmatprep.subr.bf16.mxu0 0
    %1686 = vmatpush1.bf16.msra.mxu0 0
    %1687 = vmatprep.subr.bf16.mxu0 0
    %1688 = vmatpush1.bf16.msra.mxu0 0
    %1689 = vmatprep.subr.bf16.mxu0 0
    %1690 = vmatpush1.bf16.msra.mxu0 0
    %1691 = vmatprep.subr.bf16.mxu0 0
    %1692 = vmatpush1.bf16.msra.mxu0 0
    %1693 = vmatprep.mubr.bf16.mxu0 0
    %1694 = vmatmul.mubr.bf16.gmra.mrb[0].mxu0 %v1659
    %v1695 = vpop.f32.mrb[0].mxu0
    %v1696 = vadd.f32 %v392, %v1695
    %v1697 = vpop.f32.mrb[0].mxu0
    %v1698 = vadd.f32 %v396, %v1697
    %v1699 = vpop.f32.mrb[0].mxu0
    %v1700 = vadd.f32 %v392, %v1699
    %v1701 = vpop.f32.mrb[0].mxu0
    %v1702 = vadd.f32 %v396, %v1701
    %1703 = vdwg.mxu0
    %v1704 = vadd.f32 %v1601, %v1696
    %v1705 = vadd.f32 %v1605, %v1700
    %v1706 = vxor.u32 %v1704, 2147483648
    %v1707 = vxor.u32 %v1705, 2147483648
    %v1708 = vmul.f32 %v1706, 1.442695
    %v1709 = vpow.pop %v1708
    %v1710 = vmul.f32 %v1707, 1.442695
    %v1711 = vpow.pop %v1710
    %v1712 = vadd.f32 %v1709, 1.0
    %v1713 = vadd.f32 %v1711, 1.0
    %v1714 = vrcp.pop %v1712
    %v1715 = vmul.f32 1.0, %v1714
    %v1716 = vrcp.pop %v1713
    %v1717 = vmul.f32 1.0, %v1716
    %v1718 = vmul.f32 %v1715, %v1698
    %v1719 = vmul.f32 %v1717, %v1702
    %v1720 = vadd.f32 %v1603, %v1718
    %v1721 = vadd.f32 %v1607, %v1719
    %v1722 = vtanh.pop %v1720
    %v1723 = vtanh.pop %v1721
    %v1724 = vsub.f32 1.0, %v1715
    %v1725 = vsub.f32 1.0, %v1717
    %1728 = vrot.lane.b32.xlu0 %v1722, 64
    %v1729 = vpop.permute.xlu0 %1728
    %1730 = vrot.lane.b32.xlu0 %v1723, 64
    %v1731 = vpop.permute.xlu0 %1730
    %v1734 = vmul.f32 %v1724, %v1729
    %v1735 = vmul.f32 %v1725, %v1731
    %1738 = vrot.lane.b32.xlu0 %v1510, 64
    %v1739 = vpop.permute.xlu0 %1738
    %1740 = vrot.lane.b32.xlu0 %v1511, 64
    %v1741 = vpop.permute.xlu0 %1740
    %v1744 = vmul.f32 %v1715, %v1739
    %v1745 = vmul.f32 %v1717, %v1741
    %v1746 = vadd.f32 %v1734, %v1744
    %v1747 = vadd.f32 %v1735, %v1745
    %1750 = vrot.lane.b32.xlu0 %v1746, 64
    %v1751 = vpop.permute.xlu0 %1750
    %1752 = vrot.lane.b32.xlu0 %v1747, 64
    %v1753 = vpop.permute.xlu0 %1752
    %1756 = vst.msk [vmem:[#allocation2] sm:$0xff] %vm358, %v1751
    %1757 = vst.msk [vmem:[#allocation2 + $0x8] sm:$0xff] %vm358, %v1753
    loop: start=0, step=1, limit=32
    $region172: #{tpu_custom_call.1} parent=1 // loop_pre_header
      _
    $region173: #{tpu_custom_call.1} parent=1 // loop_header
      %s1759 = sphi 0, %s1763
      %p1760 = scmp.ge.s32.totalorder %s1759, 32
    $region174: #{tpu_custom_call.1} parent=1 // loop_header_branch
      %1762 = sbr.rel (%p1760) target = $region178
    $region175: #{tpu_custom_call.1} parent=1 // loop_body
      %s1764 = sld [smem:[#allocation6 + %s1759]]
      %s1765 = scalar_lea.vmem [#allocation2], %s1764
      %v1766 = vld [vmem:[%s1765] sm:$0x1]
      %s1767 = scalar_lea.vmem [#allocation3], %s1759
      %vm1768 = vcmask 516096
      %1769 = vst.msk [vmem:[%s1767] sm:$0x1] %vm1768, %v1766
    $region176: #{tpu_custom_call.1} parent=1 // loop_footer
      %s1763 = sadd.s32 1, %s1759
    $region177: #{tpu_custom_call.1} parent=1 // loop_footer_branch
      %1758 = sbr.rel target = $region173
    $region178: #{tpu_custom_call.1} parent=1 // loop_exit
      _
    %v1770 = vld [vmem:[#allocation3] sm:$0xff]
    %v1771 = vld [vmem:[#allocation3 + $0x8] sm:$0xff]
    %v1772 = vld [vmem:[#allocation3 + $0x10] sm:$0xff]
    %v1773 = vld [vmem:[#allocation3 + $0x18] sm:$0xff]
    %v1774 = vpack.c.bf16 %v1771, %v1770
    %v1775 = vpack.c.bf16 %v1773, %v1772
    %v1776 = vld [vmem:[#allocation19] sm:$0xff]
    %v1777 = vld [vmem:[#allocation19 + $0x8] sm:$0xff]
    %v1778 = vld [vmem:[#allocation19 + $0x10] sm:$0xff]
    %v1779 = vld [vmem:[#allocation19 + $0x18] sm:$0xff]
    %v1780 = vld [vmem:[#allocation19 + $0x20] sm:$0xff]
    %v1781 = vld [vmem:[#allocation19 + $0x28] sm:$0xff]
    %v1782 = vld [vmem:[#allocation19 + $0x30] sm:$0xff]
    %v1783 = vld [vmem:[#allocation19 + $0x38] sm:$0xff]
    %v1792 = vunpack.c.l.b16 %v1776
    %v1793 = vunpack.c.h.b16 %v1776
    %v1794 = vunpack.c.l.b16 %v1777
    %v1795 = vunpack.c.h.b16 %v1777
    %v1796 = vunpack.c.l.b16 %v1778
    %v1797 = vunpack.c.h.b16 %v1778
    %v1798 = vunpack.c.l.b16 %v1779
    %v1799 = vunpack.c.h.b16 %v1779
    %v1800 = vunpack.c.l.b16 %v1780
    %v1801 = vunpack.c.h.b16 %v1780
    %v1802 = vunpack.c.l.b16 %v1781
    %v1803 = vunpack.c.h.b16 %v1781
    %v1804 = vunpack.c.l.b16 %v1782
    %v1805 = vunpack.c.h.b16 %v1782
    %v1806 = vunpack.c.l.b16 %v1783
    %v1807 = vunpack.c.h.b16 %v1783
    %v1808 = vpack.c.b16 %v1794, %v1792
    %v1809 = vpack.c.b16 %v1795, %v1793
    %v1810 = vpack.c.b16 %v1798, %v1796
    %v1811 = vpack.c.b16 %v1799, %v1797
    %v1812 = vpack.c.b16 %v1802, %v1800
    %v1813 = vpack.c.b16 %v1803, %v1801
    %v1814 = vpack.c.b16 %v1806, %v1804
    %v1815 = vpack.c.b16 %v1807, %v1805
    %v1825 = vsel %vm358, %v1774, 0
    %v1828 = vsel %vm358, %v1775, 0
    %1830 = vmatprep.subr.bf16.mxu0 %v1809
    %1831 = vmatpush1.bf16.msra.mxu0 %v1808
    %1832 = vmatprep.subr.bf16.mxu0 %v1811
    %1833 = vmatpush1.bf16.msra.mxu0 %v1810
    %1834 = vmatprep.subr.bf16.mxu0 %v1813
    %1835 = vmatpush1.bf16.msra.mxu0 %v1812
    %1836 = vmatprep.subr.bf16.mxu0 %v1815
    %1837 = vmatpush1.bf16.msra.mxu0 %v1814
    %1838 = vmatprep.subr.bf16.mxu0 0
    %1839 = vmatpush1.bf16.msra.mxu0 0
    %1840 = vmatprep.subr.bf16.mxu0 0
    %1841 = vmatpush1.bf16.msra.mxu0 0
    %1842 = vmatprep.subr.bf16.mxu0 0
    %1843 = vmatpush1.bf16.msra.mxu0 0
    %1844 = vmatprep.subr.bf16.mxu0 0
    %1845 = vmatpush1.bf16.msra.mxu0 0
    %1846 = vmatprep.subr.bf16.mxu0 0
    %1847 = vmatpush1.bf16.msra.mxu0 0
    %1848 = vmatprep.subr.bf16.mxu0 0
    %1849 = vmatpush1.bf16.msra.mxu0 0
    %1850 = vmatprep.subr.bf16.mxu0 0
    %1851 = vmatpush1.bf16.msra.mxu0 0
    %1852 = vmatprep.subr.bf16.mxu0 0
    %1853 = vmatpush1.bf16.msra.mxu0 0
    %1854 = vmatprep.subr.bf16.mxu0 0
    %1855 = vmatpush1.bf16.msra.mxu0 0
    %1856 = vmatprep.subr.bf16.mxu0 0
    %1857 = vmatpush1.bf16.msra.mxu0 0
    %1858 = vmatprep.subr.bf16.mxu0 0
    %1859 = vmatpush1.bf16.msra.mxu0 0
    %1860 = vmatprep.subr.bf16.mxu0 0
    %1861 = vmatpush1.bf16.msra.mxu0 0
    %1862 = vmatprep.mubr.bf16.mxu0 0
    %1863 = vmatmul.mubr.bf16.gmra.mrb[0].mxu0 %v1825
    %v1864 = vpop.f32.mrb[0].mxu0
    %v1865 = vadd.f32 0.0, %v1864
    %v1866 = vpop.f32.mrb[0].mxu0
    %v1867 = vadd.f32 0.0, %v1866
    %v1868 = vpop.f32.mrb[0].mxu0
    %v1869 = vadd.f32 0.0, %v1868
    %v1870 = vpop.f32.mrb[0].mxu0
    %v1871 = vadd.f32 0.0, %v1870
    %1872 = vmatprep.mubr.bf16.mxu0 0
    %1873 = vmatmul.mubr.bf16.gmra.mrb[0].mxu0 %v1828
    %v1874 = vpop.f32.mrb[0].mxu0
    %v1875 = vadd.f32 0.0, %v1874
    %v1876 = vpop.f32.mrb[0].mxu0
    %v1877 = vadd.f32 0.0, %v1876
    %v1878 = vpop.f32.mrb[0].mxu0
    %v1879 = vadd.f32 0.0, %v1878
    %v1880 = vpop.f32.mrb[0].mxu0
    %v1881 = vadd.f32 0.0, %v1880
    %1882 = vdwg.mxu0
    %v1883 = vmul.f32 %v1865, %v363
    %v1884 = vmul.f32 %v1867, %v364
    %v1885 = vmul.f32 %v1869, %v365
    %v1886 = vmul.f32 %v1871, %v366
    %v1887 = vmul.f32 %v1875, %v367
    %v1888 = vmul.f32 %v1877, %v368
    %v1889 = vmul.f32 %v1879, %v369
    %v1890 = vmul.f32 %v1881, %v370
    %v1891 = vadd.f32 %v371, %v1883
    %v1892 = vadd.f32 %v372, %v1885
    %v1893 = vadd.f32 %v373, %v1887
    %v1894 = vadd.f32 %v374, %v1889
    %1899 = vrot.lane.b32.xlu0 %v1883, 64
    %v1900 = vpop.permute.xlu0 %1899
    %1901 = vrot.lane.b32.xlu0 %v1885, 64
    %v1902 = vpop.permute.xlu0 %1901
    %1903 = vrot.lane.b32.xlu0 %v1887, 64
    %v1904 = vpop.permute.xlu0 %1903
    %1905 = vrot.lane.b32.xlu0 %v1889, 64
    %v1906 = vpop.permute.xlu0 %1905
    %v1911 = vadd.f32 %v1891, %v1900
    %v1912 = vadd.f32 %v1892, %v1902
    %v1913 = vadd.f32 %v1893, %v1904
    %v1914 = vadd.f32 %v1894, %v1906
    %v1915 = vadd.f32 %v1911, %v1884
    %v1916 = vadd.f32 %v1912, %v1886
    %v1917 = vadd.f32 %v1913, %v1888
    %v1918 = vadd.f32 %v1914, %v1890
    %1923 = vrot.lane.b32.xlu0 %v1884, 64
    %v1924 = vpop.permute.xlu0 %1923
    %1925 = vrot.lane.b32.xlu0 %v1886, 64
    %v1926 = vpop.permute.xlu0 %1925
    %1927 = vrot.lane.b32.xlu0 %v1888, 64
    %v1928 = vpop.permute.xlu0 %1927
    %1929 = vrot.lane.b32.xlu0 %v1890, 64
    %v1930 = vpop.permute.xlu0 %1929
    %v1935 = vadd.f32 %v1915, %v1924
    %v1936 = vadd.f32 %v1916, %v1926
    %v1937 = vadd.f32 %v1917, %v1928
    %v1938 = vadd.f32 %v1918, %v1930
    %v1939 = vmax.f32 %v1935, 0.0
    %v1940 = vmax.f32 %v1936, 0.0
    %v1941 = vmax.f32 %v1937, 0.0
    %v1942 = vmax.f32 %v1938, 0.0
    %1943 = vst.msk [vmem:[#allocation3] sm:$0xff] %vm358, %v1939
    %1944 = vst.msk [vmem:[#allocation3 + $0x8] sm:$0xff] %vm358, %v1940
    %1945 = vst.msk [vmem:[#allocation3 + $0x10] sm:$0xff] %vm358, %v1941
    %1946 = vst.msk [vmem:[#allocation3 + $0x18] sm:$0xff] %vm358, %v1942
    %1947 = vst.msk [vmem:[#allocation4] sm:$0xff] %vm358, 0.0
    %1948 = vst.msk [vmem:[#allocation4 + $0x8] sm:$0xff] %vm358, 0.0
    loop: start=0, step=1, limit=32
    $region179: #{tpu_custom_call.1} parent=1 // loop_pre_header
      _
    $region180: #{tpu_custom_call.1} parent=1 // loop_header
      %s1950 = sphi 0, %s1954
      %p1951 = scmp.ge.s32.totalorder %s1950, 32
    $region181: #{tpu_custom_call.1} parent=1 // loop_header_branch
      %1953 = sbr.rel (%p1951) target = $region185
    $region182: #{tpu_custom_call.1} parent=1 // loop_body
      %s1955 = sld [smem:[#allocation10 + %s1950]]
      %s1956 = scalar_lea.vmem [#allocation4], %s1955
      %v1957 = vld [vmem:[%s1956] sm:$0x1]
      %s1958 = scalar_lea.vmem [#allocation3], %s1950
      %v1959 = vld [vmem:[%s1958] sm:$0x1]
      %v1960 = vadd.f32 %v1957, %v1959
      %vm1961 = vcmask 516096
      %1962 = vst.msk [vmem:[%s1956] sm:$0x1] %vm1961, %v1960
    $region183: #{tpu_custom_call.1} parent=1 // loop_footer
      %s1954 = sadd.s32 1, %s1950
    $region184: #{tpu_custom_call.1} parent=1 // loop_footer_branch
      %1949 = sbr.rel target = $region180
    $region185: #{tpu_custom_call.1} parent=1 // loop_exit
      _
    %v1963 = vld [vmem:[#allocation2] sm:$0xff]
    %v1964 = vld [vmem:[#allocation2 + $0x8] sm:$0xff]
    %v1965 = vld [vmem:[#allocation4] sm:$0xff]
    %v1966 = vld [vmem:[#allocation4 + $0x8] sm:$0xff]
    %v1967 = vpack.c.bf16 %v1966, %v1965
    %v1968 = vld [vmem:[#allocation21] sm:$0xff]
    %v1969 = vld [vmem:[#allocation21 + $0x8] sm:$0xff]
    %v1970 = vld [vmem:[#allocation21 + $0x10] sm:$0xff]
    %v1971 = vld [vmem:[#allocation21 + $0x18] sm:$0xff]
    %v1972 = vld [vmem:[#allocation21 + $0x20] sm:$0xff]
    %v1973 = vld [vmem:[#allocation21 + $0x28] sm:$0xff]
    %v1974 = vld [vmem:[#allocation21 + $0x30] sm:$0xff]
    %v1975 = vld [vmem:[#allocation21 + $0x38] sm:$0xff]
    %v1984 = vunpack.c.l.b16 %v1968
    %v1985 = vunpack.c.h.b16 %v1968
    %v1986 = vunpack.c.l.b16 %v1969
    %v1987 = vunpack.c.h.b16 %v1969
    %v1988 = vunpack.c.l.b16 %v1970
    %v1989 = vunpack.c.h.b16 %v1970
    %v1990 = vunpack.c.l.b16 %v1971
    %v1991 = vunpack.c.h.b16 %v1971
    %v1992 = vunpack.c.l.b16 %v1972
    %v1993 = vunpack.c.h.b16 %v1972
    %v1994 = vunpack.c.l.b16 %v1973
    %v1995 = vunpack.c.h.b16 %v1973
    %v1996 = vunpack.c.l.b16 %v1974
    %v1997 = vunpack.c.h.b16 %v1974
    %v1998 = vunpack.c.l.b16 %v1975
    %v1999 = vunpack.c.h.b16 %v1975
    %v2000 = vpack.c.b16 %v1986, %v1984
    %v2001 = vpack.c.b16 %v1987, %v1985
    %v2002 = vpack.c.b16 %v1990, %v1988
    %v2003 = vpack.c.b16 %v1991, %v1989
    %v2004 = vpack.c.b16 %v1994, %v1992
    %v2005 = vpack.c.b16 %v1995, %v1993
    %v2006 = vpack.c.b16 %v1998, %v1996
    %v2007 = vpack.c.b16 %v1999, %v1997
    %v2017 = vsel %vm358, %v1967, 0
    %2019 = vmatprep.subr.bf16.mxu0 %v2001
    %2020 = vmatpush1.bf16.msra.mxu0 %v2000
    %2021 = vmatprep.subr.bf16.mxu0 %v2003
    %2022 = vmatpush1.bf16.msra.mxu0 %v2002
    %2023 = vmatprep.subr.bf16.mxu0 %v2005
    %2024 = vmatpush1.bf16.msra.mxu0 %v2004
    %2025 = vmatprep.subr.bf16.mxu0 %v2007
    %2026 = vmatpush1.bf16.msra.mxu0 %v2006
    %2027 = vmatprep.subr.bf16.mxu0 0
    %2028 = vmatpush1.bf16.msra.mxu0 0
    %2029 = vmatprep.subr.bf16.mxu0 0
    %2030 = vmatpush1.bf16.msra.mxu0 0
    %2031 = vmatprep.subr.bf16.mxu0 0
    %2032 = vmatpush1.bf16.msra.mxu0 0
    %2033 = vmatprep.subr.bf16.mxu0 0
    %2034 = vmatpush1.bf16.msra.mxu0 0
    %2035 = vmatprep.subr.bf16.mxu0 0
    %2036 = vmatpush1.bf16.msra.mxu0 0
    %2037 = vmatprep.subr.bf16.mxu0 0
    %2038 = vmatpush1.bf16.msra.mxu0 0
    %2039 = vmatprep.subr.bf16.mxu0 0
    %2040 = vmatpush1.bf16.msra.mxu0 0
    %2041 = vmatprep.subr.bf16.mxu0 0
    %2042 = vmatpush1.bf16.msra.mxu0 0
    %2043 = vmatprep.subr.bf16.mxu0 0
    %2044 = vmatpush1.bf16.msra.mxu0 0
    %2045 = vmatprep.subr.bf16.mxu0 0
    %2046 = vmatpush1.bf16.msra.mxu0 0
    %2047 = vmatprep.subr.bf16.mxu0 0
    %2048 = vmatpush1.bf16.msra.mxu0 0
    %2049 = vmatprep.subr.bf16.mxu0 0
    %2050 = vmatpush1.bf16.msra.mxu0 0
    %2051 = vmatprep.mubr.bf16.mxu0 0
    %2052 = vmatmul.mubr.bf16.gmra.mrb[0].mxu0 %v2017
    %v2053 = vpop.f32.mrb[0].mxu0
    %v2054 = vadd.f32 %v380, %v2053
    %v2055 = vpop.f32.mrb[0].mxu0
    %v2056 = vadd.f32 %v384, %v2055
    %v2057 = vpop.f32.mrb[0].mxu0
    %v2058 = vadd.f32 %v380, %v2057
    %v2059 = vpop.f32.mrb[0].mxu0
    %v2060 = vadd.f32 %v384, %v2059
    %2061 = vdwg.mxu0
    %v2062 = vpack.c.bf16 %v1964, %v1963
    %v2063 = vld [vmem:[#allocation22] sm:$0xff]
    %v2064 = vld [vmem:[#allocation22 + $0x8] sm:$0xff]
    %v2065 = vld [vmem:[#allocation22 + $0x10] sm:$0xff]
    %v2066 = vld [vmem:[#allocation22 + $0x18] sm:$0xff]
    %v2067 = vld [vmem:[#allocation22 + $0x20] sm:$0xff]
    %v2068 = vld [vmem:[#allocation22 + $0x28] sm:$0xff]
    %v2069 = vld [vmem:[#allocation22 + $0x30] sm:$0xff]
    %v2070 = vld [vmem:[#allocation22 + $0x38] sm:$0xff]
    %v2079 = vunpack.c.l.b16 %v2063
    %v2080 = vunpack.c.h.b16 %v2063
    %v2081 = vunpack.c.l.b16 %v2064
    %v2082 = vunpack.c.h.b16 %v2064
    %v2083 = vunpack.c.l.b16 %v2065
    %v2084 = vunpack.c.h.b16 %v2065
    %v2085 = vunpack.c.l.b16 %v2066
    %v2086 = vunpack.c.h.b16 %v2066
    %v2087 = vunpack.c.l.b16 %v2067
    %v2088 = vunpack.c.h.b16 %v2067
    %v2089 = vunpack.c.l.b16 %v2068
    %v2090 = vunpack.c.h.b16 %v2068
    %v2091 = vunpack.c.l.b16 %v2069
    %v2092 = vunpack.c.h.b16 %v2069
    %v2093 = vunpack.c.l.b16 %v2070
    %v2094 = vunpack.c.h.b16 %v2070
    %v2095 = vpack.c.b16 %v2081, %v2079
    %v2096 = vpack.c.b16 %v2082, %v2080
    %v2097 = vpack.c.b16 %v2085, %v2083
    %v2098 = vpack.c.b16 %v2086, %v2084
    %v2099 = vpack.c.b16 %v2089, %v2087
    %v2100 = vpack.c.b16 %v2090, %v2088
    %v2101 = vpack.c.b16 %v2093, %v2091
    %v2102 = vpack.c.b16 %v2094, %v2092
    %v2112 = vsel %vm358, %v2062, 0
    %2114 = vmatprep.subr.bf16.mxu0 %v2096
    %2115 = vmatpush1.bf16.msra.mxu0 %v2095
    %2116 = vmatprep.subr.bf16.mxu0 %v2098
    %2117 = vmatpush1.bf16.msra.mxu0 %v2097
    %2118 = vmatprep.subr.bf16.mxu0 %v2100
    %2119 = vmatpush1.bf16.msra.mxu0 %v2099
    %2120 = vmatprep.subr.bf16.mxu0 %v2102
    %2121 = vmatpush1.bf16.msra.mxu0 %v2101
    %2122 = vmatprep.subr.bf16.mxu0 0
    %2123 = vmatpush1.bf16.msra.mxu0 0
    %2124 = vmatprep.subr.bf16.mxu0 0
    %2125 = vmatpush1.bf16.msra.mxu0 0
    %2126 = vmatprep.subr.bf16.mxu0 0
    %2127 = vmatpush1.bf16.msra.mxu0 0
    %2128 = vmatprep.subr.bf16.mxu0 0
    %2129 = vmatpush1.bf16.msra.mxu0 0
    %2130 = vmatprep.subr.bf16.mxu0 0
    %2131 = vmatpush1.bf16.msra.mxu0 0
    %2132 = vmatprep.subr.bf16.mxu0 0
    %2133 = vmatpush1.bf16.msra.mxu0 0
    %2134 = vmatprep.subr.bf16.mxu0 0
    %2135 = vmatpush1.bf16.msra.mxu0 0
    %2136 = vmatprep.subr.bf16.mxu0 0
    %2137 = vmatpush1.bf16.msra.mxu0 0
    %2138 = vmatprep.subr.bf16.mxu0 0
    %2139 = vmatpush1.bf16.msra.mxu0 0
    %2140 = vmatprep.subr.bf16.mxu0 0
    %2141 = vmatpush1.bf16.msra.mxu0 0
    %2142 = vmatprep.subr.bf16.mxu0 0
    %2143 = vmatpush1.bf16.msra.mxu0 0
    %2144 = vmatprep.subr.bf16.mxu0 0
    %2145 = vmatpush1.bf16.msra.mxu0 0
    %2146 = vmatprep.mubr.bf16.mxu0 0
    %2147 = vmatmul.mubr.bf16.gmra.mrb[0].mxu0 %v2112
    %v2148 = vpop.f32.mrb[0].mxu0
    %v2149 = vadd.f32 %v392, %v2148
    %v2150 = vpop.f32.mrb[0].mxu0
    %v2151 = vadd.f32 %v396, %v2150
    %v2152 = vpop.f32.mrb[0].mxu0
    %v2153 = vadd.f32 %v392, %v2152
    %v2154 = vpop.f32.mrb[0].mxu0
    %v2155 = vadd.f32 %v396, %v2154
    %2156 = vdwg.mxu0
    %v2157 = vadd.f32 %v2054, %v2149
    %v2158 = vadd.f32 %v2058, %v2153
    %v2159 = vxor.u32 %v2157, 2147483648
    %v2160 = vxor.u32 %v2158, 2147483648
    %v2161 = vmul.f32 %v2159, 1.442695
    %v2162 = vpow.pop %v2161
    %v2163 = vmul.f32 %v2160, 1.442695
    %v2164 = vpow.pop %v2163
    %v2165 = vadd.f32 %v2162, 1.0
    %v2166 = vadd.f32 %v2164, 1.0
    %v2167 = vrcp.pop %v2165
    %v2168 = vmul.f32 1.0, %v2167
    %v2169 = vrcp.pop %v2166
    %v2170 = vmul.f32 1.0, %v2169
    %v2171 = vmul.f32 %v2168, %v2151
    %v2172 = vmul.f32 %v2170, %v2155
    %v2173 = vadd.f32 %v2056, %v2171
    %v2174 = vadd.f32 %v2060, %v2172
    %v2175 = vtanh.pop %v2173
    %v2176 = vtanh.pop %v2174
    %v2177 = vsub.f32 1.0, %v2168
    %v2178 = vsub.f32 1.0, %v2170
    %2181 = vrot.lane.b32.xlu0 %v2175, 64
    %v2182 = vpop.permute.xlu0 %2181
    %2183 = vrot.lane.b32.xlu0 %v2176, 64
    %v2184 = vpop.permute.xlu0 %2183
    %v2187 = vmul.f32 %v2177, %v2182
    %v2188 = vmul.f32 %v2178, %v2184
    %2191 = vrot.lane.b32.xlu0 %v1963, 64
    %v2192 = vpop.permute.xlu0 %2191
    %2193 = vrot.lane.b32.xlu0 %v1964, 64
    %v2194 = vpop.permute.xlu0 %2193
    %v2197 = vmul.f32 %v2168, %v2192
    %v2198 = vmul.f32 %v2170, %v2194
    %v2199 = vadd.f32 %v2187, %v2197
    %v2200 = vadd.f32 %v2188, %v2198
    %2203 = vrot.lane.b32.xlu0 %v2199, 64
    %v2204 = vpop.permute.xlu0 %2203
    %2205 = vrot.lane.b32.xlu0 %v2200, 64
    %v2206 = vpop.permute.xlu0 %2205
    %2209 = vst.msk [vmem:[#allocation2] sm:$0xff] %vm358, %v2204
    %2210 = vst.msk [vmem:[#allocation2 + $0x8] sm:$0xff] %vm358, %v2206
    %v2211 = vld [vmem:[#allocation2] sm:$0xff]
    %v2212 = vld [vmem:[#allocation2 + $0x8] sm:$0xff]
    %2215 = vrot.lane.b32.xlu0 %v2211, 64
    %v2216 = vpop.permute.xlu0 %2215
    %2217 = vrot.lane.b32.xlu0 %v2212, 64
    %v2218 = vpop.permute.xlu0 %2217
    %vm2221 = vcmask 1048064
    %2222 = vst.msk [vmem:[#allocation5] sm:$0xff] %vm2221, %v2216
    %2223 = vst.msk [vmem:[#allocation5 + $0x8] sm:$0xff] %vm2221, %v2218
    %v2224 = vld [vmem:[#allocation5] sm:$0xff]
    %v2225 = vld [vmem:[#allocation5 + $0x8] sm:$0xff]
    %v2226 = vpack.c.bf16 %v2225, %v2224
    %v2227 = vld [vmem:[#allocation27] sm:$0xf]
    %v2228 = vld [vmem:[#allocation27 + $0x4] sm:$0xf]
    %v2229 = vld [vmem:[#allocation27 + $0x8] sm:$0xf]
    %v2230 = vld [vmem:[#allocation27 + $0xc] sm:$0xf]
    %v2231 = vld [vmem:[#allocation27 + $0x10] sm:$0xf]
    %v2232 = vld [vmem:[#allocation27 + $0x14] sm:$0xf]
    %v2233 = vld [vmem:[#allocation27 + $0x18] sm:$0xf]
    %v2234 = vld [vmem:[#allocation27 + $0x1c] sm:$0xf]
    %v2235 = vld [vmem:[#allocation27 + $0x20] sm:$0xf]
    %v2236 = vld [vmem:[#allocation27 + $0x24] sm:$0xf]
    %v2237 = vld [vmem:[#allocation27 + $0x28] sm:$0xf]
    %v2238 = vld [vmem:[#allocation27 + $0x2c] sm:$0xf]
    %v2239 = vld [vmem:[#allocation27 + $0x30] sm:$0xf]
    %v2240 = vld [vmem:[#allocation27 + $0x34] sm:$0xf]
    %v2241 = vld [vmem:[#allocation27 + $0x38] sm:$0xf]
    %v2242 = vld [vmem:[#allocation27 + $0x3c] sm:$0xf]
    %v2243 = vld [vmem:[#allocation28] sm:$0x1]
    %v2245 = vlaneseq
    %v2246 = vshrl.u32 %v2245, 7
    %v2247 = vsub.s32 0, %v2246
    %v2248 = vrot.slane %v2243, %v2247
    %v2266 = vunpack.c.l.b16 %v2227
    %v2267 = vunpack.c.l.b16 %v2228
    %v2268 = vunpack.c.l.b16 %v2229
    %v2269 = vunpack.c.l.b16 %v2230
    %v2270 = vunpack.c.l.b16 %v2231
    %v2271 = vunpack.c.l.b16 %v2232
    %v2272 = vunpack.c.l.b16 %v2233
    %v2273 = vunpack.c.l.b16 %v2234
    %v2274 = vunpack.c.l.b16 %v2235
    %v2275 = vunpack.c.l.b16 %v2236
    %v2276 = vunpack.c.l.b16 %v2237
    %v2277 = vunpack.c.l.b16 %v2238
    %v2278 = vunpack.c.l.b16 %v2239
    %v2279 = vunpack.c.l.b16 %v2240
    %v2280 = vunpack.c.l.b16 %v2241
    %v2281 = vunpack.c.l.b16 %v2242
    %v2282 = vpack.c.b16 %v2267, %v2266
    %v2283 = vpack.c.b16 %v2269, %v2268
    %v2284 = vpack.c.b16 %v2271, %v2270
    %v2285 = vpack.c.b16 %v2273, %v2272
    %v2286 = vpack.c.b16 %v2275, %v2274
    %v2287 = vpack.c.b16 %v2277, %v2276
    %v2288 = vpack.c.b16 %v2279, %v2278
    %v2289 = vpack.c.b16 %v2281, %v2280
    %2298 = vmatprep.subr.bf16.mxu0 0
    %2299 = vmatpush1.bf16.msra.mxu0 %v2282
    %2300 = vmatprep.subr.bf16.mxu0 0
    %2301 = vmatpush1.bf16.msra.mxu0 %v2283
    %2302 = vmatprep.subr.bf16.mxu0 0
    %2303 = vmatpush1.bf16.msra.mxu0 %v2284
    %2304 = vmatprep.subr.bf16.mxu0 0
    %2305 = vmatpush1.bf16.msra.mxu0 %v2285
    %2306 = vmatprep.subr.bf16.mxu0 0
    %2307 = vmatpush1.bf16.msra.mxu0 %v2286
    %2308 = vmatprep.subr.bf16.mxu0 0
    %2309 = vmatpush1.bf16.msra.mxu0 %v2287
    %2310 = vmatprep.subr.bf16.mxu0 0
    %2311 = vmatpush1.bf16.msra.mxu0 %v2288
    %2312 = vmatprep.subr.bf16.mxu0 0
    %2313 = vmatpush1.bf16.msra.mxu0 %v2289
    %2314 = vmatprep.subr.bf16.mxu0 0
    %2315 = vmatpush1.bf16.msra.mxu0 0
    %2316 = vmatprep.subr.bf16.mxu0 0
    %2317 = vmatpush1.bf16.msra.mxu0 0
    %2318 = vmatprep.subr.bf16.mxu0 0
    %2319 = vmatpush1.bf16.msra.mxu0 0
    %2320 = vmatprep.subr.bf16.mxu0 0
    %2321 = vmatpush1.bf16.msra.mxu0 0
    %2322 = vmatprep.subr.bf16.mxu0 0
    %2323 = vmatpush1.bf16.msra.mxu0 0
    %2324 = vmatprep.subr.bf16.mxu0 0
    %2325 = vmatpush1.bf16.msra.mxu0 0
    %2326 = vmatprep.subr.bf16.mxu0 0
    %2327 = vmatpush1.bf16.msra.mxu0 0
    %2328 = vmatprep.subr.bf16.mxu0 0
    %2329 = vmatpush1.bf16.msra.mxu0 0
    %2330 = vmatprep.mubr.bf16.mxu0 0
    %2331 = vmatmul.mubr.bf16.gmra.mrb[0].mxu0 %v2226
    %v2332 = vpop.f32.mrb[0].mxu0
    %v2333 = vadd.f32 %v2248, %v2332
    %v2334 = vpop.f32.mrb[0].mxu0
    %v2335 = vpop.f32.mrb[0].mxu0
    %v2336 = vadd.f32 %v2248, %v2335
    %v2337 = vpop.f32.mrb[0].mxu0
    %2338 = vdwg.mxu0
    %v2339 = vmax.f32 %v2333, 0.0
    %v2340 = vmax.f32 %v2336, 0.0
    %v2341 = vpack.c.bf16 %v2340, %v2339
    %v2342 = vld [vmem:[#allocation30] sm:$0xf]
    %v2343 = vld [vmem:[#allocation30 + $0x4] sm:$0xf]
    %v2344 = vld [vmem:[#allocation30 + $0x8] sm:$0xf]
    %v2345 = vld [vmem:[#allocation30 + $0xc] sm:$0xf]
    %v2346 = vld [vmem:[#allocation30 + $0x10] sm:$0xf]
    %v2347 = vld [vmem:[#allocation30 + $0x14] sm:$0xf]
    %v2348 = vld [vmem:[#allocation30 + $0x18] sm:$0xf]
    %v2349 = vld [vmem:[#allocation30 + $0x1c] sm:$0xf]
    %v2350 = vld [vmem:[#allocation31] sm:$0x1]
    %v2352 = vlaneseq
    %v2353 = vshrl.u32 %v2352, 7
    %v2354 = vsub.s32 0, %v2353
    %v2355 = vrot.slane %v2350, %v2354
    %v2365 = vunpack.c.l.b16 %v2342
    %v2366 = vunpack.c.l.b16 %v2343
    %v2367 = vunpack.c.l.b16 %v2344
    %v2368 = vunpack.c.l.b16 %v2345
    %v2369 = vunpack.c.l.b16 %v2346
    %v2370 = vunpack.c.l.b16 %v2347
    %v2371 = vunpack.c.l.b16 %v2348
    %v2372 = vunpack.c.l.b16 %v2349
    %v2373 = vpack.c.b16 %v2366, %v2365
    %v2374 = vpack.c.b16 %v2368, %v2367
    %v2375 = vpack.c.b16 %v2370, %v2369
    %v2376 = vpack.c.b16 %v2372, %v2371
    %v2382 = vsel %vm358, %v2341, 0
    %2384 = vmatprep.subr.bf16.mxu0 0
    %2385 = vmatpush1.bf16.msra.mxu0 %v2373
    %2386 = vmatprep.subr.bf16.mxu0 0
    %2387 = vmatpush1.bf16.msra.mxu0 %v2374
    %2388 = vmatprep.subr.bf16.mxu0 0
    %2389 = vmatpush1.bf16.msra.mxu0 %v2375
    %2390 = vmatprep.subr.bf16.mxu0 0
    %2391 = vmatpush1.bf16.msra.mxu0 %v2376
    %2392 = vmatprep.subr.bf16.mxu0 0
    %2393 = vmatpush1.bf16.msra.mxu0 0
    %2394 = vmatprep.subr.bf16.mxu0 0
    %2395 = vmatpush1.bf16.msra.mxu0 0
    %2396 = vmatprep.subr.bf16.mxu0 0
    %2397 = vmatpush1.bf16.msra.mxu0 0
    %2398 = vmatprep.subr.bf16.mxu0 0
    %2399 = vmatpush1.bf16.msra.mxu0 0
    %2400 = vmatprep.subr.bf16.mxu0 0
    %2401 = vmatpush1.bf16.msra.mxu0 0
    %2402 = vmatprep.subr.bf16.mxu0 0
    %2403 = vmatpush1.bf16.msra.mxu0 0
    %2404 = vmatprep.subr.bf16.mxu0 0
    %2405 = vmatpush1.bf16.msra.mxu0 0
    %2406 = vmatprep.subr.bf16.mxu0 0
    %2407 = vmatpush1.bf16.msra.mxu0 0
    %2408 = vmatprep.subr.bf16.mxu0 0
    %2409 = vmatpush1.bf16.msra.mxu0 0
    %2410 = vmatprep.subr.bf16.mxu0 0
    %2411 = vmatpush1.bf16.msra.mxu0 0
    %2412 = vmatprep.subr.bf16.mxu0 0
    %2413 = vmatpush1.bf16.msra.mxu0 0
    %2414 = vmatprep.subr.bf16.mxu0 0
    %2415 = vmatpush1.bf16.msra.mxu0 0
    %2416 = vmatprep.mubr.bf16.mxu0 0
    %2417 = vmatmul.mubr.bf16.gmra.mrb[0].mxu0 %v2382
    %v2418 = vpop.f32.mrb[0].mxu0
    %v2419 = vadd.f32 %v2355, %v2418
    %v2420 = vpop.f32.mrb[0].mxu0
    %v2421 = vpop.f32.mrb[0].mxu0
    %v2422 = vadd.f32 %v2355, %v2421
    %v2423 = vpop.f32.mrb[0].mxu0
    %2424 = vdwg.mxu0
    %v2425 = vtanh.pop %v2419
    %v2426 = vtanh.pop %v2422
    %2427 = vst.msk [vmem:[#allocation33] sm:$0xff] %vm358, %v2425
    %2428 = vst.msk [vmem:[#allocation33 + $0x8] sm:$0xff] %vm358, %v2426
    // Predicated region
    $region186: #{tpu_custom_call.1} parent=1 // pred_check
      _
    $region187: #{tpu_custom_call.1} parent=1 // pred_check_branch
      %2430 = sbr.rel (0) target = $region189
    $region188: #{tpu_custom_call.1} parent=1 // pred_region
      %s2432 = ssub.s32 256, 256
      %2433 = vsyncadd [#allocation8], %s2432
      %s2434 = sshll.u32 [#allocation33], 4
      %s2435 = int_to_ptr.vmem [resolvable:$true] %s2434
      %2440 = dma.vmem_to_hbm [thread:$0]  %s2435, 256, %s16, [#allocation8], 128, 128, 8
    $region189: #{tpu_custom_call.1} parent=1 // pred_fallthru
      _
    // Predicated region
    $region190: #{tpu_custom_call.1} parent=1 // pred_check
      _
    $region191: #{tpu_custom_call.1} parent=1 // pred_check_branch
      %2442 = sbr.rel (0) target = $region193
    $region192: #{tpu_custom_call.1} parent=1 // pred_region
      %2443 = dma.done [#allocation8], 256
    $region193: #{tpu_custom_call.1} parent=1 // pred_fallthru
      _
    %2444 = vsyncpa [#allocation7], 1
    %2445 = vsyncpa [#allocation14], 1
    %2446 = vsyncpa [#allocation17], 1
    %2447 = vsyncpa [#allocation20], 1
    %2448 = vsyncpa [#allocation23], 1
    %2449 = vsyncpa [#allocation26], 1
    %2450 = vsyncpa [#allocation29], 1
    %2451 = vsyncpa [#allocation32], 1
    %2452 = vsyncpa [#allocation8], 1
    %2453 = vsyncpa [#allocation9], 1
    %2454 = vsyncpa [#allocation11], 1

</llo_original>
